<compile_context>
chip_gen: v7x
topology: tpu7x:2x2x1
jax: 0.10.0
libtpu: 0.0.40
codegen_flags: <defaults>
</compile_context>

<pallas_src>
import functools
import random
from typing import NamedTuple

import jax
import jax.numpy as jnp
from jax.experimental import pallas as pl
from jax.experimental.pallas import tpu as pltpu


# ----------------------------------------------------------------------------
# Helpers
# ----------------------------------------------------------------------------
def round_up(x, m):
    return ((x + m - 1) // m) * m


class Dims(NamedTuple):
    emb_dim: int
    hid_dim: int
    n_layers: int
    input_dim: int
    output_dim: int
    e_pad: int
    h_pad: int
    v_pad: int


def _lstm_gate_update(gates, c_prev):
    """gates: (B, 4*Hp) f32, PyTorch order i,f,g,o in 128-lane-aligned slabs."""
    Hp = c_prev.shape[-1]
    i_g = jax.nn.sigmoid(gates[:, 0 * Hp:1 * Hp])
    f_g = jax.nn.sigmoid(gates[:, 1 * Hp:2 * Hp])
    g_g = jnp.tanh(gates[:, 2 * Hp:3 * Hp])
    o_g = jax.nn.sigmoid(gates[:, 3 * Hp:4 * Hp])
    c_new = f_g * c_prev + i_g * g_g
    h_new = o_g * jnp.tanh(c_new)
    return h_new, c_new


# ----------------------------------------------------------------------------
# Pallas kernels
# ----------------------------------------------------------------------------
def _proj_kernel(x_ref, w_ref, b_ref, o_ref):
    """Hoisted input projection: o = x @ W + b for the whole sequence."""
    o_ref[...] = (
        jnp.dot(x_ref[...].astype(jnp.bfloat16), w_ref[...],
                preferred_element_type=jnp.float32)
        + b_ref[...]
    )


def _encoder_lstm_kernel(xg0_ref, wih_ref, whh_ref, b_ref, h_ref, c_ref):
    """Fused multi-layer LSTM over time. grid=(T,).

    xg0_ref : (1, Bp, 4Hp)  precomputed x@W_ih+b for layer 0 at this timestep
    wih_ref : (L, Ep, 4Hp)  bf16 (layer 0 slot unused)
    whh_ref : (L, Hp, 4Hp)  bf16
    b_ref   : (L, 1, 4Hp)   f32
    h_ref/c_ref : (L, Bp, Hp) f32 outputs, VMEM-resident state carry.
    """
    t = pl.program_id(0)
    n_layers = whh_ref.shape[0]

    @pl.when(t == 0)
    def _():
        h_ref[...] = jnp.zeros_like(h_ref)
        c_ref[...] = jnp.zeros_like(c_ref)

    x = None
    for l in range(n_layers):
        hh = jnp.dot(h_ref[l].astype(jnp.bfloat16), whh_ref[l],
                     preferred_element_type=jnp.float32)
        if l == 0:
            gates = xg0_ref[0] + hh
        else:
            gates = (jnp.dot(x.astype(jnp.bfloat16), wih_ref[l],
                             preferred_element_type=jnp.float32)
                     + hh + b_ref[l])
        h_new, c_new = _lstm_gate_update(gates, c_ref[l])
        h_ref[l] = h_new
        c_ref[l] = c_new
        x = h_new


def _decoder_kernel(tf_ref,                      # scalar-prefetch (SMEM)
                    init_emb_ref, temb_ref, h0_ref, c0_ref,
                    wih_ref, whh_ref, b_ref, emb_tab_ref, fcw_ref, fcb_ref,
                    out_ref,
                    h_sc, c_sc, x_sc, *, vocab_size):
    """Fused decoder loop. grid=(trg_len-1,); step s produces outputs[s+1]."""
    s = pl.program_id(0)
    n_layers = whh_ref.shape[0]
    Bp, Vp = out_ref.shape[1], out_ref.shape[2]

    @pl.when(s == 0)
    def _():
        h_sc[...] = h0_ref[...]
        c_sc[...] = c0_ref[...]
        x_sc[...] = init_emb_ref[...]

    # stacked LSTM cells for this timestep
    x = x_sc[...]
    for l in range(n_layers):
        gates = (
            jnp.dot(x.astype(jnp.bfloat16), wih_ref[l],
                    preferred_element_type=jnp.float32)
            + jnp.dot(h_sc[l].astype(jnp.bfloat16), whh_ref[l],
                      preferred_element_type=jnp.float32)
            + b_ref[l]
        )
        h_new, c_new = _lstm_gate_update(gates, c_sc[l])
        h_sc[l] = h_new
        c_sc[l] = c_new
        x = h_new

    # fc projection (lane-dense padded vocab)
    logits = (jnp.dot(x.astype(jnp.bfloat16), fcw_ref[...],
                      preferred_element_type=jnp.float32) + fcb_ref[...])
    out_ref[0] = logits

    # greedy argmax over the valid vocab lanes (first max, like torch.argmax)
    col = jax.lax.broadcasted_iota(jnp.int32, (Bp, Vp), 1)
    valid = col < vocab_size
    masked = jnp.where(valid, logits, -jnp.inf)
    row_max = jnp.max(masked, axis=1, keepdims=True)
    colf = col.astype(jnp.float32)
    idx_f = jnp.where((masked == row_max) & valid, colf, float(Vp))
    top1_f = jnp.min(idx_f, axis=1, keepdims=True)        # (Bp, 1)

    # embedding of the model's own prediction via one-hot @ table (MXU gather)
    one_hot = (colf == top1_f).astype(jnp.float32)         # (Bp, Vp)
    free_emb = jnp.dot(one_hot, emb_tab_ref[...],
                       preferred_element_type=jnp.float32)  # (Bp, Ep)

    # next input: teacher embedding (precomputed) vs model prediction
    tf = tf_ref[s + 1].astype(jnp.float32)                  # scalar coin
    x_sc[...] = tf * temb_ref[0] + (1.0 - tf) * free_emb


# ----------------------------------------------------------------------------
# Pallas wrappers
# ----------------------------------------------------------------------------
def hoisted_input_projection(x, w_bf16, b):
    R = x.shape[0]
    N = w_bf16.shape[1]
    return pl.pallas_call(
        _proj_kernel,
        out_shape=jax.ShapeDtypeStruct((R, N), jnp.float32),
    )(x, w_bf16, b)


def encoder_lstm(xg0, wih, whh, b):
    T, Bp, G = xg0.shape
    L, Hp = whh.shape[0], whh.shape[1]
    h, c = pl.pallas_call(
        _encoder_lstm_kernel,
        grid=(T,),
        in_specs=[
            pl.BlockSpec((1, Bp, G), lambda t: (t, 0, 0)),
            pl.BlockSpec(wih.shape, lambda t: (0, 0, 0)),   # VMEM-resident
            pl.BlockSpec(whh.shape, lambda t: (0, 0, 0)),
            pl.BlockSpec(b.shape, lambda t: (0, 0, 0)),
        ],
        out_specs=[
            pl.BlockSpec((L, Bp, Hp), lambda t: (0, 0, 0)),
            pl.BlockSpec((L, Bp, Hp), lambda t: (0, 0, 0)),
        ],
        out_shape=[
            jax.ShapeDtypeStruct((L, Bp, Hp), jnp.float32),
            jax.ShapeDtypeStruct((L, Bp, Hp), jnp.float32),
        ],
        compiler_params=pltpu.CompilerParams(
            dimension_semantics=("arbitrary",)),
    )(xg0, wih, whh, b)
    return h, c


def decoder_run(tf_arr, init_emb, temb, h0, c0, wih, whh, b,
                emb_tab, fcw, fcb, *, vocab_size):
    T, Bp, Ep = temb.shape
    L, Hp = whh.shape[0], whh.shape[1]
    Vp = fcw.shape[1]
    steps = T - 1

    kernel = functools.partial(_decoder_kernel, vocab_size=vocab_size)

    grid_spec = pltpu.PrefetchScalarGridSpec(
        num_scalar_prefetch=1,
        grid=(steps,),
        in_specs=[
            pl.BlockSpec((Bp, Ep), lambda s, tf: (0, 0)),            # init_emb
            pl.BlockSpec((1, Bp, Ep), lambda s, tf: (s + 1, 0, 0)),  # teacher t+1
            pl.BlockSpec(h0.shape, lambda s, tf: (0, 0, 0)),
            pl.BlockSpec(c0.shape, lambda s, tf: (0, 0, 0)),
            pl.BlockSpec(wih.shape, lambda s, tf: (0, 0, 0)),        # resident
            pl.BlockSpec(whh.shape, lambda s, tf: (0, 0, 0)),
            pl.BlockSpec(b.shape, lambda s, tf: (0, 0, 0)),
            pl.BlockSpec(emb_tab.shape, lambda s, tf: (0, 0)),
            pl.BlockSpec(fcw.shape, lambda s, tf: (0, 0)),
            pl.BlockSpec(fcb.shape, lambda s, tf: (0, 0)),
        ],
        out_specs=pl.BlockSpec((1, Bp, Vp), lambda s, tf: (s, 0, 0)),
        scratch_shapes=[
            pltpu.VMEM((L, Bp, Hp), jnp.float32),   # h carry
            pltpu.VMEM((L, Bp, Hp), jnp.float32),   # c carry
            pltpu.VMEM((Bp, Ep), jnp.float32),      # next-input embedding carry
        ],
    )
    return pl.pallas_call(
        kernel,
        grid_spec=grid_spec,
        out_shape=jax.ShapeDtypeStruct((steps, Bp, Vp), jnp.float32),
        compiler_params=pltpu.CompilerParams(
            dimension_semantics=("arbitrary",)),
    )(tf_arr, init_emb, temb, h0, c0, wih, whh, b, emb_tab, fcw, fcb)


# ----------------------------------------------------------------------------
# Parameter construction (deterministic, mirrors module __init__ shapes)
# ----------------------------------------------------------------------------
def _pad_gate_weight(w, in_pad, hid, hid_pad):
    """(in_sz, 4*hid) -> (in_pad, 4*hid_pad), each gate in its own 128-lane slab."""
    in_sz = w.shape[0]
    out = jnp.zeros((in_pad, 4 * hid_pad), jnp.float32)
    for g in range(4):
        out = out.at[:in_sz, g * hid_pad:g * hid_pad + hid].set(
            w[:, g * hid:(g + 1) * hid])
    return out


def _pad_gate_bias(b, hid, hid_pad):
    out = jnp.zeros((1, 4 * hid_pad), jnp.float32)
    for g in range(4):
        out = out.at[0, g * hid_pad:g * hid_pad + hid].set(
            b[g * hid:(g + 1) * hid])
    return out


def make_lstm_raw(key, input_size, hid_dim, n_layers):
    params = []
    scale = 0.1
    for layer in range(n_layers):
        in_sz = input_size if layer == 0 else hid_dim
        key, k1, k2, k3, k4 = jax.random.split(key, 5)
        wih = jax.random.normal(k1, (in_sz, 4 * hid_dim), jnp.float32) * scale
        whh = jax.random.normal(k2, (hid_dim, 4 * hid_dim), jnp.float32) * scale
        b_ih = jax.random.normal(k3, (4 * hid_dim,), jnp.float32) * scale
        b_hh = jax.random.normal(k4, (4 * hid_dim,), jnp.float32) * scale
        params.append(dict(wih=wih, whh=whh, b=b_ih + b_hh))
    return key, params


def make_seq2seq_params(emb_dim, hid_dim, n_layers, input_dim, output_dim):
    key = jax.random.PRNGKey(0)
    key, k_src, k_trg = jax.random.split(key, 3)
    src_vec = jax.random.normal(k_src, (input_dim, emb_dim), jnp.float32)
    trg_vec = jax.random.normal(k_trg, (output_dim, emb_dim), jnp.float32)

    key, enc_raw = make_lstm_raw(key, emb_dim, hid_dim, n_layers)
    key, dec_raw = make_lstm_raw(key, emb_dim, hid_dim, n_layers)

    key, k_w, k_b = jax.random.split(key, 3)
    fc_w = jax.random.normal(k_w, (hid_dim, output_dim), jnp.float32) * 0.1
    fc_b = jax.random.normal(k_b, (output_dim,), jnp.float32) * 0.1

    e_pad = h_pad = round_up(max(emb_dim, hid_dim), 128)   # emb/hid lane pad
    v_pad = round_up(output_dim, 128)                      # vocab lane pad

    def stack(raw):
        wih = jnp.stack([_pad_gate_weight(p["wih"], e_pad, hid_dim, h_pad)
                         for p in raw]).astype(jnp.bfloat16)
        whh = jnp.stack([_pad_gate_weight(p["whh"], h_pad, hid_dim, h_pad)
                         for p in raw]).astype(jnp.bfloat16)
        bias = jnp.stack([_pad_gate_bias(p["b"], hid_dim, h_pad) for p in raw])
        return wih, whh, bias

    enc_wih, enc_whh, enc_b = stack(enc_raw)
    dec_wih, dec_whh, dec_b = stack(dec_raw)

    src_emb = jnp.zeros((input_dim, e_pad), jnp.float32).at[:, :emb_dim].set(src_vec)
    trg_emb = jnp.zeros((v_pad, e_pad), jnp.float32).at[
        :output_dim, :emb_dim].set(trg_vec)
    fc_w_p = jnp.zeros((h_pad, v_pad), jnp.float32).at[
        :hid_dim, :output_dim].set(fc_w).astype(jnp.bfloat16)
    fc_b_p = jnp.zeros((1, v_pad), jnp.float32).at[0, :output_dim].set(fc_b)

    params = dict(src_emb=src_emb, trg_emb=trg_emb,
                  enc_wih=enc_wih, enc_whh=enc_whh, enc_b=enc_b,
                  dec_wih=dec_wih, dec_whh=dec_whh, dec_b=dec_b,
                  fc_w=fc_w_p, fc_b=fc_b_p)
    dims = Dims(emb_dim, hid_dim, n_layers, input_dim, output_dim,
                e_pad, h_pad, v_pad)
    return params, dims


# ----------------------------------------------------------------------------
# Model forward (mirrors the PyTorch Seq2Seq.forward)
# ----------------------------------------------------------------------------
@functools.partial(jax.jit, static_argnames=("dims",))
def _forward_core(params, src, trg, tf_arr, *, dims):
    T_src, B = src.shape
    T_trg = trg.shape[0]
    Bp = round_up(max(B, 1), 8)
    Ep, Hp, Vp, L = dims.e_pad, dims.h_pad, dims.v_pad, dims.n_layers

    # ---- encoder ----
    src_p = jnp.zeros((T_src, Bp), jnp.int32).at[:, :B].set(src)
    src_emb = jnp.take(params["src_emb"], src_p, axis=0)        # (T, Bp, Ep)
    # hoist the time-independent layer-0 input projection out of the recurrence
    xg0 = hoisted_input_projection(
        src_emb.reshape(T_src * Bp, Ep),
        params["enc_wih"][0], params["enc_b"][0])               # (T*Bp, 4Hp)
    xg0 = xg0.reshape(T_src, Bp, 4 * Hp)
    h_enc, c_enc = encoder_lstm(xg0, params["enc_wih"],
                                params["enc_whh"], params["enc_b"])

    # ---- decoder (whole decode loop fused into one kernel) ----
    trg_p = jnp.zeros((T_trg, Bp), jnp.int32).at[:, :B].set(trg)
    teacher_emb = jnp.take(params["trg_emb"], trg_p, axis=0)    # (T_trg, Bp, Ep)
    logits = decoder_run(
        tf_arr, teacher_emb[0], teacher_emb, h_enc, c_enc,
        params["dec_wih"], params["dec_whh"], params["dec_b"],
        params["trg_emb"], params["fc_w"], params["fc_b"],
        vocab_size=dims.output_dim)                              # (T_trg-1, Bp, Vp)

    out = jnp.concatenate(
        [jnp.zeros((1, Bp, Vp), jnp.float32), logits], axis=0)
    return out[:, :B, :dims.output_dim]


def seq2seq_forward(params, dims, src, trg, teacher_forcing_ratio=0.5):
    """src: (src_len, B) int32; trg: (trg_len, B) int32 -> (trg_len, B, V)."""
    trg_len = trg.shape[0]
    # host-side per-step coin flips (matches PyTorch's random.random per step);
    # precomputed so the jitted forward stays jittable and re-samples per call.
    coins = [0] + [int(random.random() < teacher_forcing_ratio)
                   for _ in range(1, trg_len)]
    tf_arr = jnp.asarray(coins, jnp.int32)
    return _forward_core(params, src, trg, tf_arr, dims=dims)


# ----------------------------------------------------------------------------
if __name__ == "__main__":
    EMB_DIM = 32
    HID_DIM = 32
    N_LAYERS = 2
    INPUT_DIM = 50    # src vocab size
    OUTPUT_DIM = 40   # trg vocab size
    SRC_LEN = 8
    TRG_LEN = 8
    BATCH = 2

    random.seed(0)  # deterministic teacher-forcing coin flips

    params, dims = make_seq2seq_params(EMB_DIM, HID_DIM, N_LAYERS,
                                       INPUT_DIM, OUTPUT_DIM)

    key = jax.random.PRNGKey(0)
    k_src, k_trg = jax.random.split(key)
    src = jax.random.randint(k_src, (SRC_LEN, BATCH), 0, INPUT_DIM, jnp.int32)
    trg = jax.random.randint(k_trg, (TRG_LEN, BATCH), 0, OUTPUT_DIM, jnp.int32)

    out = seq2seq_forward(params, dims, src, trg, teacher_forcing_ratio=0.5)
    out = jax.block_until_ready(out)

    assert out.shape == (TRG_LEN, BATCH, OUTPUT_DIM)
    assert bool(jnp.all(out[0] == 0.0))
    assert bool(jnp.all(jnp.isfinite(out)))
    print("KERNEL_OK")
</pallas_src>

<mosaic_0001>
module attributes {stable_mosaic.version = 11 : i64} {
  func.func @_encoder_lstm_kernel(%arg0: i32, %arg1: memref<1x8x512xf32, #tpu.memory_space<vmem>>, %arg2: memref<2x128x512xbf16, #tpu.memory_space<vmem>>, %arg3: memref<2x128x512xbf16, #tpu.memory_space<vmem>>, %arg4: memref<2x1x512xf32, #tpu.memory_space<vmem>>, %arg5: memref<2x8x128xf32, #tpu.memory_space<vmem>>, %arg6: memref<2x8x128xf32, #tpu.memory_space<vmem>>) attributes {dimension_semantics = [#tpu.dimension_semantics<arbitrary>], iteration_bounds = array<i64: 8>, scalar_prefetch = 0 : i64, scratch_operands = 0 : i64, tpu.core_type = #tpu.core_type<tc>, window_params = [{transform_indices = @transform_0, window_bounds = array<i64: 1, 8, 512>}, {pipeline_mode = #tpu.pipeline_mode<synchronous>, transform_indices = @transform_1, window_bounds = array<i64: 2, 128, 512>}, {pipeline_mode = #tpu.pipeline_mode<synchronous>, transform_indices = @transform_2, window_bounds = array<i64: 2, 128, 512>}, {pipeline_mode = #tpu.pipeline_mode<synchronous>, transform_indices = @transform_3, window_bounds = array<i64: 2, 1, 512>}, {pipeline_mode = #tpu.pipeline_mode<synchronous>, transform_indices = @transform_4, window_bounds = array<i64: 2, 8, 128>}, {pipeline_mode = #tpu.pipeline_mode<synchronous>, transform_indices = @transform_5, window_bounds = array<i64: 2, 8, 128>}]} {
    %c0_i32 = arith.constant 0 : i32
    %0 = arith.cmpi eq, %arg0, %c0_i32 : i32
    %1 = arith.extui %0 : i1 to i32
    %c0_i32_0 = arith.constant 0 : i32
    %2 = arith.cmpi ne, %1, %c0_i32_0 : i32
    scf.if %2 {
      %cst_46 = arith.constant 0.000000e+00 : f32
      %93 = vector.broadcast %cst_46 : f32 to vector<2x8x128xf32>
      %c0_47 = arith.constant 0 : index
      %c0_48 = arith.constant 0 : index
      %c0_49 = arith.constant 0 : index
      %94 = vector.load %arg5[%c0_47, %c0_48, %c0_49] : memref<2x8x128xf32, #tpu.memory_space<vmem>>, vector<2x8x128xf32>
      tpu.vector_store %arg5[%c0_47, %c0_48, %c0_49], %93 {strides = array<i32>} : memref<2x8x128xf32, #tpu.memory_space<vmem>>, vector<2x8x128xf32>,
      %cst_50 = arith.constant 0.000000e+00 : f32
      %95 = vector.broadcast %cst_50 : f32 to vector<2x8x128xf32>
      %c0_51 = arith.constant 0 : index
      %c0_52 = arith.constant 0 : index
      %c0_53 = arith.constant 0 : index
      %96 = vector.load %arg6[%c0_51, %c0_52, %c0_53] : memref<2x8x128xf32, #tpu.memory_space<vmem>>, vector<2x8x128xf32>
      tpu.vector_store %arg6[%c0_51, %c0_52, %c0_53], %95 {strides = array<i32>} : memref<2x8x128xf32, #tpu.memory_space<vmem>>, vector<2x8x128xf32>,
    } else {
    }
    %c0 = arith.constant 0 : index
    %c0_1 = arith.constant 0 : index
    %c0_2 = arith.constant 0 : index
    %3 = vector.load %arg5[%c0, %c0_1, %c0_2] : memref<2x8x128xf32, #tpu.memory_space<vmem>>, vector<1x8x128xf32>
    %4 = vector.shape_cast %3 : vector<1x8x128xf32> to vector<8x128xf32>
    %5 = arith.truncf %4 : vector<8x128xf32> to vector<8x128xbf16>
    %c0_3 = arith.constant 0 : index
    %c0_4 = arith.constant 0 : index
    %c0_5 = arith.constant 0 : index
    %6 = vector.load %arg3[%c0_3, %c0_4, %c0_5] : memref<2x128x512xbf16, #tpu.memory_space<vmem>>, vector<1x128x512xbf16>
    %7 = vector.shape_cast %6 : vector<1x128x512xbf16> to vector<128x512xbf16>
    %cst = arith.constant dense<0.000000e+00> : vector<8x512xf32>
    %8 = tpu.matmul %5, %7, %cst {dimension_numbers = #tpu.dot_dimension_numbers<[1], [0], [0], [1], [0, 0, 1, 1], [], []>} : vector<8x128xbf16>, vector<128x512xbf16>, vector<8x512xf32> -> vector<8x512xf32>
    %c0_6 = arith.constant 0 : index
    %c0_7 = arith.constant 0 : index
    %c0_8 = arith.constant 0 : index
    %9 = vector.load %arg1[%c0_6, %c0_7, %c0_8] : memref<1x8x512xf32, #tpu.memory_space<vmem>>, vector<1x8x512xf32>
    %10 = vector.shape_cast %9 : vector<1x8x512xf32> to vector<8x512xf32>
    %11 = arith.addf %10, %8 : vector<8x512xf32>
    %c0_9 = arith.constant 0 : index
    %c0_10 = arith.constant 0 : index
    %c0_11 = arith.constant 0 : index
    %12 = vector.load %arg6[%c0_9, %c0_10, %c0_11] : memref<2x8x128xf32, #tpu.memory_space<vmem>>, vector<1x8x128xf32>
    %13 = vector.shape_cast %12 : vector<1x8x128xf32> to vector<8x128xf32>
    %14 = vector.extract_strided_slice %11 {offsets = [0, 0], sizes = [8, 128], strides = [1, 1]} : vector<8x512xf32> to vector<8x128xf32>
    %15 = arith.negf %14 : vector<8x128xf32>
    %16 = math.exp %15 : vector<8x128xf32>
    %cst_12 = arith.constant 1.000000e+00 : f32
    %17 = vector.broadcast %cst_12 : f32 to vector<8x128xf32>
    %18 = arith.addf %17, %16 : vector<8x128xf32>
    %19 = arith.divf %17, %18 : vector<8x128xf32>
    %20 = vector.extract_strided_slice %11 {offsets = [0, 128], sizes = [8, 128], strides = [1, 1]} : vector<8x512xf32> to vector<8x128xf32>
    %21 = arith.negf %20 : vector<8x128xf32>
    %22 = math.exp %21 : vector<8x128xf32>
    %cst_13 = arith.constant 1.000000e+00 : f32
    %23 = vector.broadcast %cst_13 : f32 to vector<8x128xf32>
    %24 = arith.addf %23, %22 : vector<8x128xf32>
    %25 = arith.divf %23, %24 : vector<8x128xf32>
    %26 = vector.extract_strided_slice %11 {offsets = [0, 256], sizes = [8, 128], strides = [1, 1]} : vector<8x512xf32> to vector<8x128xf32>
    %27 = math.tanh %26 : vector<8x128xf32>
    %28 = vector.extract_strided_slice %11 {offsets = [0, 384], sizes = [8, 128], strides = [1, 1]} : vector<8x512xf32> to vector<8x128xf32>
    %29 = arith.negf %28 : vector<8x128xf32>
    %30 = math.exp %29 : vector<8x128xf32>
    %cst_14 = arith.constant 1.000000e+00 : f32
    %31 = vector.broadcast %cst_14 : f32 to vector<8x128xf32>
    %32 = arith.addf %31, %30 : vector<8x128xf32>
    %33 = arith.divf %31, %32 : vector<8x128xf32>
    %34 = arith.mulf %25, %13 : vector<8x128xf32>
    %35 = arith.mulf %19, %27 : vector<8x128xf32>
    %36 = arith.addf %34, %35 : vector<8x128xf32>
    %37 = math.tanh %36 : vector<8x128xf32>
    %38 = arith.mulf %33, %37 : vector<8x128xf32>
    %c0_15 = arith.constant 0 : index
    %c0_16 = arith.constant 0 : index
    %c0_17 = arith.constant 0 : index
    %39 = vector.load %arg5[%c0_15, %c0_16, %c0_17] : memref<2x8x128xf32, #tpu.memory_space<vmem>>, vector<1x8x128xf32>
    %40 = vector.shape_cast %39 : vector<1x8x128xf32> to vector<8x128xf32>
    %41 = vector.shape_cast %38 : vector<8x128xf32> to vector<1x8x128xf32>
    tpu.vector_store %arg5[%c0_15, %c0_16, %c0_17], %41 {strides = array<i32>} : memref<2x8x128xf32, #tpu.memory_space<vmem>>, vector<1x8x128xf32>,
    %c0_18 = arith.constant 0 : index
    %c0_19 = arith.constant 0 : index
    %c0_20 = arith.constant 0 : index
    %42 = vector.load %arg6[%c0_18, %c0_19, %c0_20] : memref<2x8x128xf32, #tpu.memory_space<vmem>>, vector<1x8x128xf32>
    %43 = vector.shape_cast %42 : vector<1x8x128xf32> to vector<8x128xf32>
    %44 = vector.shape_cast %36 : vector<8x128xf32> to vector<1x8x128xf32>
    tpu.vector_store %arg6[%c0_18, %c0_19, %c0_20], %44 {strides = array<i32>} : memref<2x8x128xf32, #tpu.memory_space<vmem>>, vector<1x8x128xf32>,
    %c1 = arith.constant 1 : index
    %c0_21 = arith.constant 0 : index
    %c0_22 = arith.constant 0 : index
    %45 = vector.load %arg5[%c1, %c0_21, %c0_22] : memref<2x8x128xf32, #tpu.memory_space<vmem>>, vector<1x8x128xf32>
    %46 = vector.shape_cast %45 : vector<1x8x128xf32> to vector<8x128xf32>
    %47 = arith.truncf %46 : vector<8x128xf32> to vector<8x128xbf16>
    %c1_23 = arith.constant 1 : index
    %c0_24 = arith.constant 0 : index
    %c0_25 = arith.constant 0 : index
    %48 = vector.load %arg3[%c1_23, %c0_24, %c0_25] : memref<2x128x512xbf16, #tpu.memory_space<vmem>>, vector<1x128x512xbf16>
    %49 = vector.shape_cast %48 : vector<1x128x512xbf16> to vector<128x512xbf16>
    %cst_26 = arith.constant dense<0.000000e+00> : vector<8x512xf32>
    %50 = tpu.matmul %47, %49, %cst_26 {dimension_numbers = #tpu.dot_dimension_numbers<[1], [0], [0], [1], [0, 0, 1, 1], [], []>} : vector<8x128xbf16>, vector<128x512xbf16>, vector<8x512xf32> -> vector<8x512xf32>
    %51 = arith.truncf %38 : vector<8x128xf32> to vector<8x128xbf16>
    %c1_27 = arith.constant 1 : index
    %c0_28 = arith.constant 0 : index
    %c0_29 = arith.constant 0 : index
    %52 = vector.load %arg2[%c1_27, %c0_28, %c0_29] : memref<2x128x512xbf16, #tpu.memory_space<vmem>>, vector<1x128x512xbf16>
    %53 = vector.shape_cast %52 : vector<1x128x512xbf16> to vector<128x512xbf16>
    %cst_30 = arith.constant dense<0.000000e+00> : vector<8x512xf32>
    %54 = tpu.matmul %51, %53, %cst_30 {dimension_numbers = #tpu.dot_dimension_numbers<[1], [0], [0], [1], [0, 0, 1, 1], [], []>} : vector<8x128xbf16>, vector<128x512xbf16>, vector<8x512xf32> -> vector<8x512xf32>
    %55 = arith.addf %54, %50 : vector<8x512xf32>
    %c1_31 = arith.constant 1 : index
    %c0_32 = arith.constant 0 : index
    %c0_33 = arith.constant 0 : index
    %56 = vector.load %arg4[%c1_31, %c0_32, %c0_33] : memref<2x1x512xf32, #tpu.memory_space<vmem>>, vector<1x1x512xf32>
    %57 = vector.shape_cast %56 : vector<1x1x512xf32> to vector<1x512xf32>
    %58 = vector.broadcast %57 : vector<1x512xf32> to vector<8x512xf32>
    %59 = arith.addf %55, %58 : vector<8x512xf32>
    %c1_34 = arith.constant 1 : index
    %c0_35 = arith.constant 0 : index
    %c0_36 = arith.constant 0 : index
    %60 = vector.load %arg6[%c1_34, %c0_35, %c0_36] : memref<2x8x128xf32, #tpu.memory_space<vmem>>, vector<1x8x128xf32>
    %61 = vector.shape_cast %60 : vector<1x8x128xf32> to vector<8x128xf32>
    %62 = vector.extract_strided_slice %59 {offsets = [0, 0], sizes = [8, 128], strides = [1, 1]} : vector<8x512xf32> to vector<8x128xf32>
    %63 = arith.negf %62 : vector<8x128xf32>
    %64 = math.exp %63 : vector<8x128xf32>
    %cst_37 = arith.constant 1.000000e+00 : f32
    %65 = vector.broadcast %cst_37 : f32 to vector<8x128xf32>
    %66 = arith.addf %65, %64 : vector<8x128xf32>
    %67 = arith.divf %65, %66 : vector<8x128xf32>
    %68 = vector.extract_strided_slice %59 {offsets = [0, 128], sizes = [8, 128], strides = [1, 1]} : vector<8x512xf32> to vector<8x128xf32>
    %69 = arith.negf %68 : vector<8x128xf32>
    %70 = math.exp %69 : vector<8x128xf32>
    %cst_38 = arith.constant 1.000000e+00 : f32
    %71 = vector.broadcast %cst_38 : f32 to vector<8x128xf32>
    %72 = arith.addf %71, %70 : vector<8x128xf32>
    %73 = arith.divf %71, %72 : vector<8x128xf32>
    %74 = vector.extract_strided_slice %59 {offsets = [0, 256], sizes = [8, 128], strides = [1, 1]} : vector<8x512xf32> to vector<8x128xf32>
    %75 = math.tanh %74 : vector<8x128xf32>
    %76 = vector.extract_strided_slice %59 {offsets = [0, 384], sizes = [8, 128], strides = [1, 1]} : vector<8x512xf32> to vector<8x128xf32>
    %77 = arith.negf %76 : vector<8x128xf32>
    %78 = math.exp %77 : vector<8x128xf32>
    %cst_39 = arith.constant 1.000000e+00 : f32
    %79 = vector.broadcast %cst_39 : f32 to vector<8x128xf32>
    %80 = arith.addf %79, %78 : vector<8x128xf32>
    %81 = arith.divf %79, %80 : vector<8x128xf32>
    %82 = arith.mulf %73, %61 : vector<8x128xf32>
    %83 = arith.mulf %67, %75 : vector<8x128xf32>
    %84 = arith.addf %82, %83 : vector<8x128xf32>
    %85 = math.tanh %84 : vector<8x128xf32>
    %86 = arith.mulf %81, %85 : vector<8x128xf32>
    %c1_40 = arith.constant 1 : index
    %c0_41 = arith.constant 0 : index
    %c0_42 = arith.constant 0 : index
    %87 = vector.load %arg5[%c1_40, %c0_41, %c0_42] : memref<2x8x128xf32, #tpu.memory_space<vmem>>, vector<1x8x128xf32>
    %88 = vector.shape_cast %87 : vector<1x8x128xf32> to vector<8x128xf32>
    %89 = vector.shape_cast %86 : vector<8x128xf32> to vector<1x8x128xf32>
    tpu.vector_store %arg5[%c1_40, %c0_41, %c0_42], %89 {strides = array<i32>} : memref<2x8x128xf32, #tpu.memory_space<vmem>>, vector<1x8x128xf32>,
    %c1_43 = arith.constant 1 : index
    %c0_44 = arith.constant 0 : index
    %c0_45 = arith.constant 0 : index
    %90 = vector.load %arg6[%c1_43, %c0_44, %c0_45] : memref<2x8x128xf32, #tpu.memory_space<vmem>>, vector<1x8x128xf32>
    %91 = vector.shape_cast %90 : vector<1x8x128xf32> to vector<8x128xf32>
    %92 = vector.shape_cast %84 : vector<8x128xf32> to vector<1x8x128xf32>
    tpu.vector_store %arg6[%c1_43, %c0_44, %c0_45], %92 {strides = array<i32>} : memref<2x8x128xf32, #tpu.memory_space<vmem>>, vector<1x8x128xf32>,
    return
  }
  func.func @transform_0(%arg0: i32) -> (i32, i32, i32) {
    %c0_i32 = arith.constant 0 : i32
    %c0_i32_0 = arith.constant 0 : i32
    %c0_i32_1 = arith.constant 0 : i32
    return %arg0, %c0_i32, %c0_i32_0 : i32, i32, i32
  }
  func.func @transform_1(%arg0: i32) -> (i32, i32, i32) {
    %c0_i32 = arith.constant 0 : i32
    %c0_i32_0 = arith.constant 0 : i32
    %c0_i32_1 = arith.constant 0 : i32
    %c0_i32_2 = arith.constant 0 : i32
    return %c0_i32, %c0_i32_0, %c0_i32_1 : i32, i32, i32
  }
  func.func @transform_2(%arg0: i32) -> (i32, i32, i32) {
    %c0_i32 = arith.constant 0 : i32
    %c0_i32_0 = arith.constant 0 : i32
    %c0_i32_1 = arith.constant 0 : i32
    %c0_i32_2 = arith.constant 0 : i32
    return %c0_i32, %c0_i32_0, %c0_i32_1 : i32, i32, i32
  }
  func.func @transform_3(%arg0: i32) -> (i32, i32, i32) {
    %c0_i32 = arith.constant 0 : i32
    %c0_i32_0 = arith.constant 0 : i32
    %c0_i32_1 = arith.constant 0 : i32
    %c0_i32_2 = arith.constant 0 : i32
    return %c0_i32, %c0_i32_0, %c0_i32_1 : i32, i32, i32
  }
  func.func @transform_4(%arg0: i32) -> (i32, i32, i32) {
    %c0_i32 = arith.constant 0 : i32
    %c0_i32_0 = arith.constant 0 : i32
    %c0_i32_1 = arith.constant 0 : i32
    %c0_i32_2 = arith.constant 0 : i32
    return %c0_i32, %c0_i32_0, %c0_i32_1 : i32, i32, i32
  }
  func.func @transform_5(%arg0: i32) -> (i32, i32, i32) {
    %c0_i32 = arith.constant 0 : i32
    %c0_i32_0 = arith.constant 0 : i32
    %c0_i32_1 = arith.constant 0 : i32
    %c0_i32_2 = arith.constant 0 : i32
    return %c0_i32, %c0_i32_0, %c0_i32_1 : i32, i32, i32
  }
}

module attributes {stable_mosaic.version = 11 : i64} {
  func.func @_proj_kernel(%arg0: memref<64x128xf32, #tpu.memory_space<vmem>>, %arg1: memref<128x512xbf16, #tpu.memory_space<vmem>>, %arg2: memref<1x512xf32, #tpu.memory_space<vmem>>, %arg3: memref<64x512xf32, #tpu.memory_space<vmem>>) attributes {dimension_semantics = [], scalar_prefetch = 0 : i64, scratch_operands = 0 : i64, tpu.core_type = #tpu.core_type<tc>} {
    %c0 = arith.constant 0 : index
    %c0_0 = arith.constant 0 : index
    %0 = vector.load %arg0[%c0, %c0_0] : memref<64x128xf32, #tpu.memory_space<vmem>>, vector<64x128xf32>
    %1 = arith.truncf %0 : vector<64x128xf32> to vector<64x128xbf16>
    %c0_1 = arith.constant 0 : index
    %c0_2 = arith.constant 0 : index
    %2 = vector.load %arg1[%c0_1, %c0_2] : memref<128x512xbf16, #tpu.memory_space<vmem>>, vector<128x512xbf16>
    %cst = arith.constant dense<0.000000e+00> : vector<64x512xf32>
    %3 = tpu.matmul %1, %2, %cst {dimension_numbers = #tpu.dot_dimension_numbers<[1], [0], [0], [1], [0, 0, 1, 1], [], []>} : vector<64x128xbf16>, vector<128x512xbf16>, vector<64x512xf32> -> vector<64x512xf32>
    %c0_3 = arith.constant 0 : index
    %c0_4 = arith.constant 0 : index
    %4 = vector.load %arg2[%c0_3, %c0_4] : memref<1x512xf32, #tpu.memory_space<vmem>>, vector<1x512xf32>
    %5 = vector.broadcast %4 : vector<1x512xf32> to vector<64x512xf32>
    %6 = arith.addf %3, %5 : vector<64x512xf32>
    %c0_5 = arith.constant 0 : index
    %c0_6 = arith.constant 0 : index
    %7 = vector.load %arg3[%c0_5, %c0_6] : memref<64x512xf32, #tpu.memory_space<vmem>>, vector<64x512xf32>
    tpu.vector_store %arg3[%c0_5, %c0_6], %6 {strides = array<i32>} : memref<64x512xf32, #tpu.memory_space<vmem>>, vector<64x512xf32>,
    return
  }
}

module attributes {stable_mosaic.version = 11 : i64} {
  func.func @_decoder_kernel(%arg0: i32, %arg1: memref<8xi32, #tpu.memory_space<smem>>, %arg2: memref<8x128xf32, #tpu.memory_space<vmem>>, %arg3: memref<1x8x128xf32, #tpu.memory_space<vmem>>, %arg4: memref<2x8x128xf32, #tpu.memory_space<vmem>>, %arg5: memref<2x8x128xf32, #tpu.memory_space<vmem>>, %arg6: memref<2x128x512xbf16, #tpu.memory_space<vmem>>, %arg7: memref<2x128x512xbf16, #tpu.memory_space<vmem>>, %arg8: memref<2x1x512xf32, #tpu.memory_space<vmem>>, %arg9: memref<128x128xf32, #tpu.memory_space<vmem>>, %arg10: memref<128x128xbf16, #tpu.memory_space<vmem>>, %arg11: memref<1x128xf32, #tpu.memory_space<vmem>>, %arg12: memref<1x8x128xf32, #tpu.memory_space<vmem>>, %arg13: memref<2x8x128xf32, #tpu.memory_space<vmem>>, %arg14: memref<2x8x128xf32, #tpu.memory_space<vmem>>, %arg15: memref<8x128xf32, #tpu.memory_space<vmem>>) attributes {dimension_semantics = [#tpu.dimension_semantics<arbitrary>], iteration_bounds = array<i64: 7>, scalar_prefetch = 1 : i64, scratch_operands = 3 : i64, tpu.core_type = #tpu.core_type<tc>, window_params = [{pipeline_mode = #tpu.pipeline_mode<synchronous>, transform_indices = @transform_0, window_bounds = array<i64: 8, 128>}, {transform_indices = @transform_1, window_bounds = array<i64: 1, 8, 128>}, {pipeline_mode = #tpu.pipeline_mode<synchronous>, transform_indices = @transform_2, window_bounds = array<i64: 2, 8, 128>}, {pipeline_mode = #tpu.pipeline_mode<synchronous>, transform_indices = @transform_3, window_bounds = array<i64: 2, 8, 128>}, {pipeline_mode = #tpu.pipeline_mode<synchronous>, transform_indices = @transform_4, window_bounds = array<i64: 2, 128, 512>}, {pipeline_mode = #tpu.pipeline_mode<synchronous>, transform_indices = @transform_5, window_bounds = array<i64: 2, 128, 512>}, {pipeline_mode = #tpu.pipeline_mode<synchronous>, transform_indices = @transform_6, window_bounds = array<i64: 2, 1, 512>}, {pipeline_mode = #tpu.pipeline_mode<synchronous>, transform_indices = @transform_7, window_bounds = array<i64: 128, 128>}, {pipeline_mode = #tpu.pipeline_mode<synchronous>, transform_indices = @transform_8, window_bounds = array<i64: 128, 128>}, {pipeline_mode = #tpu.pipeline_mode<synchronous>, transform_indices = @transform_9, window_bounds = array<i64: 1, 128>}, {transform_indices = @transform_10, window_bounds = array<i64: 1, 8, 128>}]} {
    %c0_i32 = arith.constant 0 : i32
    %0 = arith.cmpi eq, %arg0, %c0_i32 : i32
    %1 = arith.extui %0 : i1 to i32
    %c0_i32_0 = arith.constant 0 : i32
    %2 = arith.cmpi ne, %1, %c0_i32_0 : i32
    scf.if %2 {
      %c0_73 = arith.constant 0 : index
      %c0_74 = arith.constant 0 : index
      %c0_75 = arith.constant 0 : index
      %143 = vector.load %arg4[%c0_73, %c0_74, %c0_75] : memref<2x8x128xf32, #tpu.memory_space<vmem>>, vector<2x8x128xf32>
      %c0_76 = arith.constant 0 : index
      %c0_77 = arith.constant 0 : index
      %c0_78 = arith.constant 0 : index
      %144 = vector.load %arg13[%c0_76, %c0_77, %c0_78] : memref<2x8x128xf32, #tpu.memory_space<vmem>>, vector<2x8x128xf32>
      tpu.vector_store %arg13[%c0_76, %c0_77, %c0_78], %143 {strides = array<i32>} : memref<2x8x128xf32, #tpu.memory_space<vmem>>, vector<2x8x128xf32>,
      %c0_79 = arith.constant 0 : index
      %c0_80 = arith.constant 0 : index
      %c0_81 = arith.constant 0 : index
      %145 = vector.load %arg5[%c0_79, %c0_80, %c0_81] : memref<2x8x128xf32, #tpu.memory_space<vmem>>, vector<2x8x128xf32>
      %c0_82 = arith.constant 0 : index
      %c0_83 = arith.constant 0 : index
      %c0_84 = arith.constant 0 : index
      %146 = vector.load %arg14[%c0_82, %c0_83, %c0_84] : memref<2x8x128xf32, #tpu.memory_space<vmem>>, vector<2x8x128xf32>
      tpu.vector_store %arg14[%c0_82, %c0_83, %c0_84], %145 {strides = array<i32>} : memref<2x8x128xf32, #tpu.memory_space<vmem>>, vector<2x8x128xf32>,
      %c0_85 = arith.constant 0 : index
      %c0_86 = arith.constant 0 : index
      %147 = vector.load %arg2[%c0_85, %c0_86] : memref<8x128xf32, #tpu.memory_space<vmem>>, vector<8x128xf32>
      %c0_87 = arith.constant 0 : index
      %c0_88 = arith.constant 0 : index
      %148 = vector.load %arg15[%c0_87, %c0_88] : memref<8x128xf32, #tpu.memory_space<vmem>>, vector<8x128xf32>
      tpu.vector_store %arg15[%c0_87, %c0_88], %147 {strides = array<i32>} : memref<8x128xf32, #tpu.memory_space<vmem>>, vector<8x128xf32>,
    } else {
    }
    %c0 = arith.constant 0 : index
    %c0_1 = arith.constant 0 : index
    %3 = vector.load %arg15[%c0, %c0_1] : memref<8x128xf32, #tpu.memory_space<vmem>>, vector<8x128xf32>
    %4 = arith.truncf %3 : vector<8x128xf32> to vector<8x128xbf16>
    %c0_2 = arith.constant 0 : index
    %c0_3 = arith.constant 0 : index
    %c0_4 = arith.constant 0 : index
    %5 = vector.load %arg6[%c0_2, %c0_3, %c0_4] : memref<2x128x512xbf16, #tpu.memory_space<vmem>>, vector<1x128x512xbf16>
    %6 = vector.shape_cast %5 : vector<1x128x512xbf16> to vector<128x512xbf16>
    %cst = arith.constant dense<0.000000e+00> : vector<8x512xf32>
    %7 = tpu.matmul %4, %6, %cst {dimension_numbers = #tpu.dot_dimension_numbers<[1], [0], [0], [1], [0, 0, 1, 1], [], []>} : vector<8x128xbf16>, vector<128x512xbf16>, vector<8x512xf32> -> vector<8x512xf32>
    %c0_5 = arith.constant 0 : index
    %c0_6 = arith.constant 0 : index
    %c0_7 = arith.constant 0 : index
    %8 = vector.load %arg13[%c0_5, %c0_6, %c0_7] : memref<2x8x128xf32, #tpu.memory_space<vmem>>, vector<1x8x128xf32>
    %9 = vector.shape_cast %8 : vector<1x8x128xf32> to vector<8x128xf32>
    %10 = arith.truncf %9 : vector<8x128xf32> to vector<8x128xbf16>
    %c0_8 = arith.constant 0 : index
    %c0_9 = arith.constant 0 : index
    %c0_10 = arith.constant 0 : index
    %11 = vector.load %arg7[%c0_8, %c0_9, %c0_10] : memref<2x128x512xbf16, #tpu.memory_space<vmem>>, vector<1x128x512xbf16>
    %12 = vector.shape_cast %11 : vector<1x128x512xbf16> to vector<128x512xbf16>
    %cst_11 = arith.constant dense<0.000000e+00> : vector<8x512xf32>
    %13 = tpu.matmul %10, %12, %cst_11 {dimension_numbers = #tpu.dot_dimension_numbers<[1], [0], [0], [1], [0, 0, 1, 1], [], []>} : vector<8x128xbf16>, vector<128x512xbf16>, vector<8x512xf32> -> vector<8x512xf32>
    %14 = arith.addf %7, %13 : vector<8x512xf32>
    %c0_12 = arith.constant 0 : index
    %c0_13 = arith.constant 0 : index
    %c0_14 = arith.constant 0 : index
    %15 = vector.load %arg8[%c0_12, %c0_13, %c0_14] : memref<2x1x512xf32, #tpu.memory_space<vmem>>, vector<1x1x512xf32>
    %16 = vector.shape_cast %15 : vector<1x1x512xf32> to vector<1x512xf32>
    %17 = vector.broadcast %16 : vector<1x512xf32> to vector<8x512xf32>
    %18 = arith.addf %14, %17 : vector<8x512xf32>
    %c0_15 = arith.constant 0 : index
    %c0_16 = arith.constant 0 : index
    %c0_17 = arith.constant 0 : index
    %19 = vector.load %arg14[%c0_15, %c0_16, %c0_17] : memref<2x8x128xf32, #tpu.memory_space<vmem>>, vector<1x8x128xf32>
    %20 = vector.shape_cast %19 : vector<1x8x128xf32> to vector<8x128xf32>
    %21 = vector.extract_strided_slice %18 {offsets = [0, 0], sizes = [8, 128], strides = [1, 1]} : vector<8x512xf32> to vector<8x128xf32>
    %22 = arith.negf %21 : vector<8x128xf32>
    %23 = math.exp %22 : vector<8x128xf32>
    %cst_18 = arith.constant 1.000000e+00 : f32
    %24 = vector.broadcast %cst_18 : f32 to vector<8x128xf32>
    %25 = arith.addf %24, %23 : vector<8x128xf32>
    %26 = arith.divf %24, %25 : vector<8x128xf32>
    %27 = vector.extract_strided_slice %18 {offsets = [0, 128], sizes = [8, 128], strides = [1, 1]} : vector<8x512xf32> to vector<8x128xf32>
    %28 = arith.negf %27 : vector<8x128xf32>
    %29 = math.exp %28 : vector<8x128xf32>
    %cst_19 = arith.constant 1.000000e+00 : f32
    %30 = vector.broadcast %cst_19 : f32 to vector<8x128xf32>
    %31 = arith.addf %30, %29 : vector<8x128xf32>
    %32 = arith.divf %30, %31 : vector<8x128xf32>
    %33 = vector.extract_strided_slice %18 {offsets = [0, 256], sizes = [8, 128], strides = [1, 1]} : vector<8x512xf32> to vector<8x128xf32>
    %34 = math.tanh %33 : vector<8x128xf32>
    %35 = vector.extract_strided_slice %18 {offsets = [0, 384], sizes = [8, 128], strides = [1, 1]} : vector<8x512xf32> to vector<8x128xf32>
    %36 = arith.negf %35 : vector<8x128xf32>
    %37 = math.exp %36 : vector<8x128xf32>
    %cst_20 = arith.constant 1.000000e+00 : f32
    %38 = vector.broadcast %cst_20 : f32 to vector<8x128xf32>
    %39 = arith.addf %38, %37 : vector<8x128xf32>
    %40 = arith.divf %38, %39 : vector<8x128xf32>
    %41 = arith.mulf %32, %20 : vector<8x128xf32>
    %42 = arith.mulf %26, %34 : vector<8x128xf32>
    %43 = arith.addf %41, %42 : vector<8x128xf32>
    %44 = math.tanh %43 : vector<8x128xf32>
    %45 = arith.mulf %40, %44 : vector<8x128xf32>
    %c0_21 = arith.constant 0 : index
    %c0_22 = arith.constant 0 : index
    %c0_23 = arith.constant 0 : index
    %46 = vector.load %arg13[%c0_21, %c0_22, %c0_23] : memref<2x8x128xf32, #tpu.memory_space<vmem>>, vector<1x8x128xf32>
    %47 = vector.shape_cast %46 : vector<1x8x128xf32> to vector<8x128xf32>
    %48 = vector.shape_cast %45 : vector<8x128xf32> to vector<1x8x128xf32>
    tpu.vector_store %arg13[%c0_21, %c0_22, %c0_23], %48 {strides = array<i32>} : memref<2x8x128xf32, #tpu.memory_space<vmem>>, vector<1x8x128xf32>,
    %c0_24 = arith.constant 0 : index
    %c0_25 = arith.constant 0 : index
    %c0_26 = arith.constant 0 : index
    %49 = vector.load %arg14[%c0_24, %c0_25, %c0_26] : memref<2x8x128xf32, #tpu.memory_space<vmem>>, vector<1x8x128xf32>
    %50 = vector.shape_cast %49 : vector<1x8x128xf32> to vector<8x128xf32>
    %51 = vector.shape_cast %43 : vector<8x128xf32> to vector<1x8x128xf32>
    tpu.vector_store %arg14[%c0_24, %c0_25, %c0_26], %51 {strides = array<i32>} : memref<2x8x128xf32, #tpu.memory_space<vmem>>, vector<1x8x128xf32>,
    %52 = arith.truncf %45 : vector<8x128xf32> to vector<8x128xbf16>
    %c1 = arith.constant 1 : index
    %c0_27 = arith.constant 0 : index
    %c0_28 = arith.constant 0 : index
    %53 = vector.load %arg6[%c1, %c0_27, %c0_28] : memref<2x128x512xbf16, #tpu.memory_space<vmem>>, vector<1x128x512xbf16>
    %54 = vector.shape_cast %53 : vector<1x128x512xbf16> to vector<128x512xbf16>
    %cst_29 = arith.constant dense<0.000000e+00> : vector<8x512xf32>
    %55 = tpu.matmul %52, %54, %cst_29 {dimension_numbers = #tpu.dot_dimension_numbers<[1], [0], [0], [1], [0, 0, 1, 1], [], []>} : vector<8x128xbf16>, vector<128x512xbf16>, vector<8x512xf32> -> vector<8x512xf32>
    %c1_30 = arith.constant 1 : index
    %c0_31 = arith.constant 0 : index
    %c0_32 = arith.constant 0 : index
    %56 = vector.load %arg13[%c1_30, %c0_31, %c0_32] : memref<2x8x128xf32, #tpu.memory_space<vmem>>, vector<1x8x128xf32>
    %57 = vector.shape_cast %56 : vector<1x8x128xf32> to vector<8x128xf32>
    %58 = arith.truncf %57 : vector<8x128xf32> to vector<8x128xbf16>
    %c1_33 = arith.constant 1 : index
    %c0_34 = arith.constant 0 : index
    %c0_35 = arith.constant 0 : index
    %59 = vector.load %arg7[%c1_33, %c0_34, %c0_35] : memref<2x128x512xbf16, #tpu.memory_space<vmem>>, vector<1x128x512xbf16>
    %60 = vector.shape_cast %59 : vector<1x128x512xbf16> to vector<128x512xbf16>
    %cst_36 = arith.constant dense<0.000000e+00> : vector<8x512xf32>
    %61 = tpu.matmul %58, %60, %cst_36 {dimension_numbers = #tpu.dot_dimension_numbers<[1], [0], [0], [1], [0, 0, 1, 1], [], []>} : vector<8x128xbf16>, vector<128x512xbf16>, vector<8x512xf32> -> vector<8x512xf32>
    %62 = arith.addf %55, %61 : vector<8x512xf32>
    %c1_37 = arith.constant 1 : index
    %c0_38 = arith.constant 0 : index
    %c0_39 = arith.constant 0 : index
    %63 = vector.load %arg8[%c1_37, %c0_38, %c0_39] : memref<2x1x512xf32, #tpu.memory_space<vmem>>, vector<1x1x512xf32>
    %64 = vector.shape_cast %63 : vector<1x1x512xf32> to vector<1x512xf32>
    %65 = vector.broadcast %64 : vector<1x512xf32> to vector<8x512xf32>
    %66 = arith.addf %62, %65 : vector<8x512xf32>
    %c1_40 = arith.constant 1 : index
    %c0_41 = arith.constant 0 : index
    %c0_42 = arith.constant 0 : index
    %67 = vector.load %arg14[%c1_40, %c0_41, %c0_42] : memref<2x8x128xf32, #tpu.memory_space<vmem>>, vector<1x8x128xf32>
    %68 = vector.shape_cast %67 : vector<1x8x128xf32> to vector<8x128xf32>
    %69 = vector.extract_strided_slice %66 {offsets = [0, 0], sizes = [8, 128], strides = [1, 1]} : vector<8x512xf32> to vector<8x128xf32>
    %70 = arith.negf %69 : vector<8x128xf32>
    %71 = math.exp %70 : vector<8x128xf32>
    %cst_43 = arith.constant 1.000000e+00 : f32
    %72 = vector.broadcast %cst_43 : f32 to vector<8x128xf32>
    %73 = arith.addf %72, %71 : vector<8x128xf32>
    %74 = arith.divf %72, %73 : vector<8x128xf32>
    %75 = vector.extract_strided_slice %66 {offsets = [0, 128], sizes = [8, 128], strides = [1, 1]} : vector<8x512xf32> to vector<8x128xf32>
    %76 = arith.negf %75 : vector<8x128xf32>
    %77 = math.exp %76 : vector<8x128xf32>
    %cst_44 = arith.constant 1.000000e+00 : f32
    %78 = vector.broadcast %cst_44 : f32 to vector<8x128xf32>
    %79 = arith.addf %78, %77 : vector<8x128xf32>
    %80 = arith.divf %78, %79 : vector<8x128xf32>
    %81 = vector.extract_strided_slice %66 {offsets = [0, 256], sizes = [8, 128], strides = [1, 1]} : vector<8x512xf32> to vector<8x128xf32>
    %82 = math.tanh %81 : vector<8x128xf32>
    %83 = vector.extract_strided_slice %66 {offsets = [0, 384], sizes = [8, 128], strides = [1, 1]} : vector<8x512xf32> to vector<8x128xf32>
    %84 = arith.negf %83 : vector<8x128xf32>
    %85 = math.exp %84 : vector<8x128xf32>
    %cst_45 = arith.constant 1.000000e+00 : f32
    %86 = vector.broadcast %cst_45 : f32 to vector<8x128xf32>
    %87 = arith.addf %86, %85 : vector<8x128xf32>
    %88 = arith.divf %86, %87 : vector<8x128xf32>
    %89 = arith.mulf %80, %68 : vector<8x128xf32>
    %90 = arith.mulf %74, %82 : vector<8x128xf32>
    %91 = arith.addf %89, %90 : vector<8x128xf32>
    %92 = math.tanh %91 : vector<8x128xf32>
    %93 = arith.mulf %88, %92 : vector<8x128xf32>
    %c1_46 = arith.constant 1 : index
    %c0_47 = arith.constant 0 : index
    %c0_48 = arith.constant 0 : index
    %94 = vector.load %arg13[%c1_46, %c0_47, %c0_48] : memref<2x8x128xf32, #tpu.memory_space<vmem>>, vector<1x8x128xf32>
    %95 = vector.shape_cast %94 : vector<1x8x128xf32> to vector<8x128xf32>
    %96 = vector.shape_cast %93 : vector<8x128xf32> to vector<1x8x128xf32>
    tpu.vector_store %arg13[%c1_46, %c0_47, %c0_48], %96 {strides = array<i32>} : memref<2x8x128xf32, #tpu.memory_space<vmem>>, vector<1x8x128xf32>,
    %c1_49 = arith.constant 1 : index
    %c0_50 = arith.constant 0 : index
    %c0_51 = arith.constant 0 : index
    %97 = vector.load %arg14[%c1_49, %c0_50, %c0_51] : memref<2x8x128xf32, #tpu.memory_space<vmem>>, vector<1x8x128xf32>
    %98 = vector.shape_cast %97 : vector<1x8x128xf32> to vector<8x128xf32>
    %99 = vector.shape_cast %91 : vector<8x128xf32> to vector<1x8x128xf32>
    tpu.vector_store %arg14[%c1_49, %c0_50, %c0_51], %99 {strides = array<i32>} : memref<2x8x128xf32, #tpu.memory_space<vmem>>, vector<1x8x128xf32>,
    %100 = arith.truncf %93 : vector<8x128xf32> to vector<8x128xbf16>
    %c0_52 = arith.constant 0 : index
    %c0_53 = arith.constant 0 : index
    %101 = vector.load %arg10[%c0_52, %c0_53] : memref<128x128xbf16, #tpu.memory_space<vmem>>, vector<128x128xbf16>
    %cst_54 = arith.constant dense<0.000000e+00> : vector<8x128xf32>
    %102 = tpu.matmul %100, %101, %cst_54 {dimension_numbers = #tpu.dot_dimension_numbers<[1], [0], [0], [1], [0, 0, 1, 1], [], []>} : vector<8x128xbf16>, vector<128x128xbf16>, vector<8x128xf32> -> vector<8x128xf32>
    %c0_55 = arith.constant 0 : index
    %c0_56 = arith.constant 0 : index
    %103 = vector.load %arg11[%c0_55, %c0_56] : memref<1x128xf32, #tpu.memory_space<vmem>>, vector<1x128xf32>
    %104 = vector.broadcast %103 : vector<1x128xf32> to vector<8x128xf32>
    %105 = arith.addf %102, %104 : vector<8x128xf32>
    %c0_57 = arith.constant 0 : index
    %c0_58 = arith.constant 0 : index
    %c0_59 = arith.constant 0 : index
    %106 = vector.load %arg12[%c0_57, %c0_58, %c0_59] : memref<1x8x128xf32, #tpu.memory_space<vmem>>, vector<1x8x128xf32>
    %107 = vector.shape_cast %106 : vector<1x8x128xf32> to vector<8x128xf32>
    %108 = vector.shape_cast %105 : vector<8x128xf32> to vector<1x8x128xf32>
    tpu.vector_store %arg12[%c0_57, %c0_58, %c0_59], %108 {strides = array<i32>} : memref<1x8x128xf32, #tpu.memory_space<vmem>>, vector<1x8x128xf32>,
    %109 = tpu.iota {dimensions = array<i32: 1>} : vector<8x128xi32>
    %c40_i32 = arith.constant 40 : i32
    %110 = vector.broadcast %c40_i32 : i32 to vector<8x128xi32>
    %111 = arith.cmpi slt, %109, %110 : vector<8x128xi32>
    %cst_60 = arith.constant 0xFF800000 : f32
    %112 = vector.broadcast %cst_60 : f32 to vector<8x128xf32>
    %113 = arith.select %111, %105, %112 : vector<8x128xi1>, vector<8x128xf32>
    %cst_61 = arith.constant dense<0xFF800000> : vector<8xf32>
    %114 = vector.multi_reduction <maximumf>, %113, %cst_61 [1] : vector<8x128xf32> to vector<8xf32>
    %115 = vector.shape_cast %114 : vector<8xf32> to vector<8x1xf32>
    %116 = arith.sitofp %109 : vector<8x128xi32> to vector<8x128xf32>
    %117 = vector.broadcast %115 : vector<8x1xf32> to vector<8x128xf32>
    %118 = arith.cmpf oeq, %113, %117 : vector<8x128xf32>
    %119 = arith.andi %118, %111 : vector<8x128xi1>
    %cst_62 = arith.constant 1.280000e+02 : f32
    %120 = vector.broadcast %cst_62 : f32 to vector<8x128xf32>
    %121 = arith.select %119, %116, %120 : vector<8x128xi1>, vector<8x128xf32>
    %cst_63 = arith.constant dense<0x7F800000> : vector<8xf32>
    %122 = vector.multi_reduction <minimumf>, %121, %cst_63 [1] : vector<8x128xf32> to vector<8xf32>
    %123 = vector.shape_cast %122 : vector<8xf32> to vector<8x1xf32>
    %124 = vector.broadcast %123 : vector<8x1xf32> to vector<8x128xf32>
    %125 = arith.cmpf oeq, %116, %124 : vector<8x128xf32>
    %126 = arith.extui %125 : vector<8x128xi1> to vector<8x128xi32>
    %127 = arith.sitofp %126 : vector<8x128xi32> to vector<8x128xf32>
    %c0_64 = arith.constant 0 : index
    %c0_65 = arith.constant 0 : index
    %128 = vector.load %arg9[%c0_64, %c0_65] : memref<128x128xf32, #tpu.memory_space<vmem>>, vector<128x128xf32>
    %cst_66 = arith.constant dense<0.000000e+00> : vector<8x128xf32>
    %129 = tpu.matmul %127, %128, %cst_66 {dimension_numbers = #tpu.dot_dimension_numbers<[1], [0], [0], [1], [0, 0, 1, 1], [], []>} : vector<8x128xf32>, vector<128x128xf32>, vector<8x128xf32> -> vector<8x128xf32>
    %c1_i32 = arith.constant 1 : i32
    %130 = arith.addi %arg0, %c1_i32 : i32
    %131 = arith.index_cast %130 : i32 to index
    %132 = memref.load %arg1[%131] : memref<8xi32, #tpu.memory_space<smem>>
    %133 = arith.sitofp %132 : i32 to f32
    %c0_67 = arith.constant 0 : index
    %c0_68 = arith.constant 0 : index
    %c0_69 = arith.constant 0 : index
    %134 = vector.load %arg3[%c0_67, %c0_68, %c0_69] : memref<1x8x128xf32, #tpu.memory_space<vmem>>, vector<1x8x128xf32>
    %135 = vector.shape_cast %134 : vector<1x8x128xf32> to vector<8x128xf32>
    %136 = vector.broadcast %133 : f32 to vector<8x128xf32>
    %137 = arith.mulf %136, %135 : vector<8x128xf32>
    %cst_70 = arith.constant 1.000000e+00 : f32
    %138 = arith.subf %cst_70, %133 : f32
    %139 = vector.broadcast %138 : f32 to vector<8x128xf32>
    %140 = arith.mulf %139, %129 : vector<8x128xf32>
    %141 = arith.addf %137, %140 : vector<8x128xf32>
    %c0_71 = arith.constant 0 : index
    %c0_72 = arith.constant 0 : index
    %142 = vector.load %arg15[%c0_71, %c0_72] : memref<8x128xf32, #tpu.memory_space<vmem>>, vector<8x128xf32>
    tpu.vector_store %arg15[%c0_71, %c0_72], %141 {strides = array<i32>} : memref<8x128xf32, #tpu.memory_space<vmem>>, vector<8x128xf32>,
    return
  }
  func.func @transform_0(%arg0: i32, %arg1: memref<8xi32, #tpu.memory_space<smem>>) -> (i32, i32) {
    %c0_i32 = arith.constant 0 : i32
    %c0_i32_0 = arith.constant 0 : i32
    %c0_i32_1 = arith.constant 0 : i32
    return %c0_i32, %c0_i32_0 : i32, i32
  }
  func.func @transform_1(%arg0: i32, %arg1: memref<8xi32, #tpu.memory_space<smem>>) -> (i32, i32, i32) {
    %c1_i32 = arith.constant 1 : i32
    %0 = arith.addi %arg0, %c1_i32 : i32
    %c0_i32 = arith.constant 0 : i32
    %c0_i32_0 = arith.constant 0 : i32
    %c0_i32_1 = arith.constant 0 : i32
    return %0, %c0_i32, %c0_i32_0 : i32, i32, i32
  }
  func.func @transform_2(%arg0: i32, %arg1: memref<8xi32, #tpu.memory_space<smem>>) -> (i32, i32, i32) {
    %c0_i32 = arith.constant 0 : i32
    %c0_i32_0 = arith.constant 0 : i32
    %c0_i32_1 = arith.constant 0 : i32
    %c0_i32_2 = arith.constant 0 : i32
    return %c0_i32, %c0_i32_0, %c0_i32_1 : i32, i32, i32
  }
  func.func @transform_3(%arg0: i32, %arg1: memref<8xi32, #tpu.memory_space<smem>>) -> (i32, i32, i32) {
    %c0_i32 = arith.constant 0 : i32
    %c0_i32_0 = arith.constant 0 : i32
    %c0_i32_1 = arith.constant 0 : i32
    %c0_i32_2 = arith.constant 0 : i32
    return %c0_i32, %c0_i32_0, %c0_i32_1 : i32, i32, i32
  }
  func.func @transform_4(%arg0: i32, %arg1: memref<8xi32, #tpu.memory_space<smem>>) -> (i32, i32, i32) {
    %c0_i32 = arith.constant 0 : i32
    %c0_i32_0 = arith.constant 0 : i32
    %c0_i32_1 = arith.constant 0 : i32
    %c0_i32_2 = arith.constant 0 : i32
    return %c0_i32, %c0_i32_0, %c0_i32_1 : i32, i32, i32
  }
  func.func @transform_5(%arg0: i32, %arg1: memref<8xi32, #tpu.memory_space<smem>>) -> (i32, i32, i32) {
    %c0_i32 = arith.constant 0 : i32
    %c0_i32_0 = arith.constant 0 : i32
    %c0_i32_1 = arith.constant 0 : i32
    %c0_i32_2 = arith.constant 0 : i32
    return %c0_i32, %c0_i32_0, %c0_i32_1 : i32, i32, i32
  }
  func.func @transform_6(%arg0: i32, %arg1: memref<8xi32, #tpu.memory_space<smem>>) -> (i32, i32, i32) {
    %c0_i32 = arith.constant 0 : i32
    %c0_i32_0 = arith.constant 0 : i32
    %c0_i32_1 = arith.constant 0 : i32
    %c0_i32_2 = arith.constant 0 : i32
    return %c0_i32, %c0_i32_0, %c0_i32_1 : i32, i32, i32
  }
  func.func @transform_7(%arg0: i32, %arg1: memref<8xi32, #tpu.memory_space<smem>>) -> (i32, i32) {
    %c0_i32 = arith.constant 0 : i32
    %c0_i32_0 = arith.constant 0 : i32
    %c0_i32_1 = arith.constant 0 : i32
    return %c0_i32, %c0_i32_0 : i32, i32
  }
  func.func @transform_8(%arg0: i32, %arg1: memref<8xi32, #tpu.memory_space<smem>>) -> (i32, i32) {
    %c0_i32 = arith.constant 0 : i32
    %c0_i32_0 = arith.constant 0 : i32
    %c0_i32_1 = arith.constant 0 : i32
    return %c0_i32, %c0_i32_0 : i32, i32
  }
  func.func @transform_9(%arg0: i32, %arg1: memref<8xi32, #tpu.memory_space<smem>>) -> (i32, i32) {
    %c0_i32 = arith.constant 0 : i32
    %c0_i32_0 = arith.constant 0 : i32
    %c0_i32_1 = arith.constant 0 : i32
    return %c0_i32, %c0_i32_0 : i32, i32
  }
  func.func @transform_10(%arg0: i32, %arg1: memref<8xi32, #tpu.memory_space<smem>>) -> (i32, i32, i32) {
    %c0_i32 = arith.constant 0 : i32
    %c0_i32_0 = arith.constant 0 : i32
    %c0_i32_1 = arith.constant 0 : i32
    return %arg0, %c0_i32, %c0_i32_0 : i32, i32, i32
  }
}

</mosaic_0001>

<llo_original>
// kernel: _forward_core.3
$region0: #{_forward_core.3}
  #allocation0 [shape = 'u32[]', space=smem, size = 0x4, offset = 0x4, fixed_abs, tag = 'smem constant byte address 0x4 - core index']
  #allocation1 [shape = 'u32[144,128]{1,0:T(1,128)}', space=vmem, size = 0x12000, scoped, tag = 'internal scratch']
  %s0 = inlined_call_operand.vmem [shape: f32[64,128], index: 0, kind: input, shape index: {}]
  %s1 = inlined_call_operand.vmem [shape: bf16[128,512], index: 1, kind: input, shape index: {}]
  %s2 = inlined_call_operand.vmem [shape: f32[1,512], index: 2, kind: input, shape index: {}]
  %s3 = inlined_call_operand.vmem [shape: f32[64,512], index: 3, kind: output, shape index: {}]
  %s4 = sld [smem:[#allocation0]]
  $region22: #{_forward_core.3} parent=0
    _
  %s6 = ssub.s32 1, %s4
  %s7 = scalar_select 0, %s6, %s4
  // Predicated region
  $region2: #{_forward_core.3} parent=0 // pred_check
    _
  $region3: #{_forward_core.3} parent=0 // pred_check_branch
    %9 = sbr.rel (0) target = $region5
  $region4: #{_forward_core.3} parent=0 // pred_region
    _
  $region5: #{_forward_core.3} parent=0 // pred_fallthru
    _
  // Predicated region
  $region6: #{_forward_core.3} parent=0 // pred_check
    _
  $region7: #{_forward_core.3} parent=0 // pred_check_branch
    %11 = sbr.rel (0) target = $region9
  $region8: #{_forward_core.3} parent=0 // pred_region
    _
  $region9: #{_forward_core.3} parent=0 // pred_fallthru
    _
  // Predicated region
  $region10: #{_forward_core.3} parent=0 // pred_check
    _
  $region11: #{_forward_core.3} parent=0 // pred_check_branch
    %13 = sbr.rel (0) target = $region13
  $region12: #{_forward_core.3} parent=0 // pred_region
    _
  $region13: #{_forward_core.3} parent=0 // pred_fallthru
    _
  %v15 = vld [vmem:[%s0] sm:$0xff]
  %v16 = vld [vmem:[%s0 + $0x8] sm:$0xff]
  %v17 = vld [vmem:[%s0 + $0x10] sm:$0xff]
  %v18 = vld [vmem:[%s0 + $0x18] sm:$0xff]
  %v19 = vld [vmem:[%s0 + $0x20] sm:$0xff]
  %v20 = vld [vmem:[%s0 + $0x28] sm:$0xff]
  %v21 = vld [vmem:[%s0 + $0x30] sm:$0xff]
  %v22 = vld [vmem:[%s0 + $0x38] sm:$0xff]
  %v23 = vpack.c.bf16 %v16, %v15
  %v24 = vpack.c.bf16 %v18, %v17
  %v25 = vpack.c.bf16 %v20, %v19
  %v26 = vpack.c.bf16 %v22, %v21
  %v27 = vld [vmem:[%s1] sm:$0xff]
  %v28 = vld [vmem:[%s1 + $0x8] sm:$0xff]
  %v29 = vld [vmem:[%s1 + $0x10] sm:$0xff]
  %v30 = vld [vmem:[%s1 + $0x18] sm:$0xff]
  %v31 = vld [vmem:[%s1 + $0x20] sm:$0xff]
  %v32 = vld [vmem:[%s1 + $0x28] sm:$0xff]
  %v33 = vld [vmem:[%s1 + $0x30] sm:$0xff]
  %v34 = vld [vmem:[%s1 + $0x38] sm:$0xff]
  %v35 = vld [vmem:[%s1 + $0x40] sm:$0xff]
  %v36 = vld [vmem:[%s1 + $0x48] sm:$0xff]
  %v37 = vld [vmem:[%s1 + $0x50] sm:$0xff]
  %v38 = vld [vmem:[%s1 + $0x58] sm:$0xff]
  %v39 = vld [vmem:[%s1 + $0x60] sm:$0xff]
  %v40 = vld [vmem:[%s1 + $0x68] sm:$0xff]
  %v41 = vld [vmem:[%s1 + $0x70] sm:$0xff]
  %v42 = vld [vmem:[%s1 + $0x78] sm:$0xff]
  %v43 = vld [vmem:[%s1 + $0x80] sm:$0xff]
  %v44 = vld [vmem:[%s1 + $0x88] sm:$0xff]
  %v45 = vld [vmem:[%s1 + $0x90] sm:$0xff]
  %v46 = vld [vmem:[%s1 + $0x98] sm:$0xff]
  %v47 = vld [vmem:[%s1 + $0xa0] sm:$0xff]
  %v48 = vld [vmem:[%s1 + $0xa8] sm:$0xff]
  %v49 = vld [vmem:[%s1 + $0xb0] sm:$0xff]
  %v50 = vld [vmem:[%s1 + $0xb8] sm:$0xff]
  %v51 = vld [vmem:[%s1 + $0xc0] sm:$0xff]
  %v52 = vld [vmem:[%s1 + $0xc8] sm:$0xff]
  %v53 = vld [vmem:[%s1 + $0xd0] sm:$0xff]
  %v54 = vld [vmem:[%s1 + $0xd8] sm:$0xff]
  %v55 = vld [vmem:[%s1 + $0xe0] sm:$0xff]
  %v56 = vld [vmem:[%s1 + $0xe8] sm:$0xff]
  %v57 = vld [vmem:[%s1 + $0xf0] sm:$0xff]
  %v58 = vld [vmem:[%s1 + $0xf8] sm:$0xff]
  %v59 = vld [vmem:[%s2] sm:$0xf]
  %v61 = vlaneseq
  %v62 = vshrl.u32 %v61, 7
  %v63 = vsub.s32 0, %v62
  %v64 = vrot.slane %v59, %v63
  %v65 = vlaneseq
  %v66 = vshrl.u32 %v65, 7
  %v67 = vsub.s32 1, %v66
  %v68 = vrot.slane %v59, %v67
  %v69 = vlaneseq
  %v70 = vshrl.u32 %v69, 7
  %v71 = vsub.s32 2, %v70
  %v72 = vrot.slane %v59, %v71
  %v73 = vlaneseq
  %v74 = vshrl.u32 %v73, 7
  %v75 = vsub.s32 3, %v74
  %v76 = vrot.slane %v59, %v75
  %v113 = vunpack.c.l.b16 %v27
  %v114 = vunpack.c.h.b16 %v27
  %v115 = vunpack.c.l.b16 %v28
  %v116 = vunpack.c.h.b16 %v28
  %v117 = vunpack.c.l.b16 %v29
  %v118 = vunpack.c.h.b16 %v29
  %v119 = vunpack.c.l.b16 %v30
  %v120 = vunpack.c.h.b16 %v30
  %v121 = vunpack.c.l.b16 %v31
  %v122 = vunpack.c.h.b16 %v31
  %v123 = vunpack.c.l.b16 %v32
  %v124 = vunpack.c.h.b16 %v32
  %v125 = vunpack.c.l.b16 %v33
  %v126 = vunpack.c.h.b16 %v33
  %v127 = vunpack.c.l.b16 %v34
  %v128 = vunpack.c.h.b16 %v34
  %v129 = vunpack.c.l.b16 %v35
  %v130 = vunpack.c.h.b16 %v35
  %v131 = vunpack.c.l.b16 %v36
  %v132 = vunpack.c.h.b16 %v36
  %v133 = vunpack.c.l.b16 %v37
  %v134 = vunpack.c.h.b16 %v37
  %v135 = vunpack.c.l.b16 %v38
  %v136 = vunpack.c.h.b16 %v38
  %v137 = vunpack.c.l.b16 %v39
  %v138 = vunpack.c.h.b16 %v39
  %v139 = vunpack.c.l.b16 %v40
  %v140 = vunpack.c.h.b16 %v40
  %v141 = vunpack.c.l.b16 %v41
  %v142 = vunpack.c.h.b16 %v41
  %v143 = vunpack.c.l.b16 %v42
  %v144 = vunpack.c.h.b16 %v42
  %v145 = vunpack.c.l.b16 %v43
  %v146 = vunpack.c.h.b16 %v43
  %v147 = vunpack.c.l.b16 %v44
  %v148 = vunpack.c.h.b16 %v44
  %v149 = vunpack.c.l.b16 %v45
  %v150 = vunpack.c.h.b16 %v45
  %v151 = vunpack.c.l.b16 %v46
  %v152 = vunpack.c.h.b16 %v46
  %v153 = vunpack.c.l.b16 %v47
  %v154 = vunpack.c.h.b16 %v47
  %v155 = vunpack.c.l.b16 %v48
  %v156 = vunpack.c.h.b16 %v48
  %v157 = vunpack.c.l.b16 %v49
  %v158 = vunpack.c.h.b16 %v49
  %v159 = vunpack.c.l.b16 %v50
  %v160 = vunpack.c.h.b16 %v50
  %v161 = vunpack.c.l.b16 %v51
  %v162 = vunpack.c.h.b16 %v51
  %v163 = vunpack.c.l.b16 %v52
  %v164 = vunpack.c.h.b16 %v52
  %v165 = vunpack.c.l.b16 %v53
  %v166 = vunpack.c.h.b16 %v53
  %v167 = vunpack.c.l.b16 %v54
  %v168 = vunpack.c.h.b16 %v54
  %v169 = vunpack.c.l.b16 %v55
  %v170 = vunpack.c.h.b16 %v55
  %v171 = vunpack.c.l.b16 %v56
  %v172 = vunpack.c.h.b16 %v56
  %v173 = vunpack.c.l.b16 %v57
  %v174 = vunpack.c.h.b16 %v57
  %v175 = vunpack.c.l.b16 %v58
  %v176 = vunpack.c.h.b16 %v58
  %v177 = vpack.c.b16 %v117, %v113
  %v178 = vpack.c.b16 %v118, %v114
  %v179 = vpack.c.b16 %v119, %v115
  %v180 = vpack.c.b16 %v120, %v116
  %v181 = vpack.c.b16 %v125, %v121
  %v182 = vpack.c.b16 %v126, %v122
  %v183 = vpack.c.b16 %v127, %v123
  %v184 = vpack.c.b16 %v128, %v124
  %v185 = vpack.c.b16 %v133, %v129
  %v186 = vpack.c.b16 %v134, %v130
  %v187 = vpack.c.b16 %v135, %v131
  %v188 = vpack.c.b16 %v136, %v132
  %v189 = vpack.c.b16 %v141, %v137
  %v190 = vpack.c.b16 %v142, %v138
  %v191 = vpack.c.b16 %v143, %v139
  %v192 = vpack.c.b16 %v144, %v140
  %v193 = vpack.c.b16 %v149, %v145
  %v194 = vpack.c.b16 %v150, %v146
  %v195 = vpack.c.b16 %v151, %v147
  %v196 = vpack.c.b16 %v152, %v148
  %v197 = vpack.c.b16 %v157, %v153
  %v198 = vpack.c.b16 %v158, %v154
  %v199 = vpack.c.b16 %v159, %v155
  %v200 = vpack.c.b16 %v160, %v156
  %v201 = vpack.c.b16 %v165, %v161
  %v202 = vpack.c.b16 %v166, %v162
  %v203 = vpack.c.b16 %v167, %v163
  %v204 = vpack.c.b16 %v168, %v164
  %v205 = vpack.c.b16 %v173, %v169
  %v206 = vpack.c.b16 %v174, %v170
  %v207 = vpack.c.b16 %v175, %v171
  %v208 = vpack.c.b16 %v176, %v172
  %241 = vmatprep.subr.bf16.mxu0 %v178
  %242 = vmatpush1.bf16.msra.mxu0 %v177
  %243 = vmatprep.subr.bf16.mxu0 %v182
  %244 = vmatpush1.bf16.msra.mxu0 %v181
  %245 = vmatprep.subr.bf16.mxu0 %v186
  %246 = vmatpush1.bf16.msra.mxu0 %v185
  %247 = vmatprep.subr.bf16.mxu0 %v190
  %248 = vmatpush1.bf16.msra.mxu0 %v189
  %249 = vmatprep.subr.bf16.mxu0 %v194
  %250 = vmatpush1.bf16.msra.mxu0 %v193
  %251 = vmatprep.subr.bf16.mxu0 %v198
  %252 = vmatpush1.bf16.msra.mxu0 %v197
  %253 = vmatprep.subr.bf16.mxu0 %v202
  %254 = vmatpush1.bf16.msra.mxu0 %v201
  %255 = vmatprep.subr.bf16.mxu0 %v206
  %256 = vmatpush1.bf16.msra.mxu0 %v205
  %257 = vmatprep.subr.bf16.mxu0 0
  %258 = vmatpush1.bf16.msra.mxu0 0
  %259 = vmatprep.subr.bf16.mxu0 0
  %260 = vmatpush1.bf16.msra.mxu0 0
  %261 = vmatprep.subr.bf16.mxu0 0
  %262 = vmatpush1.bf16.msra.mxu0 0
  %263 = vmatprep.subr.bf16.mxu0 0
  %264 = vmatpush1.bf16.msra.mxu0 0
  %265 = vmatprep.subr.bf16.mxu0 0
  %266 = vmatpush1.bf16.msra.mxu0 0
  %267 = vmatprep.subr.bf16.mxu0 0
  %268 = vmatpush1.bf16.msra.mxu0 0
  %269 = vmatprep.subr.bf16.mxu0 0
  %270 = vmatpush1.bf16.msra.mxu0 0
  %271 = vmatprep.subr.bf16.mxu0 0
  %272 = vmatpush1.bf16.msra.mxu0 0
  %273 = vmatprep.mubr.bf16.mxu0 0
  %274 = vmatmul.mubr.bf16.gmra.mrb[0].mxu0 %v23
  %v275 = vpop.f32.mrb[0].mxu0
  %v276 = vadd.f32 %v64, %v275
  %v277 = vpop.f32.mrb[0].mxu0
  %v278 = vadd.f32 %v68, %v277
  %v279 = vpop.f32.mrb[0].mxu0
  %v280 = vadd.f32 %v64, %v279
  %v281 = vpop.f32.mrb[0].mxu0
  %v282 = vadd.f32 %v68, %v281
  %283 = vmatprep.mubr.bf16.mxu0 0
  %284 = vmatmul.mubr.bf16.gmra.mrb[0].mxu0 %v24
  %v285 = vpop.f32.mrb[0].mxu0
  %v286 = vadd.f32 %v64, %v285
  %v287 = vpop.f32.mrb[0].mxu0
  %v288 = vadd.f32 %v68, %v287
  %v289 = vpop.f32.mrb[0].mxu0
  %v290 = vadd.f32 %v64, %v289
  %v291 = vpop.f32.mrb[0].mxu0
  %v292 = vadd.f32 %v68, %v291
  %293 = vmatprep.mubr.bf16.mxu0 0
  %294 = vmatmul.mubr.bf16.gmra.mrb[0].mxu0 %v25
  %v295 = vpop.f32.mrb[0].mxu0
  %v296 = vadd.f32 %v64, %v295
  %v297 = vpop.f32.mrb[0].mxu0
  %v298 = vadd.f32 %v68, %v297
  %v299 = vpop.f32.mrb[0].mxu0
  %v300 = vadd.f32 %v64, %v299
  %v301 = vpop.f32.mrb[0].mxu0
  %v302 = vadd.f32 %v68, %v301
  %303 = vmatprep.mubr.bf16.mxu0 0
  %304 = vmatmul.mubr.bf16.gmra.mrb[0].mxu0 %v26
  %v305 = vpop.f32.mrb[0].mxu0
  %v306 = vadd.f32 %v64, %v305
  %v307 = vpop.f32.mrb[0].mxu0
  %v308 = vadd.f32 %v68, %v307
  %v309 = vpop.f32.mrb[0].mxu0
  %v310 = vadd.f32 %v64, %v309
  %v311 = vpop.f32.mrb[0].mxu0
  %v312 = vadd.f32 %v68, %v311
  %313 = vdwg.mxu0
  %314 = vmatprep.subr.bf16.mxu0 %v180
  %315 = vmatpush1.bf16.msra.mxu0 %v179
  %316 = vmatprep.subr.bf16.mxu0 %v184
  %317 = vmatpush1.bf16.msra.mxu0 %v183
  %318 = vmatprep.subr.bf16.mxu0 %v188
  %319 = vmatpush1.bf16.msra.mxu0 %v187
  %320 = vmatprep.subr.bf16.mxu0 %v192
  %321 = vmatpush1.bf16.msra.mxu0 %v191
  %322 = vmatprep.subr.bf16.mxu0 %v196
  %323 = vmatpush1.bf16.msra.mxu0 %v195
  %324 = vmatprep.subr.bf16.mxu0 %v200
  %325 = vmatpush1.bf16.msra.mxu0 %v199
  %326 = vmatprep.subr.bf16.mxu0 %v204
  %327 = vmatpush1.bf16.msra.mxu0 %v203
  %328 = vmatprep.subr.bf16.mxu0 %v208
  %329 = vmatpush1.bf16.msra.mxu0 %v207
  %330 = vmatprep.subr.bf16.mxu0 0
  %331 = vmatpush1.bf16.msra.mxu0 0
  %332 = vmatprep.subr.bf16.mxu0 0
  %333 = vmatpush1.bf16.msra.mxu0 0
  %334 = vmatprep.subr.bf16.mxu0 0
  %335 = vmatpush1.bf16.msra.mxu0 0
  %336 = vmatprep.subr.bf16.mxu0 0
  %337 = vmatpush1.bf16.msra.mxu0 0
  %338 = vmatprep.subr.bf16.mxu0 0
  %339 = vmatpush1.bf16.msra.mxu0 0
  %340 = vmatprep.subr.bf16.mxu0 0
  %341 = vmatpush1.bf16.msra.mxu0 0
  %342 = vmatprep.subr.bf16.mxu0 0
  %343 = vmatpush1.bf16.msra.mxu0 0
  %344 = vmatprep.subr.bf16.mxu0 0
  %345 = vmatpush1.bf16.msra.mxu0 0
  %346 = vmatprep.mubr.bf16.mxu0 0
  %347 = vmatmul.mubr.bf16.gmra.mrb[0].mxu0 %v23
  %v348 = vpop.f32.mrb[0].mxu0
  %v349 = vadd.f32 %v72, %v348
  %v350 = vpop.f32.mrb[0].mxu0
  %v351 = vadd.f32 %v76, %v350
  %v352 = vpop.f32.mrb[0].mxu0
  %v353 = vadd.f32 %v72, %v352
  %v354 = vpop.f32.mrb[0].mxu0
  %v355 = vadd.f32 %v76, %v354
  %356 = vmatprep.mubr.bf16.mxu0 0
  %357 = vmatmul.mubr.bf16.gmra.mrb[0].mxu0 %v24
  %v358 = vpop.f32.mrb[0].mxu0
  %v359 = vadd.f32 %v72, %v358
  %v360 = vpop.f32.mrb[0].mxu0
  %v361 = vadd.f32 %v76, %v360
  %v362 = vpop.f32.mrb[0].mxu0
  %v363 = vadd.f32 %v72, %v362
  %v364 = vpop.f32.mrb[0].mxu0
  %v365 = vadd.f32 %v76, %v364
  %366 = vmatprep.mubr.bf16.mxu0 0
  %367 = vmatmul.mubr.bf16.gmra.mrb[0].mxu0 %v25
  %v368 = vpop.f32.mrb[0].mxu0
  %v369 = vadd.f32 %v72, %v368
  %v370 = vpop.f32.mrb[0].mxu0
  %v371 = vadd.f32 %v76, %v370
  %v372 = vpop.f32.mrb[0].mxu0
  %v373 = vadd.f32 %v72, %v372
  %v374 = vpop.f32.mrb[0].mxu0
  %v375 = vadd.f32 %v76, %v374
  %376 = vmatprep.mubr.bf16.mxu0 0
  %377 = vmatmul.mubr.bf16.gmra.mrb[0].mxu0 %v26
  %v378 = vpop.f32.mrb[0].mxu0
  %v379 = vadd.f32 %v72, %v378
  %v380 = vpop.f32.mrb[0].mxu0
  %v381 = vadd.f32 %v76, %v380
  %v382 = vpop.f32.mrb[0].mxu0
  %v383 = vadd.f32 %v72, %v382
  %v384 = vpop.f32.mrb[0].mxu0
  %v385 = vadd.f32 %v76, %v384
  %386 = vdwg.mxu0
  %387 = vst [vmem:[%s3] sm:$0xff] %v276
  %388 = vst [vmem:[%s3 + $0x8] sm:$0xff] %v278
  %389 = vst [vmem:[%s3 + $0x10] sm:$0xff] %v349
  %390 = vst [vmem:[%s3 + $0x18] sm:$0xff] %v351
  %391 = vst [vmem:[%s3 + $0x20] sm:$0xff] %v280
  %392 = vst [vmem:[%s3 + $0x28] sm:$0xff] %v282
  %393 = vst [vmem:[%s3 + $0x30] sm:$0xff] %v353
  %394 = vst [vmem:[%s3 + $0x38] sm:$0xff] %v355
  %395 = vst [vmem:[%s3 + $0x40] sm:$0xff] %v286
  %396 = vst [vmem:[%s3 + $0x48] sm:$0xff] %v288
  %397 = vst [vmem:[%s3 + $0x50] sm:$0xff] %v359
  %398 = vst [vmem:[%s3 + $0x58] sm:$0xff] %v361
  %399 = vst [vmem:[%s3 + $0x60] sm:$0xff] %v290
  %400 = vst [vmem:[%s3 + $0x68] sm:$0xff] %v292
  %401 = vst [vmem:[%s3 + $0x70] sm:$0xff] %v363
  %402 = vst [vmem:[%s3 + $0x78] sm:$0xff] %v365
  %403 = vst [vmem:[%s3 + $0x80] sm:$0xff] %v296
  %404 = vst [vmem:[%s3 + $0x88] sm:$0xff] %v298
  %405 = vst [vmem:[%s3 + $0x90] sm:$0xff] %v369
  %406 = vst [vmem:[%s3 + $0x98] sm:$0xff] %v371
  %407 = vst [vmem:[%s3 + $0xa0] sm:$0xff] %v300
  %408 = vst [vmem:[%s3 + $0xa8] sm:$0xff] %v302
  %409 = vst [vmem:[%s3 + $0xb0] sm:$0xff] %v373
  %410 = vst [vmem:[%s3 + $0xb8] sm:$0xff] %v375
  %411 = vst [vmem:[%s3 + $0xc0] sm:$0xff] %v306
  %412 = vst [vmem:[%s3 + $0xc8] sm:$0xff] %v308
  %413 = vst [vmem:[%s3 + $0xd0] sm:$0xff] %v379
  %414 = vst [vmem:[%s3 + $0xd8] sm:$0xff] %v381
  %415 = vst [vmem:[%s3 + $0xe0] sm:$0xff] %v310
  %416 = vst [vmem:[%s3 + $0xe8] sm:$0xff] %v312
  %417 = vst [vmem:[%s3 + $0xf0] sm:$0xff] %v383
  %418 = vst [vmem:[%s3 + $0xf8] sm:$0xff] %v385
  // Predicated region
  $region14: #{_forward_core.3} parent=0 // pred_check
    _
  $region15: #{_forward_core.3} parent=0 // pred_check_branch
    %420 = sbr.rel (0) target = $region17
  $region16: #{_forward_core.3} parent=0 // pred_region
    _
  $region17: #{_forward_core.3} parent=0 // pred_fallthru
    _
  // Predicated region
  $region18: #{_forward_core.3} parent=0 // pred_check
    _
  $region19: #{_forward_core.3} parent=0 // pred_check_branch
    %422 = sbr.rel (0) target = $region21
  $region20: #{_forward_core.3} parent=0 // pred_region
    _
  $region21: #{_forward_core.3} parent=0 // pred_fallthru
    _

// kernel: _forward_core.4
$region0: #{_forward_core.4}
  #allocation0 [shape = 'u32[]', space=smem, size = 0x4, offset = 0x4, fixed_abs, tag = 'smem constant byte address 0x4 - core index']
  #allocation1 [shape = 'u32[144,128]{1,0:T(1,128)}', space=vmem, size = 0x12000, scoped, tag = 'internal scratch']
  %s0 = inlined_call_operand.vmem [shape: f32[8,8,512], index: 0, kind: input, shape index: {}]
  %s1 = inlined_call_operand.vmem [shape: bf16[2,128,512], index: 1, kind: input, shape index: {}]
  %s2 = inlined_call_operand.vmem [shape: bf16[2,128,512], index: 2, kind: input, shape index: {}]
  %s3 = inlined_call_operand.vmem [shape: f32[2,1,512], index: 3, kind: input, shape index: {}]
  %s4 = inlined_call_operand.vmem [shape: f32[2,8,128], index: 4, kind: output, shape index: {0}]
  %s5 = inlined_call_operand.vmem [shape: f32[2,8,128], index: 5, kind: output, shape index: {1}]
  %6 = xla_tuple %s4, %s5
  %s7 = sld [smem:[#allocation0]]
  $region61: #{_forward_core.4} parent=0
    _
  %s9 = ssub.s32 1, %s7
  %s10 = scalar_select 0, %s9, %s7
  loop: start=0, step=1, limit=10
  $region2: #{_forward_core.4} parent=0 // loop_pre_header
    _
  $region3: #{_forward_core.4} parent=0 // loop_header
    %s12 = sphi 0, %s16
    %p13 = scmp.ge.s32.totalorder %s12, 10
    %s22 = sphi 0, %s24
    %s25 = sphi 0, %s22
    %s26 = sphi 0, %s25
    %s42 = sphi 0, %s26
    %s46 = sphi 0, %s46
    %s48 = sphi 0, %s46
    %s49 = sphi 0, %s48
    %s63 = sphi 0, %s49
    %s67 = sphi 0, %s67
    %s69 = sphi 0, %s67
    %s70 = sphi 0, %s69
    %s84 = sphi 0, %s70
    %s88 = sphi 0, %s88
    %s90 = sphi 0, %s88
    %s91 = sphi 0, %s90
    %s105 = sphi 0, %s91
    %s109 = sphi 0, %s109
    %s111 = sphi 0, %s109
    %s112 = sphi 0, %s111
    %s126 = sphi 0, %s112
    %s130 = sphi 0, %s130
    %s132 = sphi 0, %s130
    %s133 = sphi 0, %s132
    %s147 = sphi 0, %s133
  $region4: #{_forward_core.4} parent=0 // loop_header_branch
    %15 = sbr.rel (%p13) target = $region8
  $region5: #{_forward_core.4} parent=0 // loop_body
    %s17 = ssub.s32 %s12, 1
    %s18 = ssub.s32 %s12, 2
    %s19 = sadd.s32 %s12, 1
    %s20 = ssub.s32 %s12, %s19
    %p21 = scmp.eq.s32.totalorder %s20, 0
    %s23 = sadd.s32 %s22, 1
    %s24 = scalar_select %p21, %s22, %s23
    %p27 = pneg %p21
    %p28 = scmp.eq.s32.totalorder %s12, 7
    %p29 = por %p27, %p28
    %p30 = scmp.ne.s32.totalorder %s22, %s25
    %p31 = scmp.eq.s32.totalorder %s12, 0
    %p32 = por %p30, %p31
    %p33 = scmp.ne.s32.totalorder %s22, %s25
    %p34 = scmp.eq.s32.totalorder %s17, 7
    %p35 = por %p33, %p34
    %p36 = scmp.ne.s32.totalorder %s25, %s26
    %p37 = scmp.eq.s32.totalorder %s17, 0
    %p38 = por %p36, %p37
    %p39 = scmp.ne.s32.totalorder %s25, %s26
    %p40 = scmp.eq.s32.totalorder %s18, 7
    %p41 = por %p39, %p40
    %p43 = scmp.ne.s32.totalorder %s26, %s42
    %p44 = scmp.eq.s32.totalorder %s18, 0
    %p45 = por %p43, %p44
    %s47 = sadd.s32 %s46, 1
    %p50 = scmp.eq.s32.totalorder %s12, 7
    %p51 = scmp.ne.s32.totalorder %s46, %s48
    %p52 = scmp.eq.s32.totalorder %s12, 0
    %p53 = por %p51, %p52
    %p54 = scmp.ne.s32.totalorder %s46, %s48
    %p55 = scmp.eq.s32.totalorder %s17, 7
    %p56 = por %p54, %p55
    %p57 = scmp.ne.s32.totalorder %s48, %s49
    %p58 = scmp.eq.s32.totalorder %s17, 0
    %p59 = por %p57, %p58
    %p60 = scmp.ne.s32.totalorder %s48, %s49
    %p61 = scmp.eq.s32.totalorder %s18, 7
    %p62 = por %p60, %p61
    %p64 = scmp.ne.s32.totalorder %s49, %s63
    %p65 = scmp.eq.s32.totalorder %s18, 0
    %p66 = por %p64, %p65
    %s68 = sadd.s32 %s67, 1
    %p71 = scmp.eq.s32.totalorder %s12, 7
    %p72 = scmp.ne.s32.totalorder %s67, %s69
    %p73 = scmp.eq.s32.totalorder %s12, 0
    %p74 = por %p72, %p73
    %p75 = scmp.ne.s32.totalorder %s67, %s69
    %p76 = scmp.eq.s32.totalorder %s17, 7
    %p77 = por %p75, %p76
    %p78 = scmp.ne.s32.totalorder %s69, %s70
    %p79 = scmp.eq.s32.totalorder %s17, 0
    %p80 = por %p78, %p79
    %p81 = scmp.ne.s32.totalorder %s69, %s70
    %p82 = scmp.eq.s32.totalorder %s18, 7
    %p83 = por %p81, %p82
    %p85 = scmp.ne.s32.totalorder %s70, %s84
    %p86 = scmp.eq.s32.totalorder %s18, 0
    %p87 = por %p85, %p86
    %s89 = sadd.s32 %s88, 1
    %p92 = scmp.eq.s32.totalorder %s12, 7
    %p93 = scmp.ne.s32.totalorder %s88, %s90
    %p94 = scmp.eq.s32.totalorder %s12, 0
    %p95 = por %p93, %p94
    %p96 = scmp.ne.s32.totalorder %s88, %s90
    %p97 = scmp.eq.s32.totalorder %s17, 7
    %p98 = por %p96, %p97
    %p99 = scmp.ne.s32.totalorder %s90, %s91
    %p100 = scmp.eq.s32.totalorder %s17, 0
    %p101 = por %p99, %p100
    %p102 = scmp.ne.s32.totalorder %s90, %s91
    %p103 = scmp.eq.s32.totalorder %s18, 7
    %p104 = por %p102, %p103
    %p106 = scmp.ne.s32.totalorder %s91, %s105
    %p107 = scmp.eq.s32.totalorder %s18, 0
    %p108 = por %p106, %p107
    %s110 = sadd.s32 %s109, 1
    %p113 = scmp.eq.s32.totalorder %s12, 7
    %p114 = scmp.ne.s32.totalorder %s109, %s111
    %p115 = scmp.eq.s32.totalorder %s12, 0
    %p116 = por %p114, %p115
    %p117 = scmp.ne.s32.totalorder %s109, %s111
    %p118 = scmp.eq.s32.totalorder %s17, 7
    %p119 = por %p117, %p118
    %p120 = scmp.ne.s32.totalorder %s111, %s112
    %p121 = scmp.eq.s32.totalorder %s17, 0
    %p122 = por %p120, %p121
    %p123 = scmp.ne.s32.totalorder %s111, %s112
    %p124 = scmp.eq.s32.totalorder %s18, 7
    %p125 = por %p123, %p124
    %p127 = scmp.ne.s32.totalorder %s112, %s126
    %p128 = scmp.eq.s32.totalorder %s18, 0
    %p129 = por %p127, %p128
    %s131 = sadd.s32 %s130, 1
    %p134 = scmp.eq.s32.totalorder %s12, 7
    %p135 = scmp.ne.s32.totalorder %s130, %s132
    %p136 = scmp.eq.s32.totalorder %s12, 0
    %p137 = por %p135, %p136
    %p138 = scmp.ne.s32.totalorder %s130, %s132
    %p139 = scmp.eq.s32.totalorder %s17, 7
    %p140 = por %p138, %p139
    %p141 = scmp.ne.s32.totalorder %s132, %s133
    %p142 = scmp.eq.s32.totalorder %s17, 0
    %p143 = por %p141, %p142
    %p144 = scmp.ne.s32.totalorder %s132, %s133
    %p145 = scmp.eq.s32.totalorder %s18, 7
    %p146 = por %p144, %p145
    %p148 = scmp.ne.s32.totalorder %s133, %s147
    %p149 = scmp.eq.s32.totalorder %s18, 0
    %p150 = por %p148, %p149
    %p151 = scmp.le.s32.totalorder 1, %s12
    %p152 = scmp.lt.s32.totalorder %s12, 9
    %p153 = pnand %p151, %p152
    %p154 = pneg %p153
    // Predicated region
    $region9: #{_forward_core.4} parent=5 // pred_check
      _
    $region10: #{_forward_core.4} parent=5 // pred_check_branch
      %156 = sbr.rel (%p153) target = $region12
    $region11: #{_forward_core.4} parent=5 // pred_region
      %s157 = ssub.s32 %s12, 1
      // Predicated region
      $region13: #{_forward_core.4} parent=11 // pred_check
        %p158 = pneg %p59
      $region14: #{_forward_core.4} parent=11 // pred_check_branch
        %160 = sbr.rel (%p158) target = $region16
      $region15: #{_forward_core.4} parent=11 // pred_region
        _
      $region16: #{_forward_core.4} parent=11 // pred_fallthru
        _
      // Predicated region
      $region17: #{_forward_core.4} parent=11 // pred_check
        %p161 = pneg %p80
      $region18: #{_forward_core.4} parent=11 // pred_check_branch
        %163 = sbr.rel (%p161) target = $region20
      $region19: #{_forward_core.4} parent=11 // pred_region
        _
      $region20: #{_forward_core.4} parent=11 // pred_fallthru
        _
      // Predicated region
      $region21: #{_forward_core.4} parent=11 // pred_check
        %p164 = pneg %p101
      $region22: #{_forward_core.4} parent=11 // pred_check_branch
        %166 = sbr.rel (%p164) target = $region24
      $region23: #{_forward_core.4} parent=11 // pred_region
        _
      $region24: #{_forward_core.4} parent=11 // pred_fallthru
        _
    $region12: #{_forward_core.4} parent=5 // pred_fallthru
      _
    %p167 = scmp.lt.s32.totalorder %s12, 8
    // Predicated region
    $region25: #{_forward_core.4} parent=5 // pred_check
      %p168 = pneg %p167
    $region26: #{_forward_core.4} parent=5 // pred_check_branch
      %170 = sbr.rel (%p168) target = $region28
    $region27: #{_forward_core.4} parent=5 // pred_region
      // Predicated region
      $region29: #{_forward_core.4} parent=27 // pred_check
        %p171 = pneg %p32
      $region30: #{_forward_core.4} parent=27 // pred_check_branch
        %173 = sbr.rel (%p171) target = $region32
      $region31: #{_forward_core.4} parent=27 // pred_region
        %p174 = scmp.lt.s32.totalorder %s12, 7
        %s175 = scalar_select %p174, %s12, 7
        %s176 = smul.addr %s175, 4
        %s177 = smul.addr %s176, 8
        %s178 = scalar_lea.vmem %s0, %s177
      $region32: #{_forward_core.4} parent=27 // pred_fallthru
        _
    $region28: #{_forward_core.4} parent=5 // pred_fallthru
      _
    %p179 = scmp.le.s32.totalorder 1, %s12
    %p180 = scmp.lt.s32.totalorder %s12, 9
    %p181 = pnand %p179, %p180
    %p182 = pneg %p181
    // Predicated region
    $region33: #{_forward_core.4} parent=5 // pred_check
      _
    $region34: #{_forward_core.4} parent=5 // pred_check_branch
      %184 = sbr.rel (%p181) target = $region36
    $region35: #{_forward_core.4} parent=5 // pred_region
      %s185 = ssub.s32 %s12, 1
      %p186 = scmp.lt.s32.totalorder %s17, 7
      %s187 = scalar_select %p186, %s17, 7
      %s188 = smul.addr %s187, 4
      %s189 = smul.addr %s188, 8
      %s190 = scalar_lea.vmem %s0, %s189
      %p191 = pneg %p38
      %p192 = pneg %p35
      %p193 = pneg %p59
      %p194 = pneg %p56
      %p195 = pneg %p80
      %p196 = pneg %p77
      %p197 = pneg %p101
      %p198 = pneg %p98
      %p199 = pneg %p122
      %p200 = pneg %p119
      %p201 = pneg %p143
      %p202 = pneg %p140
      %p203 = scmp.lt.s32.totalorder %s17, 7
      %s204 = scalar_select %p203, %s17, 7
      %s205 = smul.addr %s204, 4
      %s206 = smul.addr %s205, 8
      %s207 = scalar_lea.vmem %s0, %s206
      %p209 = scmp.eq.s32.totalorder %s17, 0
      // Predicated region
      $region37: #{_forward_core.4} parent=35 // pred_check
        %p210 = pneg %p209
      $region38: #{_forward_core.4} parent=35 // pred_check_branch
        %212 = sbr.rel (%p210) target = $region40
      $region39: #{_forward_core.4} parent=35 // pred_region
        %213 = vst [vmem:[%s4] sm:$0xff] 0.0
        %214 = vst [vmem:[%s4 + $0x8] sm:$0xff] 0.0
        %215 = vst [vmem:[%s5] sm:$0xff] 0.0
        %216 = vst [vmem:[%s5 + $0x8] sm:$0xff] 0.0
      $region40: #{_forward_core.4} parent=35 // pred_fallthru
        _
      %v217 = vld [vmem:[%s4] sm:$0xff]
      %v218 = vpack.c.bf16 %v217, %v217
      %v219 = vld [vmem:[%s2] sm:$0xff]
      %v220 = vld [vmem:[%s2 + $0x8] sm:$0xff]
      %v221 = vld [vmem:[%s2 + $0x10] sm:$0xff]
      %v222 = vld [vmem:[%s2 + $0x18] sm:$0xff]
      %v223 = vld [vmem:[%s2 + $0x20] sm:$0xff]
      %v224 = vld [vmem:[%s2 + $0x28] sm:$0xff]
      %v225 = vld [vmem:[%s2 + $0x30] sm:$0xff]
      %v226 = vld [vmem:[%s2 + $0x38] sm:$0xff]
      %v227 = vld [vmem:[%s2 + $0x40] sm:$0xff]
      %v228 = vld [vmem:[%s2 + $0x48] sm:$0xff]
      %v229 = vld [vmem:[%s2 + $0x50] sm:$0xff]
      %v230 = vld [vmem:[%s2 + $0x58] sm:$0xff]
      %v231 = vld [vmem:[%s2 + $0x60] sm:$0xff]
      %v232 = vld [vmem:[%s2 + $0x68] sm:$0xff]
      %v233 = vld [vmem:[%s2 + $0x70] sm:$0xff]
      %v234 = vld [vmem:[%s2 + $0x78] sm:$0xff]
      %v235 = vld [vmem:[%s2 + $0x80] sm:$0xff]
      %v236 = vld [vmem:[%s2 + $0x88] sm:$0xff]
      %v237 = vld [vmem:[%s2 + $0x90] sm:$0xff]
      %v238 = vld [vmem:[%s2 + $0x98] sm:$0xff]
      %v239 = vld [vmem:[%s2 + $0xa0] sm:$0xff]
      %v240 = vld [vmem:[%s2 + $0xa8] sm:$0xff]
      %v241 = vld [vmem:[%s2 + $0xb0] sm:$0xff]
      %v242 = vld [vmem:[%s2 + $0xb8] sm:$0xff]
      %v243 = vld [vmem:[%s2 + $0xc0] sm:$0xff]
      %v244 = vld [vmem:[%s2 + $0xc8] sm:$0xff]
      %v245 = vld [vmem:[%s2 + $0xd0] sm:$0xff]
      %v246 = vld [vmem:[%s2 + $0xd8] sm:$0xff]
      %v247 = vld [vmem:[%s2 + $0xe0] sm:$0xff]
      %v248 = vld [vmem:[%s2 + $0xe8] sm:$0xff]
      %v249 = vld [vmem:[%s2 + $0xf0] sm:$0xff]
      %v250 = vld [vmem:[%s2 + $0xf8] sm:$0xff]
      %v283 = vunpack.c.l.b16 %v219
      %v284 = vunpack.c.h.b16 %v219
      %v285 = vunpack.c.l.b16 %v220
      %v286 = vunpack.c.h.b16 %v220
      %v287 = vunpack.c.l.b16 %v221
      %v288 = vunpack.c.h.b16 %v221
      %v289 = vunpack.c.l.b16 %v222
      %v290 = vunpack.c.h.b16 %v222
      %v291 = vunpack.c.l.b16 %v223
      %v292 = vunpack.c.h.b16 %v223
      %v293 = vunpack.c.l.b16 %v224
      %v294 = vunpack.c.h.b16 %v224
      %v295 = vunpack.c.l.b16 %v225
      %v296 = vunpack.c.h.b16 %v225
      %v297 = vunpack.c.l.b16 %v226
      %v298 = vunpack.c.h.b16 %v226
      %v299 = vunpack.c.l.b16 %v227
      %v300 = vunpack.c.h.b16 %v227
      %v301 = vunpack.c.l.b16 %v228
      %v302 = vunpack.c.h.b16 %v228
      %v303 = vunpack.c.l.b16 %v229
      %v304 = vunpack.c.h.b16 %v229
      %v305 = vunpack.c.l.b16 %v230
      %v306 = vunpack.c.h.b16 %v230
      %v307 = vunpack.c.l.b16 %v231
      %v308 = vunpack.c.h.b16 %v231
      %v309 = vunpack.c.l.b16 %v232
      %v310 = vunpack.c.h.b16 %v232
      %v311 = vunpack.c.l.b16 %v233
      %v312 = vunpack.c.h.b16 %v233
      %v313 = vunpack.c.l.b16 %v234
      %v314 = vunpack.c.h.b16 %v234
      %v315 = vunpack.c.l.b16 %v235
      %v316 = vunpack.c.h.b16 %v235
      %v317 = vunpack.c.l.b16 %v236
      %v318 = vunpack.c.h.b16 %v236
      %v319 = vunpack.c.l.b16 %v237
      %v320 = vunpack.c.h.b16 %v237
      %v321 = vunpack.c.l.b16 %v238
      %v322 = vunpack.c.h.b16 %v238
      %v323 = vunpack.c.l.b16 %v239
      %v324 = vunpack.c.h.b16 %v239
      %v325 = vunpack.c.l.b16 %v240
      %v326 = vunpack.c.h.b16 %v240
      %v327 = vunpack.c.l.b16 %v241
      %v328 = vunpack.c.h.b16 %v241
      %v329 = vunpack.c.l.b16 %v242
      %v330 = vunpack.c.h.b16 %v242
      %v331 = vunpack.c.l.b16 %v243
      %v332 = vunpack.c.h.b16 %v243
      %v333 = vunpack.c.l.b16 %v244
      %v334 = vunpack.c.h.b16 %v244
      %v335 = vunpack.c.l.b16 %v245
      %v336 = vunpack.c.h.b16 %v245
      %v337 = vunpack.c.l.b16 %v246
      %v338 = vunpack.c.h.b16 %v246
      %v339 = vunpack.c.l.b16 %v247
      %v340 = vunpack.c.h.b16 %v247
      %v341 = vunpack.c.l.b16 %v248
      %v342 = vunpack.c.h.b16 %v248
      %v343 = vunpack.c.l.b16 %v249
      %v344 = vunpack.c.h.b16 %v249
      %v345 = vunpack.c.l.b16 %v250
      %v346 = vunpack.c.h.b16 %v250
      %v347 = vpack.c.b16 %v287, %v283
      %v348 = vpack.c.b16 %v288, %v284
      %v349 = vpack.c.b16 %v289, %v285
      %v350 = vpack.c.b16 %v290, %v286
      %v351 = vpack.c.b16 %v295, %v291
      %v352 = vpack.c.b16 %v296, %v292
      %v353 = vpack.c.b16 %v297, %v293
      %v354 = vpack.c.b16 %v298, %v294
      %v355 = vpack.c.b16 %v303, %v299
      %v356 = vpack.c.b16 %v304, %v300
      %v357 = vpack.c.b16 %v305, %v301
      %v358 = vpack.c.b16 %v306, %v302
      %v359 = vpack.c.b16 %v311, %v307
      %v360 = vpack.c.b16 %v312, %v308
      %v361 = vpack.c.b16 %v313, %v309
      %v362 = vpack.c.b16 %v314, %v310
      %v363 = vpack.c.b16 %v319, %v315
      %v364 = vpack.c.b16 %v320, %v316
      %v365 = vpack.c.b16 %v321, %v317
      %v366 = vpack.c.b16 %v322, %v318
      %v367 = vpack.c.b16 %v327, %v323
      %v368 = vpack.c.b16 %v328, %v324
      %v369 = vpack.c.b16 %v329, %v325
      %v370 = vpack.c.b16 %v330, %v326
      %v371 = vpack.c.b16 %v335, %v331
      %v372 = vpack.c.b16 %v336, %v332
      %v373 = vpack.c.b16 %v337, %v333
      %v374 = vpack.c.b16 %v338, %v334
      %v375 = vpack.c.b16 %v343, %v339
      %v376 = vpack.c.b16 %v344, %v340
      %v377 = vpack.c.b16 %v345, %v341
      %v378 = vpack.c.b16 %v346, %v342
      %411 = vmatprep.subr.bf16.mxu0 %v348
      %412 = vmatpush1.bf16.msra.mxu0 %v347
      %413 = vmatprep.subr.bf16.mxu0 %v352
      %414 = vmatpush1.bf16.msra.mxu0 %v351
      %415 = vmatprep.subr.bf16.mxu0 %v356
      %416 = vmatpush1.bf16.msra.mxu0 %v355
      %417 = vmatprep.subr.bf16.mxu0 %v360
      %418 = vmatpush1.bf16.msra.mxu0 %v359
      %419 = vmatprep.subr.bf16.mxu0 %v364
      %420 = vmatpush1.bf16.msra.mxu0 %v363
      %421 = vmatprep.subr.bf16.mxu0 %v368
      %422 = vmatpush1.bf16.msra.mxu0 %v367
      %423 = vmatprep.subr.bf16.mxu0 %v372
      %424 = vmatpush1.bf16.msra.mxu0 %v371
      %425 = vmatprep.subr.bf16.mxu0 %v376
      %426 = vmatpush1.bf16.msra.mxu0 %v375
      %427 = vmatprep.subr.bf16.mxu0 0
      %428 = vmatpush1.bf16.msra.mxu0 0
      %429 = vmatprep.subr.bf16.mxu0 0
      %430 = vmatpush1.bf16.msra.mxu0 0
      %431 = vmatprep.subr.bf16.mxu0 0
      %432 = vmatpush1.bf16.msra.mxu0 0
      %433 = vmatprep.subr.bf16.mxu0 0
      %434 = vmatpush1.bf16.msra.mxu0 0
      %435 = vmatprep.subr.bf16.mxu0 0
      %436 = vmatpush1.bf16.msra.mxu0 0
      %437 = vmatprep.subr.bf16.mxu0 0
      %438 = vmatpush1.bf16.msra.mxu0 0
      %439 = vmatprep.subr.bf16.mxu0 0
      %440 = vmatpush1.bf16.msra.mxu0 0
      %441 = vmatprep.subr.bf16.mxu0 0
      %442 = vmatpush1.bf16.msra.mxu0 0
      %443 = vmatprep.mubr.bf16.mxu0 0
      %444 = vmatmul.mubr.bf16.gmra.mrb[0].mxu0 %v218
      %v445 = vpop.f32.mrb[0].mxu0
      %v446 = vadd.f32 0.0, %v445
      %v447 = vpop.f32.mrb[0].mxu0
      %v448 = vadd.f32 0.0, %v447
      %v449 = vpop.f32.mrb[0].mxu0
      %v450 = vpop.f32.mrb[0].mxu0
      %451 = vdwg.mxu0
      %452 = vmatprep.subr.bf16.mxu0 %v350
      %453 = vmatpush1.bf16.msra.mxu0 %v349
      %454 = vmatprep.subr.bf16.mxu0 %v354
      %455 = vmatpush1.bf16.msra.mxu0 %v353
      %456 = vmatprep.subr.bf16.mxu0 %v358
      %457 = vmatpush1.bf16.msra.mxu0 %v357
      %458 = vmatprep.subr.bf16.mxu0 %v362
      %459 = vmatpush1.bf16.msra.mxu0 %v361
      %460 = vmatprep.subr.bf16.mxu0 %v366
      %461 = vmatpush1.bf16.msra.mxu0 %v365
      %462 = vmatprep.subr.bf16.mxu0 %v370
      %463 = vmatpush1.bf16.msra.mxu0 %v369
      %464 = vmatprep.subr.bf16.mxu0 %v374
      %465 = vmatpush1.bf16.msra.mxu0 %v373
      %466 = vmatprep.subr.bf16.mxu0 %v378
      %467 = vmatpush1.bf16.msra.mxu0 %v377
      %468 = vmatprep.subr.bf16.mxu0 0
      %469 = vmatpush1.bf16.msra.mxu0 0
      %470 = vmatprep.subr.bf16.mxu0 0
      %471 = vmatpush1.bf16.msra.mxu0 0
      %472 = vmatprep.subr.bf16.mxu0 0
      %473 = vmatpush1.bf16.msra.mxu0 0
      %474 = vmatprep.subr.bf16.mxu0 0
      %475 = vmatpush1.bf16.msra.mxu0 0
      %476 = vmatprep.subr.bf16.mxu0 0
      %477 = vmatpush1.bf16.msra.mxu0 0
      %478 = vmatprep.subr.bf16.mxu0 0
      %479 = vmatpush1.bf16.msra.mxu0 0
      %480 = vmatprep.subr.bf16.mxu0 0
      %481 = vmatpush1.bf16.msra.mxu0 0
      %482 = vmatprep.subr.bf16.mxu0 0
      %483 = vmatpush1.bf16.msra.mxu0 0
      %484 = vmatprep.mubr.bf16.mxu0 0
      %485 = vmatmul.mubr.bf16.gmra.mrb[0].mxu0 %v218
      %v486 = vpop.f32.mrb[0].mxu0
      %v487 = vadd.f32 0.0, %v486
      %v488 = vpop.f32.mrb[0].mxu0
      %v489 = vadd.f32 0.0, %v488
      %v490 = vpop.f32.mrb[0].mxu0
      %v491 = vpop.f32.mrb[0].mxu0
      %492 = vdwg.mxu0
      %v493 = vld [vmem:[%s207] sm:$0xff]
      %v494 = vld [vmem:[%s207 + $0x8] sm:$0xff]
      %v495 = vld [vmem:[%s207 + $0x10] sm:$0xff]
      %v496 = vld [vmem:[%s207 + $0x18] sm:$0xff]
      %v497 = vadd.f32 %v493, %v446
      %v498 = vadd.f32 %v494, %v448
      %v499 = vadd.f32 %v495, %v487
      %v500 = vadd.f32 %v496, %v489
      %v501 = vld [vmem:[%s5] sm:$0xff]
      %v502 = vxor.u32 %v497, 2147483648
      %v503 = vmul.f32 %v502, 1.442695
      %v504 = vpow.pop %v503
      %v505 = vadd.f32 %v504, 1.0
      %v506 = vrcp.pop %v505
      %v507 = vmul.f32 1.0, %v506
      %v508 = vxor.u32 %v498, 2147483648
      %v509 = vmul.f32 %v508, 1.442695
      %v510 = vpow.pop %v509
      %v511 = vadd.f32 %v510, 1.0
      %v512 = vrcp.pop %v511
      %v513 = vmul.f32 1.0, %v512
      %v514 = vtanh.pop %v499
      %v515 = vxor.u32 %v500, 2147483648
      %v516 = vmul.f32 %v515, 1.442695
      %v517 = vpow.pop %v516
      %v518 = vadd.f32 %v517, 1.0
      %v519 = vrcp.pop %v518
      %v520 = vmul.f32 1.0, %v519
      %v521 = vmul.f32 %v513, %v501
      %v522 = vmul.f32 %v507, %v514
      %v523 = vadd.f32 %v521, %v522
      %v524 = vtanh.pop %v523
      %v525 = vmul.f32 %v520, %v524
      %526 = vst [vmem:[%s4] sm:$0xff] %v525
      %527 = vst [vmem:[%s5] sm:$0xff] %v523
      %s528 = scalar_lea.vmem %s4, 8
      %v529 = vld [vmem:[%s528] sm:$0xff]
      %v530 = vpack.c.bf16 %v529, %v529
      %s531 = scalar_lea.vmem %s2, 256
      %v532 = vld [vmem:[%s531] sm:$0xff]
      %v533 = vld [vmem:[%s531 + $0x8] sm:$0xff]
      %v534 = vld [vmem:[%s531 + $0x10] sm:$0xff]
      %v535 = vld [vmem:[%s531 + $0x18] sm:$0xff]
      %v536 = vld [vmem:[%s531 + $0x20] sm:$0xff]
      %v537 = vld [vmem:[%s531 + $0x28] sm:$0xff]
      %v538 = vld [vmem:[%s531 + $0x30] sm:$0xff]
      %v539 = vld [vmem:[%s531 + $0x38] sm:$0xff]
      %v540 = vld [vmem:[%s531 + $0x40] sm:$0xff]
      %v541 = vld [vmem:[%s531 + $0x48] sm:$0xff]
      %v542 = vld [vmem:[%s531 + $0x50] sm:$0xff]
      %v543 = vld [vmem:[%s531 + $0x58] sm:$0xff]
      %v544 = vld [vmem:[%s531 + $0x60] sm:$0xff]
      %v545 = vld [vmem:[%s531 + $0x68] sm:$0xff]
      %v546 = vld [vmem:[%s531 + $0x70] sm:$0xff]
      %v547 = vld [vmem:[%s531 + $0x78] sm:$0xff]
      %v548 = vld [vmem:[%s531 + $0x80] sm:$0xff]
      %v549 = vld [vmem:[%s531 + $0x88] sm:$0xff]
      %v550 = vld [vmem:[%s531 + $0x90] sm:$0xff]
      %v551 = vld [vmem:[%s531 + $0x98] sm:$0xff]
      %v552 = vld [vmem:[%s531 + $0xa0] sm:$0xff]
      %v553 = vld [vmem:[%s531 + $0xa8] sm:$0xff]
      %v554 = vld [vmem:[%s531 + $0xb0] sm:$0xff]
      %v555 = vld [vmem:[%s531 + $0xb8] sm:$0xff]
      %v556 = vld [vmem:[%s531 + $0xc0] sm:$0xff]
      %v557 = vld [vmem:[%s531 + $0xc8] sm:$0xff]
      %v558 = vld [vmem:[%s531 + $0xd0] sm:$0xff]
      %v559 = vld [vmem:[%s531 + $0xd8] sm:$0xff]
      %v560 = vld [vmem:[%s531 + $0xe0] sm:$0xff]
      %v561 = vld [vmem:[%s531 + $0xe8] sm:$0xff]
      %v562 = vld [vmem:[%s531 + $0xf0] sm:$0xff]
      %v563 = vld [vmem:[%s531 + $0xf8] sm:$0xff]
      %v596 = vunpack.c.l.b16 %v532
      %v597 = vunpack.c.h.b16 %v532
      %v598 = vunpack.c.l.b16 %v533
      %v599 = vunpack.c.h.b16 %v533
      %v600 = vunpack.c.l.b16 %v534
      %v601 = vunpack.c.h.b16 %v534
      %v602 = vunpack.c.l.b16 %v535
      %v603 = vunpack.c.h.b16 %v535
      %v604 = vunpack.c.l.b16 %v536
      %v605 = vunpack.c.h.b16 %v536
      %v606 = vunpack.c.l.b16 %v537
      %v607 = vunpack.c.h.b16 %v537
      %v608 = vunpack.c.l.b16 %v538
      %v609 = vunpack.c.h.b16 %v538
      %v610 = vunpack.c.l.b16 %v539
      %v611 = vunpack.c.h.b16 %v539
      %v612 = vunpack.c.l.b16 %v540
      %v613 = vunpack.c.h.b16 %v540
      %v614 = vunpack.c.l.b16 %v541
      %v615 = vunpack.c.h.b16 %v541
      %v616 = vunpack.c.l.b16 %v542
      %v617 = vunpack.c.h.b16 %v542
      %v618 = vunpack.c.l.b16 %v543
      %v619 = vunpack.c.h.b16 %v543
      %v620 = vunpack.c.l.b16 %v544
      %v621 = vunpack.c.h.b16 %v544
      %v622 = vunpack.c.l.b16 %v545
      %v623 = vunpack.c.h.b16 %v545
      %v624 = vunpack.c.l.b16 %v546
      %v625 = vunpack.c.h.b16 %v546
      %v626 = vunpack.c.l.b16 %v547
      %v627 = vunpack.c.h.b16 %v547
      %v628 = vunpack.c.l.b16 %v548
      %v629 = vunpack.c.h.b16 %v548
      %v630 = vunpack.c.l.b16 %v549
      %v631 = vunpack.c.h.b16 %v549
      %v632 = vunpack.c.l.b16 %v550
      %v633 = vunpack.c.h.b16 %v550
      %v634 = vunpack.c.l.b16 %v551
      %v635 = vunpack.c.h.b16 %v551
      %v636 = vunpack.c.l.b16 %v552
      %v637 = vunpack.c.h.b16 %v552
      %v638 = vunpack.c.l.b16 %v553
      %v639 = vunpack.c.h.b16 %v553
      %v640 = vunpack.c.l.b16 %v554
      %v641 = vunpack.c.h.b16 %v554
      %v642 = vunpack.c.l.b16 %v555
      %v643 = vunpack.c.h.b16 %v555
      %v644 = vunpack.c.l.b16 %v556
      %v645 = vunpack.c.h.b16 %v556
      %v646 = vunpack.c.l.b16 %v557
      %v647 = vunpack.c.h.b16 %v557
      %v648 = vunpack.c.l.b16 %v558
      %v649 = vunpack.c.h.b16 %v558
      %v650 = vunpack.c.l.b16 %v559
      %v651 = vunpack.c.h.b16 %v559
      %v652 = vunpack.c.l.b16 %v560
      %v653 = vunpack.c.h.b16 %v560
      %v654 = vunpack.c.l.b16 %v561
      %v655 = vunpack.c.h.b16 %v561
      %v656 = vunpack.c.l.b16 %v562
      %v657 = vunpack.c.h.b16 %v562
      %v658 = vunpack.c.l.b16 %v563
      %v659 = vunpack.c.h.b16 %v563
      %v660 = vpack.c.b16 %v600, %v596
      %v661 = vpack.c.b16 %v601, %v597
      %v662 = vpack.c.b16 %v602, %v598
      %v663 = vpack.c.b16 %v603, %v599
      %v664 = vpack.c.b16 %v608, %v604
      %v665 = vpack.c.b16 %v609, %v605
      %v666 = vpack.c.b16 %v610, %v606
      %v667 = vpack.c.b16 %v611, %v607
      %v668 = vpack.c.b16 %v616, %v612
      %v669 = vpack.c.b16 %v617, %v613
      %v670 = vpack.c.b16 %v618, %v614
      %v671 = vpack.c.b16 %v619, %v615
      %v672 = vpack.c.b16 %v624, %v620
      %v673 = vpack.c.b16 %v625, %v621
      %v674 = vpack.c.b16 %v626, %v622
      %v675 = vpack.c.b16 %v627, %v623
      %v676 = vpack.c.b16 %v632, %v628
      %v677 = vpack.c.b16 %v633, %v629
      %v678 = vpack.c.b16 %v634, %v630
      %v679 = vpack.c.b16 %v635, %v631
      %v680 = vpack.c.b16 %v640, %v636
      %v681 = vpack.c.b16 %v641, %v637
      %v682 = vpack.c.b16 %v642, %v638
      %v683 = vpack.c.b16 %v643, %v639
      %v684 = vpack.c.b16 %v648, %v644
      %v685 = vpack.c.b16 %v649, %v645
      %v686 = vpack.c.b16 %v650, %v646
      %v687 = vpack.c.b16 %v651, %v647
      %v688 = vpack.c.b16 %v656, %v652
      %v689 = vpack.c.b16 %v657, %v653
      %v690 = vpack.c.b16 %v658, %v654
      %v691 = vpack.c.b16 %v659, %v655
      %724 = vmatprep.subr.bf16.mxu0 %v661
      %725 = vmatpush1.bf16.msra.mxu0 %v660
      %726 = vmatprep.subr.bf16.mxu0 %v665
      %727 = vmatpush1.bf16.msra.mxu0 %v664
      %728 = vmatprep.subr.bf16.mxu0 %v669
      %729 = vmatpush1.bf16.msra.mxu0 %v668
      %730 = vmatprep.subr.bf16.mxu0 %v673
      %731 = vmatpush1.bf16.msra.mxu0 %v672
      %732 = vmatprep.subr.bf16.mxu0 %v677
      %733 = vmatpush1.bf16.msra.mxu0 %v676
      %734 = vmatprep.subr.bf16.mxu0 %v681
      %735 = vmatpush1.bf16.msra.mxu0 %v680
      %736 = vmatprep.subr.bf16.mxu0 %v685
      %737 = vmatpush1.bf16.msra.mxu0 %v684
      %738 = vmatprep.subr.bf16.mxu0 %v689
      %739 = vmatpush1.bf16.msra.mxu0 %v688
      %740 = vmatprep.subr.bf16.mxu0 0
      %741 = vmatpush1.bf16.msra.mxu0 0
      %742 = vmatprep.subr.bf16.mxu0 0
      %743 = vmatpush1.bf16.msra.mxu0 0
      %744 = vmatprep.subr.bf16.mxu0 0
      %745 = vmatpush1.bf16.msra.mxu0 0
      %746 = vmatprep.subr.bf16.mxu0 0
      %747 = vmatpush1.bf16.msra.mxu0 0
      %748 = vmatprep.subr.bf16.mxu0 0
      %749 = vmatpush1.bf16.msra.mxu0 0
      %750 = vmatprep.subr.bf16.mxu0 0
      %751 = vmatpush1.bf16.msra.mxu0 0
      %752 = vmatprep.subr.bf16.mxu0 0
      %753 = vmatpush1.bf16.msra.mxu0 0
      %754 = vmatprep.subr.bf16.mxu0 0
      %755 = vmatpush1.bf16.msra.mxu0 0
      %756 = vmatprep.mubr.bf16.mxu0 0
      %757 = vmatmul.mubr.bf16.gmra.mrb[0].mxu0 %v530
      %v758 = vpop.f32.mrb[0].mxu0
      %v759 = vadd.f32 0.0, %v758
      %v760 = vpop.f32.mrb[0].mxu0
      %v761 = vadd.f32 0.0, %v760
      %v762 = vpop.f32.mrb[0].mxu0
      %v763 = vpop.f32.mrb[0].mxu0
      %764 = vdwg.mxu0
      %765 = vmatprep.subr.bf16.mxu0 %v663
      %766 = vmatpush1.bf16.msra.mxu0 %v662
      %767 = vmatprep.subr.bf16.mxu0 %v667
      %768 = vmatpush1.bf16.msra.mxu0 %v666
      %769 = vmatprep.subr.bf16.mxu0 %v671
      %770 = vmatpush1.bf16.msra.mxu0 %v670
      %771 = vmatprep.subr.bf16.mxu0 %v675
      %772 = vmatpush1.bf16.msra.mxu0 %v674
      %773 = vmatprep.subr.bf16.mxu0 %v679
      %774 = vmatpush1.bf16.msra.mxu0 %v678
      %775 = vmatprep.subr.bf16.mxu0 %v683
      %776 = vmatpush1.bf16.msra.mxu0 %v682
      %777 = vmatprep.subr.bf16.mxu0 %v687
      %778 = vmatpush1.bf16.msra.mxu0 %v686
      %779 = vmatprep.subr.bf16.mxu0 %v691
      %780 = vmatpush1.bf16.msra.mxu0 %v690
      %781 = vmatprep.subr.bf16.mxu0 0
      %782 = vmatpush1.bf16.msra.mxu0 0
      %783 = vmatprep.subr.bf16.mxu0 0
      %784 = vmatpush1.bf16.msra.mxu0 0
      %785 = vmatprep.subr.bf16.mxu0 0
      %786 = vmatpush1.bf16.msra.mxu0 0
      %787 = vmatprep.subr.bf16.mxu0 0
      %788 = vmatpush1.bf16.msra.mxu0 0
      %789 = vmatprep.subr.bf16.mxu0 0
      %790 = vmatpush1.bf16.msra.mxu0 0
      %791 = vmatprep.subr.bf16.mxu0 0
      %792 = vmatpush1.bf16.msra.mxu0 0
      %793 = vmatprep.subr.bf16.mxu0 0
      %794 = vmatpush1.bf16.msra.mxu0 0
      %795 = vmatprep.subr.bf16.mxu0 0
      %796 = vmatpush1.bf16.msra.mxu0 0
      %797 = vmatprep.mubr.bf16.mxu0 0
      %798 = vmatmul.mubr.bf16.gmra.mrb[0].mxu0 %v530
      %v799 = vpop.f32.mrb[0].mxu0
      %v800 = vadd.f32 0.0, %v799
      %v801 = vpop.f32.mrb[0].mxu0
      %v802 = vadd.f32 0.0, %v801
      %v803 = vpop.f32.mrb[0].mxu0
      %v804 = vpop.f32.mrb[0].mxu0
      %805 = vdwg.mxu0
      %v806 = vpack.c.bf16 %v525, %v525
      %s807 = scalar_lea.vmem %s1, 256
      %v808 = vld [vmem:[%s807] sm:$0xff]
      %v809 = vld [vmem:[%s807 + $0x8] sm:$0xff]
      %v810 = vld [vmem:[%s807 + $0x10] sm:$0xff]
      %v811 = vld [vmem:[%s807 + $0x18] sm:$0xff]
      %v812 = vld [vmem:[%s807 + $0x20] sm:$0xff]
      %v813 = vld [vmem:[%s807 + $0x28] sm:$0xff]
      %v814 = vld [vmem:[%s807 + $0x30] sm:$0xff]
      %v815 = vld [vmem:[%s807 + $0x38] sm:$0xff]
      %v816 = vld [vmem:[%s807 + $0x40] sm:$0xff]
      %v817 = vld [vmem:[%s807 + $0x48] sm:$0xff]
      %v818 = vld [vmem:[%s807 + $0x50] sm:$0xff]
      %v819 = vld [vmem:[%s807 + $0x58] sm:$0xff]
      %v820 = vld [vmem:[%s807 + $0x60] sm:$0xff]
      %v821 = vld [vmem:[%s807 + $0x68] sm:$0xff]
      %v822 = vld [vmem:[%s807 + $0x70] sm:$0xff]
      %v823 = vld [vmem:[%s807 + $0x78] sm:$0xff]
      %v824 = vld [vmem:[%s807 + $0x80] sm:$0xff]
      %v825 = vld [vmem:[%s807 + $0x88] sm:$0xff]
      %v826 = vld [vmem:[%s807 + $0x90] sm:$0xff]
      %v827 = vld [vmem:[%s807 + $0x98] sm:$0xff]
      %v828 = vld [vmem:[%s807 + $0xa0] sm:$0xff]
      %v829 = vld [vmem:[%s807 + $0xa8] sm:$0xff]
      %v830 = vld [vmem:[%s807 + $0xb0] sm:$0xff]
      %v831 = vld [vmem:[%s807 + $0xb8] sm:$0xff]
      %v832 = vld [vmem:[%s807 + $0xc0] sm:$0xff]
      %v833 = vld [vmem:[%s807 + $0xc8] sm:$0xff]
      %v834 = vld [vmem:[%s807 + $0xd0] sm:$0xff]
      %v835 = vld [vmem:[%s807 + $0xd8] sm:$0xff]
      %v836 = vld [vmem:[%s807 + $0xe0] sm:$0xff]
      %v837 = vld [vmem:[%s807 + $0xe8] sm:$0xff]
      %v838 = vld [vmem:[%s807 + $0xf0] sm:$0xff]
      %v839 = vld [vmem:[%s807 + $0xf8] sm:$0xff]
      %v872 = vunpack.c.l.b16 %v808
      %v873 = vunpack.c.h.b16 %v808
      %v874 = vunpack.c.l.b16 %v809
      %v875 = vunpack.c.h.b16 %v809
      %v876 = vunpack.c.l.b16 %v810
      %v877 = vunpack.c.h.b16 %v810
      %v878 = vunpack.c.l.b16 %v811
      %v879 = vunpack.c.h.b16 %v811
      %v880 = vunpack.c.l.b16 %v812
      %v881 = vunpack.c.h.b16 %v812
      %v882 = vunpack.c.l.b16 %v813
      %v883 = vunpack.c.h.b16 %v813
      %v884 = vunpack.c.l.b16 %v814
      %v885 = vunpack.c.h.b16 %v814
      %v886 = vunpack.c.l.b16 %v815
      %v887 = vunpack.c.h.b16 %v815
      %v888 = vunpack.c.l.b16 %v816
      %v889 = vunpack.c.h.b16 %v816
      %v890 = vunpack.c.l.b16 %v817
      %v891 = vunpack.c.h.b16 %v817
      %v892 = vunpack.c.l.b16 %v818
      %v893 = vunpack.c.h.b16 %v818
      %v894 = vunpack.c.l.b16 %v819
      %v895 = vunpack.c.h.b16 %v819
      %v896 = vunpack.c.l.b16 %v820
      %v897 = vunpack.c.h.b16 %v820
      %v898 = vunpack.c.l.b16 %v821
      %v899 = vunpack.c.h.b16 %v821
      %v900 = vunpack.c.l.b16 %v822
      %v901 = vunpack.c.h.b16 %v822
      %v902 = vunpack.c.l.b16 %v823
      %v903 = vunpack.c.h.b16 %v823
      %v904 = vunpack.c.l.b16 %v824
      %v905 = vunpack.c.h.b16 %v824
      %v906 = vunpack.c.l.b16 %v825
      %v907 = vunpack.c.h.b16 %v825
      %v908 = vunpack.c.l.b16 %v826
      %v909 = vunpack.c.h.b16 %v826
      %v910 = vunpack.c.l.b16 %v827
      %v911 = vunpack.c.h.b16 %v827
      %v912 = vunpack.c.l.b16 %v828
      %v913 = vunpack.c.h.b16 %v828
      %v914 = vunpack.c.l.b16 %v829
      %v915 = vunpack.c.h.b16 %v829
      %v916 = vunpack.c.l.b16 %v830
      %v917 = vunpack.c.h.b16 %v830
      %v918 = vunpack.c.l.b16 %v831
      %v919 = vunpack.c.h.b16 %v831
      %v920 = vunpack.c.l.b16 %v832
      %v921 = vunpack.c.h.b16 %v832
      %v922 = vunpack.c.l.b16 %v833
      %v923 = vunpack.c.h.b16 %v833
      %v924 = vunpack.c.l.b16 %v834
      %v925 = vunpack.c.h.b16 %v834
      %v926 = vunpack.c.l.b16 %v835
      %v927 = vunpack.c.h.b16 %v835
      %v928 = vunpack.c.l.b16 %v836
      %v929 = vunpack.c.h.b16 %v836
      %v930 = vunpack.c.l.b16 %v837
      %v931 = vunpack.c.h.b16 %v837
      %v932 = vunpack.c.l.b16 %v838
      %v933 = vunpack.c.h.b16 %v838
      %v934 = vunpack.c.l.b16 %v839
      %v935 = vunpack.c.h.b16 %v839
      %v936 = vpack.c.b16 %v876, %v872
      %v937 = vpack.c.b16 %v877, %v873
      %v938 = vpack.c.b16 %v878, %v874
      %v939 = vpack.c.b16 %v879, %v875
      %v940 = vpack.c.b16 %v884, %v880
      %v941 = vpack.c.b16 %v885, %v881
      %v942 = vpack.c.b16 %v886, %v882
      %v943 = vpack.c.b16 %v887, %v883
      %v944 = vpack.c.b16 %v892, %v888
      %v945 = vpack.c.b16 %v893, %v889
      %v946 = vpack.c.b16 %v894, %v890
      %v947 = vpack.c.b16 %v895, %v891
      %v948 = vpack.c.b16 %v900, %v896
      %v949 = vpack.c.b16 %v901, %v897
      %v950 = vpack.c.b16 %v902, %v898
      %v951 = vpack.c.b16 %v903, %v899
      %v952 = vpack.c.b16 %v908, %v904
      %v953 = vpack.c.b16 %v909, %v905
      %v954 = vpack.c.b16 %v910, %v906
      %v955 = vpack.c.b16 %v911, %v907
      %v956 = vpack.c.b16 %v916, %v912
      %v957 = vpack.c.b16 %v917, %v913
      %v958 = vpack.c.b16 %v918, %v914
      %v959 = vpack.c.b16 %v919, %v915
      %v960 = vpack.c.b16 %v924, %v920
      %v961 = vpack.c.b16 %v925, %v921
      %v962 = vpack.c.b16 %v926, %v922
      %v963 = vpack.c.b16 %v927, %v923
      %v964 = vpack.c.b16 %v932, %v928
      %v965 = vpack.c.b16 %v933, %v929
      %v966 = vpack.c.b16 %v934, %v930
      %v967 = vpack.c.b16 %v935, %v931
      %1000 = vmatprep.subr.bf16.mxu0 %v937
      %1001 = vmatpush1.bf16.msra.mxu0 %v936
      %1002 = vmatprep.subr.bf16.mxu0 %v941
      %1003 = vmatpush1.bf16.msra.mxu0 %v940
      %1004 = vmatprep.subr.bf16.mxu0 %v945
      %1005 = vmatpush1.bf16.msra.mxu0 %v944
      %1006 = vmatprep.subr.bf16.mxu0 %v949
      %1007 = vmatpush1.bf16.msra.mxu0 %v948
      %1008 = vmatprep.subr.bf16.mxu0 %v953
      %1009 = vmatpush1.bf16.msra.mxu0 %v952
      %1010 = vmatprep.subr.bf16.mxu0 %v957
      %1011 = vmatpush1.bf16.msra.mxu0 %v956
      %1012 = vmatprep.subr.bf16.mxu0 %v961
      %1013 = vmatpush1.bf16.msra.mxu0 %v960
      %1014 = vmatprep.subr.bf16.mxu0 %v965
      %1015 = vmatpush1.bf16.msra.mxu0 %v964
      %1016 = vmatprep.subr.bf16.mxu0 0
      %1017 = vmatpush1.bf16.msra.mxu0 0
      %1018 = vmatprep.subr.bf16.mxu0 0
      %1019 = vmatpush1.bf16.msra.mxu0 0
      %1020 = vmatprep.subr.bf16.mxu0 0
      %1021 = vmatpush1.bf16.msra.mxu0 0
      %1022 = vmatprep.subr.bf16.mxu0 0
      %1023 = vmatpush1.bf16.msra.mxu0 0
      %1024 = vmatprep.subr.bf16.mxu0 0
      %1025 = vmatpush1.bf16.msra.mxu0 0
      %1026 = vmatprep.subr.bf16.mxu0 0
      %1027 = vmatpush1.bf16.msra.mxu0 0
      %1028 = vmatprep.subr.bf16.mxu0 0
      %1029 = vmatpush1.bf16.msra.mxu0 0
      %1030 = vmatprep.subr.bf16.mxu0 0
      %1031 = vmatpush1.bf16.msra.mxu0 0
      %1032 = vmatprep.mubr.bf16.mxu0 0
      %1033 = vmatmul.mubr.bf16.gmra.mrb[0].mxu0 %v806
      %v1034 = vpop.f32.mrb[0].mxu0
      %v1035 = vadd.f32 %v759, %v1034
      %v1036 = vpop.f32.mrb[0].mxu0
      %v1037 = vadd.f32 %v761, %v1036
      %v1038 = vpop.f32.mrb[0].mxu0
      %v1039 = vpop.f32.mrb[0].mxu0
      %1040 = vdwg.mxu0
      %1041 = vmatprep.subr.bf16.mxu0 %v939
      %1042 = vmatpush1.bf16.msra.mxu0 %v938
      %1043 = vmatprep.subr.bf16.mxu0 %v943
      %1044 = vmatpush1.bf16.msra.mxu0 %v942
      %1045 = vmatprep.subr.bf16.mxu0 %v947
      %1046 = vmatpush1.bf16.msra.mxu0 %v946
      %1047 = vmatprep.subr.bf16.mxu0 %v951
      %1048 = vmatpush1.bf16.msra.mxu0 %v950
      %1049 = vmatprep.subr.bf16.mxu0 %v955
      %1050 = vmatpush1.bf16.msra.mxu0 %v954
      %1051 = vmatprep.subr.bf16.mxu0 %v959
      %1052 = vmatpush1.bf16.msra.mxu0 %v958
      %1053 = vmatprep.subr.bf16.mxu0 %v963
      %1054 = vmatpush1.bf16.msra.mxu0 %v962
      %1055 = vmatprep.subr.bf16.mxu0 %v967
      %1056 = vmatpush1.bf16.msra.mxu0 %v966
      %1057 = vmatprep.subr.bf16.mxu0 0
      %1058 = vmatpush1.bf16.msra.mxu0 0
      %1059 = vmatprep.subr.bf16.mxu0 0
      %1060 = vmatpush1.bf16.msra.mxu0 0
      %1061 = vmatprep.subr.bf16.mxu0 0
      %1062 = vmatpush1.bf16.msra.mxu0 0
      %1063 = vmatprep.subr.bf16.mxu0 0
      %1064 = vmatpush1.bf16.msra.mxu0 0
      %1065 = vmatprep.subr.bf16.mxu0 0
      %1066 = vmatpush1.bf16.msra.mxu0 0
      %1067 = vmatprep.subr.bf16.mxu0 0
      %1068 = vmatpush1.bf16.msra.mxu0 0
      %1069 = vmatprep.subr.bf16.mxu0 0
      %1070 = vmatpush1.bf16.msra.mxu0 0
      %1071 = vmatprep.subr.bf16.mxu0 0
      %1072 = vmatpush1.bf16.msra.mxu0 0
      %1073 = vmatprep.mubr.bf16.mxu0 0
      %1074 = vmatmul.mubr.bf16.gmra.mrb[0].mxu0 %v806
      %v1075 = vpop.f32.mrb[0].mxu0
      %v1076 = vadd.f32 %v800, %v1075
      %v1077 = vpop.f32.mrb[0].mxu0
      %v1078 = vadd.f32 %v802, %v1077
      %v1079 = vpop.f32.mrb[0].mxu0
      %v1080 = vpop.f32.mrb[0].mxu0
      %1081 = vdwg.mxu0
      %s1082 = scalar_lea.vmem %s3, 4
      %v1083 = vld [vmem:[%s1082] sm:$0xf]
      %v1085 = vlaneseq
      %v1086 = vshrl.u32 %v1085, 7
      %v1087 = vsub.s32 0, %v1086
      %v1088 = vrot.slane %v1083, %v1087
      %v1089 = vlaneseq
      %v1090 = vshrl.u32 %v1089, 7
      %v1091 = vsub.s32 1, %v1090
      %v1092 = vrot.slane %v1083, %v1091
      %v1093 = vlaneseq
      %v1094 = vshrl.u32 %v1093, 7
      %v1095 = vsub.s32 2, %v1094
      %v1096 = vrot.slane %v1083, %v1095
      %v1097 = vlaneseq
      %v1098 = vshrl.u32 %v1097, 7
      %v1099 = vsub.s32 3, %v1098
      %v1100 = vrot.slane %v1083, %v1099
      %v1105 = vadd.f32 %v1035, %v1088
      %v1106 = vadd.f32 %v1037, %v1092
      %v1107 = vadd.f32 %v1076, %v1096
      %v1108 = vadd.f32 %v1078, %v1100
      %s1109 = scalar_lea.vmem %s5, 8
      %v1110 = vld [vmem:[%s1109] sm:$0xff]
      %v1111 = vxor.u32 %v1105, 2147483648
      %v1112 = vmul.f32 %v1111, 1.442695
      %v1113 = vpow.pop %v1112
      %v1114 = vadd.f32 %v1113, 1.0
      %v1115 = vrcp.pop %v1114
      %v1116 = vmul.f32 1.0, %v1115
      %v1117 = vxor.u32 %v1106, 2147483648
      %v1118 = vmul.f32 %v1117, 1.442695
      %v1119 = vpow.pop %v1118
      %v1120 = vadd.f32 %v1119, 1.0
      %v1121 = vrcp.pop %v1120
      %v1122 = vmul.f32 1.0, %v1121
      %v1123 = vtanh.pop %v1107
      %v1124 = vxor.u32 %v1108, 2147483648
      %v1125 = vmul.f32 %v1124, 1.442695
      %v1126 = vpow.pop %v1125
      %v1127 = vadd.f32 %v1126, 1.0
      %v1128 = vrcp.pop %v1127
      %v1129 = vmul.f32 1.0, %v1128
      %v1130 = vmul.f32 %v1122, %v1110
      %v1131 = vmul.f32 %v1116, %v1123
      %v1132 = vadd.f32 %v1130, %v1131
      %v1133 = vtanh.pop %v1132
      %v1134 = vmul.f32 %v1129, %v1133
      %1135 = vst [vmem:[%s528] sm:$0xff] %v1134
      %1136 = vst [vmem:[%s1109] sm:$0xff] %v1132
      // Predicated region
      $region41: #{_forward_core.4} parent=35 // pred_check
        %p1137 = pneg %p119
      $region42: #{_forward_core.4} parent=35 // pred_check_branch
        %1139 = sbr.rel (%p1137) target = $region44
      $region43: #{_forward_core.4} parent=35 // pred_region
        _
      $region44: #{_forward_core.4} parent=35 // pred_fallthru
        _
      // Predicated region
      $region45: #{_forward_core.4} parent=35 // pred_check
        %p1140 = pneg %p140
      $region46: #{_forward_core.4} parent=35 // pred_check_branch
        %1142 = sbr.rel (%p1140) target = $region48
      $region47: #{_forward_core.4} parent=35 // pred_region
        _
      $region48: #{_forward_core.4} parent=35 // pred_fallthru
        _
      // Predicated region
      $region49: #{_forward_core.4} parent=35 // pred_check
        %p1143 = pneg %p119
      $region50: #{_forward_core.4} parent=35 // pred_check_branch
        %1145 = sbr.rel (%p1143) target = $region52
      $region51: #{_forward_core.4} parent=35 // pred_region
        _
      $region52: #{_forward_core.4} parent=35 // pred_fallthru
        _
      // Predicated region
      $region53: #{_forward_core.4} parent=35 // pred_check
        %p1146 = pneg %p140
      $region54: #{_forward_core.4} parent=35 // pred_check_branch
        %1148 = sbr.rel (%p1146) target = $region56
      $region55: #{_forward_core.4} parent=35 // pred_region
        _
      $region56: #{_forward_core.4} parent=35 // pred_fallthru
        _
    $region36: #{_forward_core.4} parent=5 // pred_fallthru
      _
    %p1149 = scmp.le.s32.totalorder 2, %s12
    // Predicated region
    $region57: #{_forward_core.4} parent=5 // pred_check
      %p1150 = pneg %p1149
    $region58: #{_forward_core.4} parent=5 // pred_check_branch
      %1152 = sbr.rel (%p1150) target = $region60
    $region59: #{_forward_core.4} parent=5 // pred_region
      %s1153 = ssub.s32 %s12, 2
    $region60: #{_forward_core.4} parent=5 // pred_fallthru
      _
  $region6: #{_forward_core.4} parent=0 // loop_footer
    %s16 = sadd.s32 1, %s12
  $region7: #{_forward_core.4} parent=0 // loop_footer_branch
    %11 = sbr.rel target = $region3
  $region8: #{_forward_core.4} parent=0 // loop_exit
    _

// kernel: _forward_core.5
$region0: #{_forward_core.5}
  #allocation0 [shape = 'u32[]', space=smem, size = 0x4, offset = 0x4, fixed_abs, tag = 'smem constant byte address 0x4 - core index']
  #allocation1 [shape = 'u32[144,128]{1,0:T(1,128)}', space=vmem, size = 0x12000, scoped, tag = 'internal scratch']
  #allocation2 [shape = 'f32[2,8,128]{2,1,0:T(8,128)}', space=vmem, size = 0x2000, scoped, tag = 'scratch operand']
  #allocation3 [shape = 'f32[2,8,128]{2,1,0:T(8,128)}', space=vmem, size = 0x2000, scoped, tag = 'scratch operand']
  #allocation4 [shape = 'f32[8,128]{1,0:T(8,128)}', space=vmem, size = 0x1000, scoped, tag = 'scratch operand']
  #allocation5 [shape = 's32[1]{0}', space=sflag, size = 0x4, scoped, tag = 'scoped memory for _forward_core.5']
  #allocation6 [shape = 'u8[512]{0}', space=smem, size = 0x200, scoped, tag = 'prefetched SMEM operand 0']
  %s0 = inlined_call_operand.vmem [shape: s32[8], index: 0, kind: input, shape index: {}]
  %s1 = inlined_call_operand.vmem [shape: f32[8,128], index: 1, kind: input, shape index: {}]
  %s2 = inlined_call_operand.vmem [shape: f32[8,8,128], index: 2, kind: input, shape index: {}]
  %s3 = inlined_call_operand.vmem [shape: f32[2,8,128], index: 3, kind: input, shape index: {}]
  %s4 = inlined_call_operand.vmem [shape: f32[2,8,128], index: 4, kind: input, shape index: {}]
  %s5 = inlined_call_operand.vmem [shape: bf16[2,128,512], index: 5, kind: input, shape index: {}]
  %s6 = inlined_call_operand.vmem [shape: bf16[2,128,512], index: 6, kind: input, shape index: {}]
  %s7 = inlined_call_operand.vmem [shape: f32[2,1,512], index: 7, kind: input, shape index: {}]
  %s8 = inlined_call_operand.vmem [shape: f32[128,128], index: 8, kind: input, shape index: {}]
  %s9 = inlined_call_operand.vmem [shape: bf16[128,128], index: 9, kind: input, shape index: {}]
  %s10 = inlined_call_operand.vmem [shape: f32[1,128], index: 10, kind: input, shape index: {}]
  %s11 = inlined_call_operand.vmem [shape: f32[7,8,128], index: 11, kind: output, shape index: {}]
  %s12 = sld [smem:[#allocation0]]
  $region77: #{_forward_core.5} parent=0
    _
  %s14 = ssub.s32 1, %s12
  %s15 = scalar_select 0, %s14, %s12
  %s16 = sshll.u32 %s0, 4
  %s17 = int_to_ptr.vmem [resolvable:$true] %s16
  %19 = dma.vmem_to_smem %s17, 16, [#allocation6], [#allocation5]
  %20 = dma.done [#allocation5], 16
  %21 = sfence
  loop: start=0, step=1, limit=9
  $region2: #{_forward_core.5} parent=0 // loop_pre_header
    _
  $region3: #{_forward_core.5} parent=0 // loop_header
    %s23 = sphi 0, %s27
    %p24 = scmp.ge.s32.totalorder %s23, 9
    %s31 = sphi 0, %s31
    %s33 = sphi 0, %s31
    %s34 = sphi 0, %s33
    %s48 = sphi 0, %s34
    %s56 = sphi 0, %s58
    %s59 = sphi 0, %s56
    %s60 = sphi 0, %s59
    %s76 = sphi 0, %s60
    %s80 = sphi 0, %s80
    %s82 = sphi 0, %s80
    %s83 = sphi 0, %s82
    %s97 = sphi 0, %s83
    %s101 = sphi 0, %s101
    %s103 = sphi 0, %s101
    %s104 = sphi 0, %s103
    %s118 = sphi 0, %s104
    %s122 = sphi 0, %s122
    %s124 = sphi 0, %s122
    %s125 = sphi 0, %s124
    %s139 = sphi 0, %s125
    %s143 = sphi 0, %s143
    %s145 = sphi 0, %s143
    %s146 = sphi 0, %s145
    %s160 = sphi 0, %s146
    %s164 = sphi 0, %s164
    %s166 = sphi 0, %s164
    %s167 = sphi 0, %s166
    %s181 = sphi 0, %s167
    %s185 = sphi 0, %s185
    %s187 = sphi 0, %s185
    %s188 = sphi 0, %s187
    %s202 = sphi 0, %s188
    %s206 = sphi 0, %s206
    %s208 = sphi 0, %s206
    %s209 = sphi 0, %s208
    %s223 = sphi 0, %s209
    %s227 = sphi 0, %s227
    %s229 = sphi 0, %s227
    %s230 = sphi 0, %s229
    %s244 = sphi 0, %s230
    %s250 = sphi 0, %s252
    %s253 = sphi 0, %s250
    %s254 = sphi 0, %s253
    %s270 = sphi 0, %s254
  $region4: #{_forward_core.5} parent=0 // loop_header_branch
    %26 = sbr.rel (%p24) target = $region8
  $region5: #{_forward_core.5} parent=0 // loop_body
    %s28 = ssub.s32 %s23, 1
    %s29 = ssub.s32 %s23, 2
    %s30 = sadd.s32 %s23, 1
    %s32 = sadd.s32 %s31, 1
    %p35 = scmp.eq.s32.totalorder %s23, 6
    %p36 = scmp.ne.s32.totalorder %s31, %s33
    %p37 = scmp.eq.s32.totalorder %s23, 0
    %p38 = por %p36, %p37
    %p39 = scmp.ne.s32.totalorder %s31, %s33
    %p40 = scmp.eq.s32.totalorder %s28, 6
    %p41 = por %p39, %p40
    %p42 = scmp.ne.s32.totalorder %s33, %s34
    %p43 = scmp.eq.s32.totalorder %s28, 0
    %p44 = por %p42, %p43
    %p45 = scmp.ne.s32.totalorder %s33, %s34
    %p46 = scmp.eq.s32.totalorder %s29, 6
    %p47 = por %p45, %p46
    %p49 = scmp.ne.s32.totalorder %s34, %s48
    %p50 = scmp.eq.s32.totalorder %s29, 0
    %p51 = por %p49, %p50
    %s52 = sadd.s32 %s23, 1
    %s53 = sadd.s32 %s30, 1
    %s54 = ssub.s32 %s52, %s53
    %p55 = scmp.eq.s32.totalorder %s54, 0
    %s57 = sadd.s32 %s56, 1
    %s58 = scalar_select %p55, %s56, %s57
    %p61 = pneg %p55
    %p62 = scmp.eq.s32.totalorder %s23, 6
    %p63 = por %p61, %p62
    %p64 = scmp.ne.s32.totalorder %s56, %s59
    %p65 = scmp.eq.s32.totalorder %s23, 0
    %p66 = por %p64, %p65
    %p67 = scmp.ne.s32.totalorder %s56, %s59
    %p68 = scmp.eq.s32.totalorder %s28, 6
    %p69 = por %p67, %p68
    %p70 = scmp.ne.s32.totalorder %s59, %s60
    %p71 = scmp.eq.s32.totalorder %s28, 0
    %p72 = por %p70, %p71
    %p73 = scmp.ne.s32.totalorder %s59, %s60
    %p74 = scmp.eq.s32.totalorder %s29, 6
    %p75 = por %p73, %p74
    %p77 = scmp.ne.s32.totalorder %s60, %s76
    %p78 = scmp.eq.s32.totalorder %s29, 0
    %p79 = por %p77, %p78
    %s81 = sadd.s32 %s80, 1
    %p84 = scmp.eq.s32.totalorder %s23, 6
    %p85 = scmp.ne.s32.totalorder %s80, %s82
    %p86 = scmp.eq.s32.totalorder %s23, 0
    %p87 = por %p85, %p86
    %p88 = scmp.ne.s32.totalorder %s80, %s82
    %p89 = scmp.eq.s32.totalorder %s28, 6
    %p90 = por %p88, %p89
    %p91 = scmp.ne.s32.totalorder %s82, %s83
    %p92 = scmp.eq.s32.totalorder %s28, 0
    %p93 = por %p91, %p92
    %p94 = scmp.ne.s32.totalorder %s82, %s83
    %p95 = scmp.eq.s32.totalorder %s29, 6
    %p96 = por %p94, %p95
    %p98 = scmp.ne.s32.totalorder %s83, %s97
    %p99 = scmp.eq.s32.totalorder %s29, 0
    %p100 = por %p98, %p99
    %s102 = sadd.s32 %s101, 1
    %p105 = scmp.eq.s32.totalorder %s23, 6
    %p106 = scmp.ne.s32.totalorder %s101, %s103
    %p107 = scmp.eq.s32.totalorder %s23, 0
    %p108 = por %p106, %p107
    %p109 = scmp.ne.s32.totalorder %s101, %s103
    %p110 = scmp.eq.s32.totalorder %s28, 6
    %p111 = por %p109, %p110
    %p112 = scmp.ne.s32.totalorder %s103, %s104
    %p113 = scmp.eq.s32.totalorder %s28, 0
    %p114 = por %p112, %p113
    %p115 = scmp.ne.s32.totalorder %s103, %s104
    %p116 = scmp.eq.s32.totalorder %s29, 6
    %p117 = por %p115, %p116
    %p119 = scmp.ne.s32.totalorder %s104, %s118
    %p120 = scmp.eq.s32.totalorder %s29, 0
    %p121 = por %p119, %p120
    %s123 = sadd.s32 %s122, 1
    %p126 = scmp.eq.s32.totalorder %s23, 6
    %p127 = scmp.ne.s32.totalorder %s122, %s124
    %p128 = scmp.eq.s32.totalorder %s23, 0
    %p129 = por %p127, %p128
    %p130 = scmp.ne.s32.totalorder %s122, %s124
    %p131 = scmp.eq.s32.totalorder %s28, 6
    %p132 = por %p130, %p131
    %p133 = scmp.ne.s32.totalorder %s124, %s125
    %p134 = scmp.eq.s32.totalorder %s28, 0
    %p135 = por %p133, %p134
    %p136 = scmp.ne.s32.totalorder %s124, %s125
    %p137 = scmp.eq.s32.totalorder %s29, 6
    %p138 = por %p136, %p137
    %p140 = scmp.ne.s32.totalorder %s125, %s139
    %p141 = scmp.eq.s32.totalorder %s29, 0
    %p142 = por %p140, %p141
    %s144 = sadd.s32 %s143, 1
    %p147 = scmp.eq.s32.totalorder %s23, 6
    %p148 = scmp.ne.s32.totalorder %s143, %s145
    %p149 = scmp.eq.s32.totalorder %s23, 0
    %p150 = por %p148, %p149
    %p151 = scmp.ne.s32.totalorder %s143, %s145
    %p152 = scmp.eq.s32.totalorder %s28, 6
    %p153 = por %p151, %p152
    %p154 = scmp.ne.s32.totalorder %s145, %s146
    %p155 = scmp.eq.s32.totalorder %s28, 0
    %p156 = por %p154, %p155
    %p157 = scmp.ne.s32.totalorder %s145, %s146
    %p158 = scmp.eq.s32.totalorder %s29, 6
    %p159 = por %p157, %p158
    %p161 = scmp.ne.s32.totalorder %s146, %s160
    %p162 = scmp.eq.s32.totalorder %s29, 0
    %p163 = por %p161, %p162
    %s165 = sadd.s32 %s164, 1
    %p168 = scmp.eq.s32.totalorder %s23, 6
    %p169 = scmp.ne.s32.totalorder %s164, %s166
    %p170 = scmp.eq.s32.totalorder %s23, 0
    %p171 = por %p169, %p170
    %p172 = scmp.ne.s32.totalorder %s164, %s166
    %p173 = scmp.eq.s32.totalorder %s28, 6
    %p174 = por %p172, %p173
    %p175 = scmp.ne.s32.totalorder %s166, %s167
    %p176 = scmp.eq.s32.totalorder %s28, 0
    %p177 = por %p175, %p176
    %p178 = scmp.ne.s32.totalorder %s166, %s167
    %p179 = scmp.eq.s32.totalorder %s29, 6
    %p180 = por %p178, %p179
    %p182 = scmp.ne.s32.totalorder %s167, %s181
    %p183 = scmp.eq.s32.totalorder %s29, 0
    %p184 = por %p182, %p183
    %s186 = sadd.s32 %s185, 1
    %p189 = scmp.eq.s32.totalorder %s23, 6
    %p190 = scmp.ne.s32.totalorder %s185, %s187
    %p191 = scmp.eq.s32.totalorder %s23, 0
    %p192 = por %p190, %p191
    %p193 = scmp.ne.s32.totalorder %s185, %s187
    %p194 = scmp.eq.s32.totalorder %s28, 6
    %p195 = por %p193, %p194
    %p196 = scmp.ne.s32.totalorder %s187, %s188
    %p197 = scmp.eq.s32.totalorder %s28, 0
    %p198 = por %p196, %p197
    %p199 = scmp.ne.s32.totalorder %s187, %s188
    %p200 = scmp.eq.s32.totalorder %s29, 6
    %p201 = por %p199, %p200
    %p203 = scmp.ne.s32.totalorder %s188, %s202
    %p204 = scmp.eq.s32.totalorder %s29, 0
    %p205 = por %p203, %p204
    %s207 = sadd.s32 %s206, 1
    %p210 = scmp.eq.s32.totalorder %s23, 6
    %p211 = scmp.ne.s32.totalorder %s206, %s208
    %p212 = scmp.eq.s32.totalorder %s23, 0
    %p213 = por %p211, %p212
    %p214 = scmp.ne.s32.totalorder %s206, %s208
    %p215 = scmp.eq.s32.totalorder %s28, 6
    %p216 = por %p214, %p215
    %p217 = scmp.ne.s32.totalorder %s208, %s209
    %p218 = scmp.eq.s32.totalorder %s28, 0
    %p219 = por %p217, %p218
    %p220 = scmp.ne.s32.totalorder %s208, %s209
    %p221 = scmp.eq.s32.totalorder %s29, 6
    %p222 = por %p220, %p221
    %p224 = scmp.ne.s32.totalorder %s209, %s223
    %p225 = scmp.eq.s32.totalorder %s29, 0
    %p226 = por %p224, %p225
    %s228 = sadd.s32 %s227, 1
    %p231 = scmp.eq.s32.totalorder %s23, 6
    %p232 = scmp.ne.s32.totalorder %s227, %s229
    %p233 = scmp.eq.s32.totalorder %s23, 0
    %p234 = por %p232, %p233
    %p235 = scmp.ne.s32.totalorder %s227, %s229
    %p236 = scmp.eq.s32.totalorder %s28, 6
    %p237 = por %p235, %p236
    %p238 = scmp.ne.s32.totalorder %s229, %s230
    %p239 = scmp.eq.s32.totalorder %s28, 0
    %p240 = por %p238, %p239
    %p241 = scmp.ne.s32.totalorder %s229, %s230
    %p242 = scmp.eq.s32.totalorder %s29, 6
    %p243 = por %p241, %p242
    %p245 = scmp.ne.s32.totalorder %s230, %s244
    %p246 = scmp.eq.s32.totalorder %s29, 0
    %p247 = por %p245, %p246
    %s248 = ssub.s32 %s23, %s30
    %p249 = scmp.eq.s32.totalorder %s248, 0
    %s251 = sadd.s32 %s250, 1
    %s252 = scalar_select %p249, %s250, %s251
    %p255 = pneg %p249
    %p256 = scmp.eq.s32.totalorder %s23, 6
    %p257 = por %p255, %p256
    %p258 = scmp.ne.s32.totalorder %s250, %s253
    %p259 = scmp.eq.s32.totalorder %s23, 0
    %p260 = por %p258, %p259
    %p261 = scmp.ne.s32.totalorder %s250, %s253
    %p262 = scmp.eq.s32.totalorder %s28, 6
    %p263 = por %p261, %p262
    %p264 = scmp.ne.s32.totalorder %s253, %s254
    %p265 = scmp.eq.s32.totalorder %s28, 0
    %p266 = por %p264, %p265
    %p267 = scmp.ne.s32.totalorder %s253, %s254
    %p268 = scmp.eq.s32.totalorder %s29, 6
    %p269 = por %p267, %p268
    %p271 = scmp.ne.s32.totalorder %s254, %s270
    %p272 = scmp.eq.s32.totalorder %s29, 0
    %p273 = por %p271, %p272
    %p274 = scmp.le.s32.totalorder 1, %s23
    %p275 = scmp.lt.s32.totalorder %s23, 8
    %p276 = pnand %p274, %p275
    %p277 = pneg %p276
    // Predicated region
    $region9: #{_forward_core.5} parent=5 // pred_check
      _
    $region10: #{_forward_core.5} parent=5 // pred_check_branch
      %279 = sbr.rel (%p276) target = $region12
    $region11: #{_forward_core.5} parent=5 // pred_region
      %s280 = ssub.s32 %s23, 1
      // Predicated region
      $region13: #{_forward_core.5} parent=11 // pred_check
        %p281 = pneg %p44
      $region14: #{_forward_core.5} parent=11 // pred_check_branch
        %283 = sbr.rel (%p281) target = $region16
      $region15: #{_forward_core.5} parent=11 // pred_region
        _
      $region16: #{_forward_core.5} parent=11 // pred_fallthru
        _
      // Predicated region
      $region17: #{_forward_core.5} parent=11 // pred_check
        %p284 = pneg %p93
      $region18: #{_forward_core.5} parent=11 // pred_check_branch
        %286 = sbr.rel (%p284) target = $region20
      $region19: #{_forward_core.5} parent=11 // pred_region
        _
      $region20: #{_forward_core.5} parent=11 // pred_fallthru
        _
      // Predicated region
      $region21: #{_forward_core.5} parent=11 // pred_check
        %p287 = pneg %p114
      $region22: #{_forward_core.5} parent=11 // pred_check_branch
        %289 = sbr.rel (%p287) target = $region24
      $region23: #{_forward_core.5} parent=11 // pred_region
        _
      $region24: #{_forward_core.5} parent=11 // pred_fallthru
        _
      // Predicated region
      $region25: #{_forward_core.5} parent=11 // pred_check
        %p290 = pneg %p135
      $region26: #{_forward_core.5} parent=11 // pred_check_branch
        %292 = sbr.rel (%p290) target = $region28
      $region27: #{_forward_core.5} parent=11 // pred_region
        _
      $region28: #{_forward_core.5} parent=11 // pred_fallthru
        _
      // Predicated region
      $region29: #{_forward_core.5} parent=11 // pred_check
        %p293 = pneg %p156
      $region30: #{_forward_core.5} parent=11 // pred_check_branch
        %295 = sbr.rel (%p293) target = $region32
      $region31: #{_forward_core.5} parent=11 // pred_region
        _
      $region32: #{_forward_core.5} parent=11 // pred_fallthru
        _
      // Predicated region
      $region33: #{_forward_core.5} parent=11 // pred_check
        %p296 = pneg %p177
      $region34: #{_forward_core.5} parent=11 // pred_check_branch
        %298 = sbr.rel (%p296) target = $region36
      $region35: #{_forward_core.5} parent=11 // pred_region
        _
      $region36: #{_forward_core.5} parent=11 // pred_fallthru
        _
      // Predicated region
      $region37: #{_forward_core.5} parent=11 // pred_check
        %p299 = pneg %p198
      $region38: #{_forward_core.5} parent=11 // pred_check_branch
        %301 = sbr.rel (%p299) target = $region40
      $region39: #{_forward_core.5} parent=11 // pred_region
        _
      $region40: #{_forward_core.5} parent=11 // pred_fallthru
        _
      // Predicated region
      $region41: #{_forward_core.5} parent=11 // pred_check
        %p302 = pneg %p219
      $region42: #{_forward_core.5} parent=11 // pred_check_branch
        %304 = sbr.rel (%p302) target = $region44
      $region43: #{_forward_core.5} parent=11 // pred_region
        _
      $region44: #{_forward_core.5} parent=11 // pred_fallthru
        _
      // Predicated region
      $region45: #{_forward_core.5} parent=11 // pred_check
        %p305 = pneg %p240
      $region46: #{_forward_core.5} parent=11 // pred_check_branch
        %307 = sbr.rel (%p305) target = $region48
      $region47: #{_forward_core.5} parent=11 // pred_region
        _
      $region48: #{_forward_core.5} parent=11 // pred_fallthru
        _
    $region12: #{_forward_core.5} parent=5 // pred_fallthru
      _
    %p308 = scmp.lt.s32.totalorder %s23, 7
    // Predicated region
    $region49: #{_forward_core.5} parent=5 // pred_check
      %p309 = pneg %p308
    $region50: #{_forward_core.5} parent=5 // pred_check_branch
      %311 = sbr.rel (%p309) target = $region52
    $region51: #{_forward_core.5} parent=5 // pred_region
      // Predicated region
      $region53: #{_forward_core.5} parent=51 // pred_check
        %p312 = pneg %p66
      $region54: #{_forward_core.5} parent=51 // pred_check_branch
        %314 = sbr.rel (%p312) target = $region56
      $region55: #{_forward_core.5} parent=51 // pred_region
        %s315 = sadd.s32 %s23, 1
        %p316 = scmp.lt.s32.totalorder %s315, 7
        %s317 = scalar_select %p316, %s315, 7
        %s318 = smul.addr %s317, 8
        %s319 = scalar_lea.vmem %s2, %s318
        %s320 = sadd.s32 %s23, 1
      $region56: #{_forward_core.5} parent=51 // pred_fallthru
        _
    $region52: #{_forward_core.5} parent=5 // pred_fallthru
      _
    %p321 = scmp.le.s32.totalorder 1, %s23
    %p322 = scmp.lt.s32.totalorder %s23, 8
    %p323 = pnand %p321, %p322
    %p324 = pneg %p323
    // Predicated region
    $region57: #{_forward_core.5} parent=5 // pred_check
      _
    $region58: #{_forward_core.5} parent=5 // pred_check_branch
      %326 = sbr.rel (%p323) target = $region60
    $region59: #{_forward_core.5} parent=5 // pred_region
      %s327 = ssub.s32 %s23, 1
      %p328 = pneg %p44
      %p329 = pneg %p41
      %s330 = sadd.s32 %s28, 1
      %p331 = scmp.lt.s32.totalorder %s330, 7
      %s332 = scalar_select %p331, %s330, 7
      %s333 = smul.addr %s332, 8
      %s334 = scalar_lea.vmem %s2, %s333
      %p335 = pneg %p72
      %p336 = pneg %p69
      %p337 = pneg %p93
      %p338 = pneg %p90
      %p339 = pneg %p114
      %p340 = pneg %p111
      %p341 = pneg %p135
      %p342 = pneg %p132
      %p343 = pneg %p156
      %p344 = pneg %p153
      %p345 = pneg %p177
      %p346 = pneg %p174
      %p347 = pneg %p198
      %p348 = pneg %p195
      %p349 = pneg %p219
      %p350 = pneg %p216
      %p351 = pneg %p240
      %p352 = pneg %p237
      %p353 = pneg %p266
      %p354 = pneg %p263
      %p355 = scmp.lt.s32.totalorder %s28, 6
      %s356 = scalar_select %p355, %s28, 6
      %s357 = smul.addr %s356, 8
      %s358 = scalar_lea.vmem %s11, %s357
      %s359 = sadd.s32 %s28, 1
      %p360 = scmp.lt.s32.totalorder %s359, 7
      %s361 = scalar_select %p360, %s359, 7
      %s362 = smul.addr %s361, 8
      %s363 = scalar_lea.vmem %s2, %s362
      %s364 = sadd.s32 %s28, 1
      %p365 = scmp.lt.s32.totalorder %s28, 6
      %s366 = scalar_select %p365, %s28, 6
      %s367 = smul.addr %s366, 8
      %s368 = scalar_lea.vmem %s11, %s367
      %p370 = scmp.eq.s32.totalorder %s28, 0
      // Predicated region
      $region61: #{_forward_core.5} parent=59 // pred_check
        %p371 = pneg %p370
      $region62: #{_forward_core.5} parent=59 // pred_check_branch
        %373 = sbr.rel (%p371) target = $region64
      $region63: #{_forward_core.5} parent=59 // pred_region
        %v374 = vld [vmem:[%s3] sm:$0xff]
        %v375 = vld [vmem:[%s3 + $0x8] sm:$0xff]
        %376 = vst [vmem:[#allocation2] sm:$0xff] %v374
        %377 = vst [vmem:[#allocation2 + $0x8] sm:$0xff] %v375
        %v378 = vld [vmem:[%s4] sm:$0xff]
        %v379 = vld [vmem:[%s4 + $0x8] sm:$0xff]
        %380 = vst [vmem:[#allocation3] sm:$0xff] %v378
        %381 = vst [vmem:[#allocation3 + $0x8] sm:$0xff] %v379
        %v382 = vld [vmem:[%s1] sm:$0xff]
        %383 = vst [vmem:[#allocation4] sm:$0xff] %v382
      $region64: #{_forward_core.5} parent=59 // pred_fallthru
        _
      %v384 = vld [vmem:[#allocation4] sm:$0xff]
      %v385 = vpack.c.bf16 %v384, %v384
      %v386 = vld [vmem:[%s5] sm:$0xff]
      %v387 = vld [vmem:[%s5 + $0x8] sm:$0xff]
      %v388 = vld [vmem:[%s5 + $0x10] sm:$0xff]
      %v389 = vld [vmem:[%s5 + $0x18] sm:$0xff]
      %v390 = vld [vmem:[%s5 + $0x20] sm:$0xff]
      %v391 = vld [vmem:[%s5 + $0x28] sm:$0xff]
      %v392 = vld [vmem:[%s5 + $0x30] sm:$0xff]
      %v393 = vld [vmem:[%s5 + $0x38] sm:$0xff]
      %v394 = vld [vmem:[%s5 + $0x40] sm:$0xff]
      %v395 = vld [vmem:[%s5 + $0x48] sm:$0xff]
      %v396 = vld [vmem:[%s5 + $0x50] sm:$0xff]
      %v397 = vld [vmem:[%s5 + $0x58] sm:$0xff]
      %v398 = vld [vmem:[%s5 + $0x60] sm:$0xff]
      %v399 = vld [vmem:[%s5 + $0x68] sm:$0xff]
      %v400 = vld [vmem:[%s5 + $0x70] sm:$0xff]
      %v401 = vld [vmem:[%s5 + $0x78] sm:$0xff]
      %v402 = vld [vmem:[%s5 + $0x80] sm:$0xff]
      %v403 = vld [vmem:[%s5 + $0x88] sm:$0xff]
      %v404 = vld [vmem:[%s5 + $0x90] sm:$0xff]
      %v405 = vld [vmem:[%s5 + $0x98] sm:$0xff]
      %v406 = vld [vmem:[%s5 + $0xa0] sm:$0xff]
      %v407 = vld [vmem:[%s5 + $0xa8] sm:$0xff]
      %v408 = vld [vmem:[%s5 + $0xb0] sm:$0xff]
      %v409 = vld [vmem:[%s5 + $0xb8] sm:$0xff]
      %v410 = vld [vmem:[%s5 + $0xc0] sm:$0xff]
      %v411 = vld [vmem:[%s5 + $0xc8] sm:$0xff]
      %v412 = vld [vmem:[%s5 + $0xd0] sm:$0xff]
      %v413 = vld [vmem:[%s5 + $0xd8] sm:$0xff]
      %v414 = vld [vmem:[%s5 + $0xe0] sm:$0xff]
      %v415 = vld [vmem:[%s5 + $0xe8] sm:$0xff]
      %v416 = vld [vmem:[%s5 + $0xf0] sm:$0xff]
      %v417 = vld [vmem:[%s5 + $0xf8] sm:$0xff]
      %v418 = vld [vmem:[#allocation2] sm:$0xff]
      %v419 = vpack.c.bf16 %v418, %v418
      %v420 = vld [vmem:[%s6] sm:$0xff]
      %v421 = vld [vmem:[%s6 + $0x8] sm:$0xff]
      %v422 = vld [vmem:[%s6 + $0x10] sm:$0xff]
      %v423 = vld [vmem:[%s6 + $0x18] sm:$0xff]
      %v424 = vld [vmem:[%s6 + $0x20] sm:$0xff]
      %v425 = vld [vmem:[%s6 + $0x28] sm:$0xff]
      %v426 = vld [vmem:[%s6 + $0x30] sm:$0xff]
      %v427 = vld [vmem:[%s6 + $0x38] sm:$0xff]
      %v428 = vld [vmem:[%s6 + $0x40] sm:$0xff]
      %v429 = vld [vmem:[%s6 + $0x48] sm:$0xff]
      %v430 = vld [vmem:[%s6 + $0x50] sm:$0xff]
      %v431 = vld [vmem:[%s6 + $0x58] sm:$0xff]
      %v432 = vld [vmem:[%s6 + $0x60] sm:$0xff]
      %v433 = vld [vmem:[%s6 + $0x68] sm:$0xff]
      %v434 = vld [vmem:[%s6 + $0x70] sm:$0xff]
      %v435 = vld [vmem:[%s6 + $0x78] sm:$0xff]
      %v436 = vld [vmem:[%s6 + $0x80] sm:$0xff]
      %v437 = vld [vmem:[%s6 + $0x88] sm:$0xff]
      %v438 = vld [vmem:[%s6 + $0x90] sm:$0xff]
      %v439 = vld [vmem:[%s6 + $0x98] sm:$0xff]
      %v440 = vld [vmem:[%s6 + $0xa0] sm:$0xff]
      %v441 = vld [vmem:[%s6 + $0xa8] sm:$0xff]
      %v442 = vld [vmem:[%s6 + $0xb0] sm:$0xff]
      %v443 = vld [vmem:[%s6 + $0xb8] sm:$0xff]
      %v444 = vld [vmem:[%s6 + $0xc0] sm:$0xff]
      %v445 = vld [vmem:[%s6 + $0xc8] sm:$0xff]
      %v446 = vld [vmem:[%s6 + $0xd0] sm:$0xff]
      %v447 = vld [vmem:[%s6 + $0xd8] sm:$0xff]
      %v448 = vld [vmem:[%s6 + $0xe0] sm:$0xff]
      %v449 = vld [vmem:[%s6 + $0xe8] sm:$0xff]
      %v450 = vld [vmem:[%s6 + $0xf0] sm:$0xff]
      %v451 = vld [vmem:[%s6 + $0xf8] sm:$0xff]
      %v484 = vunpack.c.l.b16 %v420
      %v485 = vunpack.c.h.b16 %v420
      %v486 = vunpack.c.l.b16 %v421
      %v487 = vunpack.c.h.b16 %v421
      %v488 = vunpack.c.l.b16 %v422
      %v489 = vunpack.c.h.b16 %v422
      %v490 = vunpack.c.l.b16 %v423
      %v491 = vunpack.c.h.b16 %v423
      %v492 = vunpack.c.l.b16 %v424
      %v493 = vunpack.c.h.b16 %v424
      %v494 = vunpack.c.l.b16 %v425
      %v495 = vunpack.c.h.b16 %v425
      %v496 = vunpack.c.l.b16 %v426
      %v497 = vunpack.c.h.b16 %v426
      %v498 = vunpack.c.l.b16 %v427
      %v499 = vunpack.c.h.b16 %v427
      %v500 = vunpack.c.l.b16 %v428
      %v501 = vunpack.c.h.b16 %v428
      %v502 = vunpack.c.l.b16 %v429
      %v503 = vunpack.c.h.b16 %v429
      %v504 = vunpack.c.l.b16 %v430
      %v505 = vunpack.c.h.b16 %v430
      %v506 = vunpack.c.l.b16 %v431
      %v507 = vunpack.c.h.b16 %v431
      %v508 = vunpack.c.l.b16 %v432
      %v509 = vunpack.c.h.b16 %v432
      %v510 = vunpack.c.l.b16 %v433
      %v511 = vunpack.c.h.b16 %v433
      %v512 = vunpack.c.l.b16 %v434
      %v513 = vunpack.c.h.b16 %v434
      %v514 = vunpack.c.l.b16 %v435
      %v515 = vunpack.c.h.b16 %v435
      %v516 = vunpack.c.l.b16 %v436
      %v517 = vunpack.c.h.b16 %v436
      %v518 = vunpack.c.l.b16 %v437
      %v519 = vunpack.c.h.b16 %v437
      %v520 = vunpack.c.l.b16 %v438
      %v521 = vunpack.c.h.b16 %v438
      %v522 = vunpack.c.l.b16 %v439
      %v523 = vunpack.c.h.b16 %v439
      %v524 = vunpack.c.l.b16 %v440
      %v525 = vunpack.c.h.b16 %v440
      %v526 = vunpack.c.l.b16 %v441
      %v527 = vunpack.c.h.b16 %v441
      %v528 = vunpack.c.l.b16 %v442
      %v529 = vunpack.c.h.b16 %v442
      %v530 = vunpack.c.l.b16 %v443
      %v531 = vunpack.c.h.b16 %v443
      %v532 = vunpack.c.l.b16 %v444
      %v533 = vunpack.c.h.b16 %v444
      %v534 = vunpack.c.l.b16 %v445
      %v535 = vunpack.c.h.b16 %v445
      %v536 = vunpack.c.l.b16 %v446
      %v537 = vunpack.c.h.b16 %v446
      %v538 = vunpack.c.l.b16 %v447
      %v539 = vunpack.c.h.b16 %v447
      %v540 = vunpack.c.l.b16 %v448
      %v541 = vunpack.c.h.b16 %v448
      %v542 = vunpack.c.l.b16 %v449
      %v543 = vunpack.c.h.b16 %v449
      %v544 = vunpack.c.l.b16 %v450
      %v545 = vunpack.c.h.b16 %v450
      %v546 = vunpack.c.l.b16 %v451
      %v547 = vunpack.c.h.b16 %v451
      %v548 = vpack.c.b16 %v488, %v484
      %v549 = vpack.c.b16 %v489, %v485
      %v550 = vpack.c.b16 %v490, %v486
      %v551 = vpack.c.b16 %v491, %v487
      %v552 = vpack.c.b16 %v496, %v492
      %v553 = vpack.c.b16 %v497, %v493
      %v554 = vpack.c.b16 %v498, %v494
      %v555 = vpack.c.b16 %v499, %v495
      %v556 = vpack.c.b16 %v504, %v500
      %v557 = vpack.c.b16 %v505, %v501
      %v558 = vpack.c.b16 %v506, %v502
      %v559 = vpack.c.b16 %v507, %v503
      %v560 = vpack.c.b16 %v512, %v508
      %v561 = vpack.c.b16 %v513, %v509
      %v562 = vpack.c.b16 %v514, %v510
      %v563 = vpack.c.b16 %v515, %v511
      %v564 = vpack.c.b16 %v520, %v516
      %v565 = vpack.c.b16 %v521, %v517
      %v566 = vpack.c.b16 %v522, %v518
      %v567 = vpack.c.b16 %v523, %v519
      %v568 = vpack.c.b16 %v528, %v524
      %v569 = vpack.c.b16 %v529, %v525
      %v570 = vpack.c.b16 %v530, %v526
      %v571 = vpack.c.b16 %v531, %v527
      %v572 = vpack.c.b16 %v536, %v532
      %v573 = vpack.c.b16 %v537, %v533
      %v574 = vpack.c.b16 %v538, %v534
      %v575 = vpack.c.b16 %v539, %v535
      %v576 = vpack.c.b16 %v544, %v540
      %v577 = vpack.c.b16 %v545, %v541
      %v578 = vpack.c.b16 %v546, %v542
      %v579 = vpack.c.b16 %v547, %v543
      %612 = vmatprep.subr.bf16.mxu0 %v549
      %613 = vmatpush1.bf16.msra.mxu0 %v548
      %614 = vmatprep.subr.bf16.mxu0 %v553
      %615 = vmatpush1.bf16.msra.mxu0 %v552
      %616 = vmatprep.subr.bf16.mxu0 %v557
      %617 = vmatpush1.bf16.msra.mxu0 %v556
      %618 = vmatprep.subr.bf16.mxu0 %v561
      %619 = vmatpush1.bf16.msra.mxu0 %v560
      %620 = vmatprep.subr.bf16.mxu0 %v565
      %621 = vmatpush1.bf16.msra.mxu0 %v564
      %622 = vmatprep.subr.bf16.mxu0 %v569
      %623 = vmatpush1.bf16.msra.mxu0 %v568
      %624 = vmatprep.subr.bf16.mxu0 %v573
      %625 = vmatpush1.bf16.msra.mxu0 %v572
      %626 = vmatprep.subr.bf16.mxu0 %v577
      %627 = vmatpush1.bf16.msra.mxu0 %v576
      %628 = vmatprep.subr.bf16.mxu0 0
      %629 = vmatpush1.bf16.msra.mxu0 0
      %630 = vmatprep.subr.bf16.mxu0 0
      %631 = vmatpush1.bf16.msra.mxu0 0
      %632 = vmatprep.subr.bf16.mxu0 0
      %633 = vmatpush1.bf16.msra.mxu0 0
      %634 = vmatprep.subr.bf16.mxu0 0
      %635 = vmatpush1.bf16.msra.mxu0 0
      %636 = vmatprep.subr.bf16.mxu0 0
      %637 = vmatpush1.bf16.msra.mxu0 0
      %638 = vmatprep.subr.bf16.mxu0 0
      %639 = vmatpush1.bf16.msra.mxu0 0
      %640 = vmatprep.subr.bf16.mxu0 0
      %641 = vmatpush1.bf16.msra.mxu0 0
      %642 = vmatprep.subr.bf16.mxu0 0
      %643 = vmatpush1.bf16.msra.mxu0 0
      %644 = vmatprep.mubr.bf16.mxu0 0
      %645 = vmatmul.mubr.bf16.gmra.mrb[0].mxu0 %v419
      %v646 = vpop.f32.mrb[0].mxu0
      %v647 = vadd.f32 0.0, %v646
      %v648 = vpop.f32.mrb[0].mxu0
      %v649 = vadd.f32 0.0, %v648
      %v650 = vpop.f32.mrb[0].mxu0
      %v651 = vpop.f32.mrb[0].mxu0
      %652 = vdwg.mxu0
      %653 = vmatprep.subr.bf16.mxu0 %v551
      %654 = vmatpush1.bf16.msra.mxu0 %v550
      %655 = vmatprep.subr.bf16.mxu0 %v555
      %656 = vmatpush1.bf16.msra.mxu0 %v554
      %657 = vmatprep.subr.bf16.mxu0 %v559
      %658 = vmatpush1.bf16.msra.mxu0 %v558
      %659 = vmatprep.subr.bf16.mxu0 %v563
      %660 = vmatpush1.bf16.msra.mxu0 %v562
      %661 = vmatprep.subr.bf16.mxu0 %v567
      %662 = vmatpush1.bf16.msra.mxu0 %v566
      %663 = vmatprep.subr.bf16.mxu0 %v571
      %664 = vmatpush1.bf16.msra.mxu0 %v570
      %665 = vmatprep.subr.bf16.mxu0 %v575
      %666 = vmatpush1.bf16.msra.mxu0 %v574
      %667 = vmatprep.subr.bf16.mxu0 %v579
      %668 = vmatpush1.bf16.msra.mxu0 %v578
      %669 = vmatprep.subr.bf16.mxu0 0
      %670 = vmatpush1.bf16.msra.mxu0 0
      %671 = vmatprep.subr.bf16.mxu0 0
      %672 = vmatpush1.bf16.msra.mxu0 0
      %673 = vmatprep.subr.bf16.mxu0 0
      %674 = vmatpush1.bf16.msra.mxu0 0
      %675 = vmatprep.subr.bf16.mxu0 0
      %676 = vmatpush1.bf16.msra.mxu0 0
      %677 = vmatprep.subr.bf16.mxu0 0
      %678 = vmatpush1.bf16.msra.mxu0 0
      %679 = vmatprep.subr.bf16.mxu0 0
      %680 = vmatpush1.bf16.msra.mxu0 0
      %681 = vmatprep.subr.bf16.mxu0 0
      %682 = vmatpush1.bf16.msra.mxu0 0
      %683 = vmatprep.subr.bf16.mxu0 0
      %684 = vmatpush1.bf16.msra.mxu0 0
      %685 = vmatprep.mubr.bf16.mxu0 0
      %686 = vmatmul.mubr.bf16.gmra.mrb[0].mxu0 %v419
      %v687 = vpop.f32.mrb[0].mxu0
      %v688 = vadd.f32 0.0, %v687
      %v689 = vpop.f32.mrb[0].mxu0
      %v690 = vadd.f32 0.0, %v689
      %v691 = vpop.f32.mrb[0].mxu0
      %v692 = vpop.f32.mrb[0].mxu0
      %693 = vdwg.mxu0
      %v726 = vunpack.c.l.b16 %v386
      %v727 = vunpack.c.h.b16 %v386
      %v728 = vunpack.c.l.b16 %v387
      %v729 = vunpack.c.h.b16 %v387
      %v730 = vunpack.c.l.b16 %v388
      %v731 = vunpack.c.h.b16 %v388
      %v732 = vunpack.c.l.b16 %v389
      %v733 = vunpack.c.h.b16 %v389
      %v734 = vunpack.c.l.b16 %v390
      %v735 = vunpack.c.h.b16 %v390
      %v736 = vunpack.c.l.b16 %v391
      %v737 = vunpack.c.h.b16 %v391
      %v738 = vunpack.c.l.b16 %v392
      %v739 = vunpack.c.h.b16 %v392
      %v740 = vunpack.c.l.b16 %v393
      %v741 = vunpack.c.h.b16 %v393
      %v742 = vunpack.c.l.b16 %v394
      %v743 = vunpack.c.h.b16 %v394
      %v744 = vunpack.c.l.b16 %v395
      %v745 = vunpack.c.h.b16 %v395
      %v746 = vunpack.c.l.b16 %v396
      %v747 = vunpack.c.h.b16 %v396
      %v748 = vunpack.c.l.b16 %v397
      %v749 = vunpack.c.h.b16 %v397
      %v750 = vunpack.c.l.b16 %v398
      %v751 = vunpack.c.h.b16 %v398
      %v752 = vunpack.c.l.b16 %v399
      %v753 = vunpack.c.h.b16 %v399
      %v754 = vunpack.c.l.b16 %v400
      %v755 = vunpack.c.h.b16 %v400
      %v756 = vunpack.c.l.b16 %v401
      %v757 = vunpack.c.h.b16 %v401
      %v758 = vunpack.c.l.b16 %v402
      %v759 = vunpack.c.h.b16 %v402
      %v760 = vunpack.c.l.b16 %v403
      %v761 = vunpack.c.h.b16 %v403
      %v762 = vunpack.c.l.b16 %v404
      %v763 = vunpack.c.h.b16 %v404
      %v764 = vunpack.c.l.b16 %v405
      %v765 = vunpack.c.h.b16 %v405
      %v766 = vunpack.c.l.b16 %v406
      %v767 = vunpack.c.h.b16 %v406
      %v768 = vunpack.c.l.b16 %v407
      %v769 = vunpack.c.h.b16 %v407
      %v770 = vunpack.c.l.b16 %v408
      %v771 = vunpack.c.h.b16 %v408
      %v772 = vunpack.c.l.b16 %v409
      %v773 = vunpack.c.h.b16 %v409
      %v774 = vunpack.c.l.b16 %v410
      %v775 = vunpack.c.h.b16 %v410
      %v776 = vunpack.c.l.b16 %v411
      %v777 = vunpack.c.h.b16 %v411
      %v778 = vunpack.c.l.b16 %v412
      %v779 = vunpack.c.h.b16 %v412
      %v780 = vunpack.c.l.b16 %v413
      %v781 = vunpack.c.h.b16 %v413
      %v782 = vunpack.c.l.b16 %v414
      %v783 = vunpack.c.h.b16 %v414
      %v784 = vunpack.c.l.b16 %v415
      %v785 = vunpack.c.h.b16 %v415
      %v786 = vunpack.c.l.b16 %v416
      %v787 = vunpack.c.h.b16 %v416
      %v788 = vunpack.c.l.b16 %v417
      %v789 = vunpack.c.h.b16 %v417
      %v790 = vpack.c.b16 %v730, %v726
      %v791 = vpack.c.b16 %v731, %v727
      %v792 = vpack.c.b16 %v732, %v728
      %v793 = vpack.c.b16 %v733, %v729
      %v794 = vpack.c.b16 %v738, %v734
      %v795 = vpack.c.b16 %v739, %v735
      %v796 = vpack.c.b16 %v740, %v736
      %v797 = vpack.c.b16 %v741, %v737
      %v798 = vpack.c.b16 %v746, %v742
      %v799 = vpack.c.b16 %v747, %v743
      %v800 = vpack.c.b16 %v748, %v744
      %v801 = vpack.c.b16 %v749, %v745
      %v802 = vpack.c.b16 %v754, %v750
      %v803 = vpack.c.b16 %v755, %v751
      %v804 = vpack.c.b16 %v756, %v752
      %v805 = vpack.c.b16 %v757, %v753
      %v806 = vpack.c.b16 %v762, %v758
      %v807 = vpack.c.b16 %v763, %v759
      %v808 = vpack.c.b16 %v764, %v760
      %v809 = vpack.c.b16 %v765, %v761
      %v810 = vpack.c.b16 %v770, %v766
      %v811 = vpack.c.b16 %v771, %v767
      %v812 = vpack.c.b16 %v772, %v768
      %v813 = vpack.c.b16 %v773, %v769
      %v814 = vpack.c.b16 %v778, %v774
      %v815 = vpack.c.b16 %v779, %v775
      %v816 = vpack.c.b16 %v780, %v776
      %v817 = vpack.c.b16 %v781, %v777
      %v818 = vpack.c.b16 %v786, %v782
      %v819 = vpack.c.b16 %v787, %v783
      %v820 = vpack.c.b16 %v788, %v784
      %v821 = vpack.c.b16 %v789, %v785
      %854 = vmatprep.subr.bf16.mxu0 %v791
      %855 = vmatpush1.bf16.msra.mxu0 %v790
      %856 = vmatprep.subr.bf16.mxu0 %v795
      %857 = vmatpush1.bf16.msra.mxu0 %v794
      %858 = vmatprep.subr.bf16.mxu0 %v799
      %859 = vmatpush1.bf16.msra.mxu0 %v798
      %860 = vmatprep.subr.bf16.mxu0 %v803
      %861 = vmatpush1.bf16.msra.mxu0 %v802
      %862 = vmatprep.subr.bf16.mxu0 %v807
      %863 = vmatpush1.bf16.msra.mxu0 %v806
      %864 = vmatprep.subr.bf16.mxu0 %v811
      %865 = vmatpush1.bf16.msra.mxu0 %v810
      %866 = vmatprep.subr.bf16.mxu0 %v815
      %867 = vmatpush1.bf16.msra.mxu0 %v814
      %868 = vmatprep.subr.bf16.mxu0 %v819
      %869 = vmatpush1.bf16.msra.mxu0 %v818
      %870 = vmatprep.subr.bf16.mxu0 0
      %871 = vmatpush1.bf16.msra.mxu0 0
      %872 = vmatprep.subr.bf16.mxu0 0
      %873 = vmatpush1.bf16.msra.mxu0 0
      %874 = vmatprep.subr.bf16.mxu0 0
      %875 = vmatpush1.bf16.msra.mxu0 0
      %876 = vmatprep.subr.bf16.mxu0 0
      %877 = vmatpush1.bf16.msra.mxu0 0
      %878 = vmatprep.subr.bf16.mxu0 0
      %879 = vmatpush1.bf16.msra.mxu0 0
      %880 = vmatprep.subr.bf16.mxu0 0
      %881 = vmatpush1.bf16.msra.mxu0 0
      %882 = vmatprep.subr.bf16.mxu0 0
      %883 = vmatpush1.bf16.msra.mxu0 0
      %884 = vmatprep.subr.bf16.mxu0 0
      %885 = vmatpush1.bf16.msra.mxu0 0
      %886 = vmatprep.mubr.bf16.mxu0 0
      %887 = vmatmul.mubr.bf16.gmra.mrb[0].mxu0 %v385
      %v888 = vpop.f32.mrb[0].mxu0
      %v889 = vadd.f32 %v647, %v888
      %v890 = vpop.f32.mrb[0].mxu0
      %v891 = vadd.f32 %v649, %v890
      %v892 = vpop.f32.mrb[0].mxu0
      %v893 = vpop.f32.mrb[0].mxu0
      %894 = vdwg.mxu0
      %895 = vmatprep.subr.bf16.mxu0 %v793
      %896 = vmatpush1.bf16.msra.mxu0 %v792
      %897 = vmatprep.subr.bf16.mxu0 %v797
      %898 = vmatpush1.bf16.msra.mxu0 %v796
      %899 = vmatprep.subr.bf16.mxu0 %v801
      %900 = vmatpush1.bf16.msra.mxu0 %v800
      %901 = vmatprep.subr.bf16.mxu0 %v805
      %902 = vmatpush1.bf16.msra.mxu0 %v804
      %903 = vmatprep.subr.bf16.mxu0 %v809
      %904 = vmatpush1.bf16.msra.mxu0 %v808
      %905 = vmatprep.subr.bf16.mxu0 %v813
      %906 = vmatpush1.bf16.msra.mxu0 %v812
      %907 = vmatprep.subr.bf16.mxu0 %v817
      %908 = vmatpush1.bf16.msra.mxu0 %v816
      %909 = vmatprep.subr.bf16.mxu0 %v821
      %910 = vmatpush1.bf16.msra.mxu0 %v820
      %911 = vmatprep.subr.bf16.mxu0 0
      %912 = vmatpush1.bf16.msra.mxu0 0
      %913 = vmatprep.subr.bf16.mxu0 0
      %914 = vmatpush1.bf16.msra.mxu0 0
      %915 = vmatprep.subr.bf16.mxu0 0
      %916 = vmatpush1.bf16.msra.mxu0 0
      %917 = vmatprep.subr.bf16.mxu0 0
      %918 = vmatpush1.bf16.msra.mxu0 0
      %919 = vmatprep.subr.bf16.mxu0 0
      %920 = vmatpush1.bf16.msra.mxu0 0
      %921 = vmatprep.subr.bf16.mxu0 0
      %922 = vmatpush1.bf16.msra.mxu0 0
      %923 = vmatprep.subr.bf16.mxu0 0
      %924 = vmatpush1.bf16.msra.mxu0 0
      %925 = vmatprep.subr.bf16.mxu0 0
      %926 = vmatpush1.bf16.msra.mxu0 0
      %927 = vmatprep.mubr.bf16.mxu0 0
      %928 = vmatmul.mubr.bf16.gmra.mrb[0].mxu0 %v385
      %v929 = vpop.f32.mrb[0].mxu0
      %v930 = vadd.f32 %v688, %v929
      %v931 = vpop.f32.mrb[0].mxu0
      %v932 = vadd.f32 %v690, %v931
      %v933 = vpop.f32.mrb[0].mxu0
      %v934 = vpop.f32.mrb[0].mxu0
      %935 = vdwg.mxu0
      %v936 = vld [vmem:[%s7] sm:$0xf]
      %v938 = vlaneseq
      %v939 = vshrl.u32 %v938, 7
      %v940 = vsub.s32 0, %v939
      %v941 = vrot.slane %v936, %v940
      %v942 = vlaneseq
      %v943 = vshrl.u32 %v942, 7
      %v944 = vsub.s32 1, %v943
      %v945 = vrot.slane %v936, %v944
      %v946 = vlaneseq
      %v947 = vshrl.u32 %v946, 7
      %v948 = vsub.s32 2, %v947
      %v949 = vrot.slane %v936, %v948
      %v950 = vlaneseq
      %v951 = vshrl.u32 %v950, 7
      %v952 = vsub.s32 3, %v951
      %v953 = vrot.slane %v936, %v952
      %v958 = vadd.f32 %v889, %v941
      %v959 = vadd.f32 %v891, %v945
      %v960 = vadd.f32 %v930, %v949
      %v961 = vadd.f32 %v932, %v953
      %v962 = vld [vmem:[#allocation3] sm:$0xff]
      %v963 = vxor.u32 %v958, 2147483648
      %v964 = vmul.f32 %v963, 1.442695
      %v965 = vpow.pop %v964
      %v966 = vadd.f32 %v965, 1.0
      %v967 = vrcp.pop %v966
      %v968 = vmul.f32 1.0, %v967
      %v969 = vxor.u32 %v959, 2147483648
      %v970 = vmul.f32 %v969, 1.442695
      %v971 = vpow.pop %v970
      %v972 = vadd.f32 %v971, 1.0
      %v973 = vrcp.pop %v972
      %v974 = vmul.f32 1.0, %v973
      %v975 = vtanh.pop %v960
      %v976 = vxor.u32 %v961, 2147483648
      %v977 = vmul.f32 %v976, 1.442695
      %v978 = vpow.pop %v977
      %v979 = vadd.f32 %v978, 1.0
      %v980 = vrcp.pop %v979
      %v981 = vmul.f32 1.0, %v980
      %v982 = vmul.f32 %v974, %v962
      %v983 = vmul.f32 %v968, %v975
      %v984 = vadd.f32 %v982, %v983
      %v985 = vtanh.pop %v984
      %v986 = vmul.f32 %v981, %v985
      %987 = vst [vmem:[#allocation2] sm:$0xff] %v986
      %988 = vst [vmem:[#allocation3] sm:$0xff] %v984
      %v989 = vpack.c.bf16 %v986, %v986
      %s990 = scalar_lea.vmem %s5, 256
      %v991 = vld [vmem:[%s990] sm:$0xff]
      %v992 = vld [vmem:[%s990 + $0x8] sm:$0xff]
      %v993 = vld [vmem:[%s990 + $0x10] sm:$0xff]
      %v994 = vld [vmem:[%s990 + $0x18] sm:$0xff]
      %v995 = vld [vmem:[%s990 + $0x20] sm:$0xff]
      %v996 = vld [vmem:[%s990 + $0x28] sm:$0xff]
      %v997 = vld [vmem:[%s990 + $0x30] sm:$0xff]
      %v998 = vld [vmem:[%s990 + $0x38] sm:$0xff]
      %v999 = vld [vmem:[%s990 + $0x40] sm:$0xff]
      %v1000 = vld [vmem:[%s990 + $0x48] sm:$0xff]
      %v1001 = vld [vmem:[%s990 + $0x50] sm:$0xff]
      %v1002 = vld [vmem:[%s990 + $0x58] sm:$0xff]
      %v1003 = vld [vmem:[%s990 + $0x60] sm:$0xff]
      %v1004 = vld [vmem:[%s990 + $0x68] sm:$0xff]
      %v1005 = vld [vmem:[%s990 + $0x70] sm:$0xff]
      %v1006 = vld [vmem:[%s990 + $0x78] sm:$0xff]
      %v1007 = vld [vmem:[%s990 + $0x80] sm:$0xff]
      %v1008 = vld [vmem:[%s990 + $0x88] sm:$0xff]
      %v1009 = vld [vmem:[%s990 + $0x90] sm:$0xff]
      %v1010 = vld [vmem:[%s990 + $0x98] sm:$0xff]
      %v1011 = vld [vmem:[%s990 + $0xa0] sm:$0xff]
      %v1012 = vld [vmem:[%s990 + $0xa8] sm:$0xff]
      %v1013 = vld [vmem:[%s990 + $0xb0] sm:$0xff]
      %v1014 = vld [vmem:[%s990 + $0xb8] sm:$0xff]
      %v1015 = vld [vmem:[%s990 + $0xc0] sm:$0xff]
      %v1016 = vld [vmem:[%s990 + $0xc8] sm:$0xff]
      %v1017 = vld [vmem:[%s990 + $0xd0] sm:$0xff]
      %v1018 = vld [vmem:[%s990 + $0xd8] sm:$0xff]
      %v1019 = vld [vmem:[%s990 + $0xe0] sm:$0xff]
      %v1020 = vld [vmem:[%s990 + $0xe8] sm:$0xff]
      %v1021 = vld [vmem:[%s990 + $0xf0] sm:$0xff]
      %v1022 = vld [vmem:[%s990 + $0xf8] sm:$0xff]
      %s1023 = scalar_lea.vmem [#allocation2], 8
      %v1024 = vld [vmem:[%s1023] sm:$0xff]
      %v1025 = vpack.c.bf16 %v1024, %v1024
      %s1026 = scalar_lea.vmem %s6, 256
      %v1027 = vld [vmem:[%s1026] sm:$0xff]
      %v1028 = vld [vmem:[%s1026 + $0x8] sm:$0xff]
      %v1029 = vld [vmem:[%s1026 + $0x10] sm:$0xff]
      %v1030 = vld [vmem:[%s1026 + $0x18] sm:$0xff]
      %v1031 = vld [vmem:[%s1026 + $0x20] sm:$0xff]
      %v1032 = vld [vmem:[%s1026 + $0x28] sm:$0xff]
      %v1033 = vld [vmem:[%s1026 + $0x30] sm:$0xff]
      %v1034 = vld [vmem:[%s1026 + $0x38] sm:$0xff]
      %v1035 = vld [vmem:[%s1026 + $0x40] sm:$0xff]
      %v1036 = vld [vmem:[%s1026 + $0x48] sm:$0xff]
      %v1037 = vld [vmem:[%s1026 + $0x50] sm:$0xff]
      %v1038 = vld [vmem:[%s1026 + $0x58] sm:$0xff]
      %v1039 = vld [vmem:[%s1026 + $0x60] sm:$0xff]
      %v1040 = vld [vmem:[%s1026 + $0x68] sm:$0xff]
      %v1041 = vld [vmem:[%s1026 + $0x70] sm:$0xff]
      %v1042 = vld [vmem:[%s1026 + $0x78] sm:$0xff]
      %v1043 = vld [vmem:[%s1026 + $0x80] sm:$0xff]
      %v1044 = vld [vmem:[%s1026 + $0x88] sm:$0xff]
      %v1045 = vld [vmem:[%s1026 + $0x90] sm:$0xff]
      %v1046 = vld [vmem:[%s1026 + $0x98] sm:$0xff]
      %v1047 = vld [vmem:[%s1026 + $0xa0] sm:$0xff]
      %v1048 = vld [vmem:[%s1026 + $0xa8] sm:$0xff]
      %v1049 = vld [vmem:[%s1026 + $0xb0] sm:$0xff]
      %v1050 = vld [vmem:[%s1026 + $0xb8] sm:$0xff]
      %v1051 = vld [vmem:[%s1026 + $0xc0] sm:$0xff]
      %v1052 = vld [vmem:[%s1026 + $0xc8] sm:$0xff]
      %v1053 = vld [vmem:[%s1026 + $0xd0] sm:$0xff]
      %v1054 = vld [vmem:[%s1026 + $0xd8] sm:$0xff]
      %v1055 = vld [vmem:[%s1026 + $0xe0] sm:$0xff]
      %v1056 = vld [vmem:[%s1026 + $0xe8] sm:$0xff]
      %v1057 = vld [vmem:[%s1026 + $0xf0] sm:$0xff]
      %v1058 = vld [vmem:[%s1026 + $0xf8] sm:$0xff]
      %v1091 = vunpack.c.l.b16 %v1027
      %v1092 = vunpack.c.h.b16 %v1027
      %v1093 = vunpack.c.l.b16 %v1028
      %v1094 = vunpack.c.h.b16 %v1028
      %v1095 = vunpack.c.l.b16 %v1029
      %v1096 = vunpack.c.h.b16 %v1029
      %v1097 = vunpack.c.l.b16 %v1030
      %v1098 = vunpack.c.h.b16 %v1030
      %v1099 = vunpack.c.l.b16 %v1031
      %v1100 = vunpack.c.h.b16 %v1031
      %v1101 = vunpack.c.l.b16 %v1032
      %v1102 = vunpack.c.h.b16 %v1032
      %v1103 = vunpack.c.l.b16 %v1033
      %v1104 = vunpack.c.h.b16 %v1033
      %v1105 = vunpack.c.l.b16 %v1034
      %v1106 = vunpack.c.h.b16 %v1034
      %v1107 = vunpack.c.l.b16 %v1035
      %v1108 = vunpack.c.h.b16 %v1035
      %v1109 = vunpack.c.l.b16 %v1036
      %v1110 = vunpack.c.h.b16 %v1036
      %v1111 = vunpack.c.l.b16 %v1037
      %v1112 = vunpack.c.h.b16 %v1037
      %v1113 = vunpack.c.l.b16 %v1038
      %v1114 = vunpack.c.h.b16 %v1038
      %v1115 = vunpack.c.l.b16 %v1039
      %v1116 = vunpack.c.h.b16 %v1039
      %v1117 = vunpack.c.l.b16 %v1040
      %v1118 = vunpack.c.h.b16 %v1040
      %v1119 = vunpack.c.l.b16 %v1041
      %v1120 = vunpack.c.h.b16 %v1041
      %v1121 = vunpack.c.l.b16 %v1042
      %v1122 = vunpack.c.h.b16 %v1042
      %v1123 = vunpack.c.l.b16 %v1043
      %v1124 = vunpack.c.h.b16 %v1043
      %v1125 = vunpack.c.l.b16 %v1044
      %v1126 = vunpack.c.h.b16 %v1044
      %v1127 = vunpack.c.l.b16 %v1045
      %v1128 = vunpack.c.h.b16 %v1045
      %v1129 = vunpack.c.l.b16 %v1046
      %v1130 = vunpack.c.h.b16 %v1046
      %v1131 = vunpack.c.l.b16 %v1047
      %v1132 = vunpack.c.h.b16 %v1047
      %v1133 = vunpack.c.l.b16 %v1048
      %v1134 = vunpack.c.h.b16 %v1048
      %v1135 = vunpack.c.l.b16 %v1049
      %v1136 = vunpack.c.h.b16 %v1049
      %v1137 = vunpack.c.l.b16 %v1050
      %v1138 = vunpack.c.h.b16 %v1050
      %v1139 = vunpack.c.l.b16 %v1051
      %v1140 = vunpack.c.h.b16 %v1051
      %v1141 = vunpack.c.l.b16 %v1052
      %v1142 = vunpack.c.h.b16 %v1052
      %v1143 = vunpack.c.l.b16 %v1053
      %v1144 = vunpack.c.h.b16 %v1053
      %v1145 = vunpack.c.l.b16 %v1054
      %v1146 = vunpack.c.h.b16 %v1054
      %v1147 = vunpack.c.l.b16 %v1055
      %v1148 = vunpack.c.h.b16 %v1055
      %v1149 = vunpack.c.l.b16 %v1056
      %v1150 = vunpack.c.h.b16 %v1056
      %v1151 = vunpack.c.l.b16 %v1057
      %v1152 = vunpack.c.h.b16 %v1057
      %v1153 = vunpack.c.l.b16 %v1058
      %v1154 = vunpack.c.h.b16 %v1058
      %v1155 = vpack.c.b16 %v1095, %v1091
      %v1156 = vpack.c.b16 %v1096, %v1092
      %v1157 = vpack.c.b16 %v1097, %v1093
      %v1158 = vpack.c.b16 %v1098, %v1094
      %v1159 = vpack.c.b16 %v1103, %v1099
      %v1160 = vpack.c.b16 %v1104, %v1100
      %v1161 = vpack.c.b16 %v1105, %v1101
      %v1162 = vpack.c.b16 %v1106, %v1102
      %v1163 = vpack.c.b16 %v1111, %v1107
      %v1164 = vpack.c.b16 %v1112, %v1108
      %v1165 = vpack.c.b16 %v1113, %v1109
      %v1166 = vpack.c.b16 %v1114, %v1110
      %v1167 = vpack.c.b16 %v1119, %v1115
      %v1168 = vpack.c.b16 %v1120, %v1116
      %v1169 = vpack.c.b16 %v1121, %v1117
      %v1170 = vpack.c.b16 %v1122, %v1118
      %v1171 = vpack.c.b16 %v1127, %v1123
      %v1172 = vpack.c.b16 %v1128, %v1124
      %v1173 = vpack.c.b16 %v1129, %v1125
      %v1174 = vpack.c.b16 %v1130, %v1126
      %v1175 = vpack.c.b16 %v1135, %v1131
      %v1176 = vpack.c.b16 %v1136, %v1132
      %v1177 = vpack.c.b16 %v1137, %v1133
      %v1178 = vpack.c.b16 %v1138, %v1134
      %v1179 = vpack.c.b16 %v1143, %v1139
      %v1180 = vpack.c.b16 %v1144, %v1140
      %v1181 = vpack.c.b16 %v1145, %v1141
      %v1182 = vpack.c.b16 %v1146, %v1142
      %v1183 = vpack.c.b16 %v1151, %v1147
      %v1184 = vpack.c.b16 %v1152, %v1148
      %v1185 = vpack.c.b16 %v1153, %v1149
      %v1186 = vpack.c.b16 %v1154, %v1150
      %1219 = vmatprep.subr.bf16.mxu0 %v1156
      %1220 = vmatpush1.bf16.msra.mxu0 %v1155
      %1221 = vmatprep.subr.bf16.mxu0 %v1160
      %1222 = vmatpush1.bf16.msra.mxu0 %v1159
      %1223 = vmatprep.subr.bf16.mxu0 %v1164
      %1224 = vmatpush1.bf16.msra.mxu0 %v1163
      %1225 = vmatprep.subr.bf16.mxu0 %v1168
      %1226 = vmatpush1.bf16.msra.mxu0 %v1167
      %1227 = vmatprep.subr.bf16.mxu0 %v1172
      %1228 = vmatpush1.bf16.msra.mxu0 %v1171
      %1229 = vmatprep.subr.bf16.mxu0 %v1176
      %1230 = vmatpush1.bf16.msra.mxu0 %v1175
      %1231 = vmatprep.subr.bf16.mxu0 %v1180
      %1232 = vmatpush1.bf16.msra.mxu0 %v1179
      %1233 = vmatprep.subr.bf16.mxu0 %v1184
      %1234 = vmatpush1.bf16.msra.mxu0 %v1183
      %1235 = vmatprep.subr.bf16.mxu0 0
      %1236 = vmatpush1.bf16.msra.mxu0 0
      %1237 = vmatprep.subr.bf16.mxu0 0
      %1238 = vmatpush1.bf16.msra.mxu0 0
      %1239 = vmatprep.subr.bf16.mxu0 0
      %1240 = vmatpush1.bf16.msra.mxu0 0
      %1241 = vmatprep.subr.bf16.mxu0 0
      %1242 = vmatpush1.bf16.msra.mxu0 0
      %1243 = vmatprep.subr.bf16.mxu0 0
      %1244 = vmatpush1.bf16.msra.mxu0 0
      %1245 = vmatprep.subr.bf16.mxu0 0
      %1246 = vmatpush1.bf16.msra.mxu0 0
      %1247 = vmatprep.subr.bf16.mxu0 0
      %1248 = vmatpush1.bf16.msra.mxu0 0
      %1249 = vmatprep.subr.bf16.mxu0 0
      %1250 = vmatpush1.bf16.msra.mxu0 0
      %1251 = vmatprep.mubr.bf16.mxu0 0
      %1252 = vmatmul.mubr.bf16.gmra.mrb[0].mxu0 %v1025
      %v1253 = vpop.f32.mrb[0].mxu0
      %v1254 = vadd.f32 0.0, %v1253
      %v1255 = vpop.f32.mrb[0].mxu0
      %v1256 = vadd.f32 0.0, %v1255
      %v1257 = vpop.f32.mrb[0].mxu0
      %v1258 = vpop.f32.mrb[0].mxu0
      %1259 = vdwg.mxu0
      %1260 = vmatprep.subr.bf16.mxu0 %v1158
      %1261 = vmatpush1.bf16.msra.mxu0 %v1157
      %1262 = vmatprep.subr.bf16.mxu0 %v1162
      %1263 = vmatpush1.bf16.msra.mxu0 %v1161
      %1264 = vmatprep.subr.bf16.mxu0 %v1166
      %1265 = vmatpush1.bf16.msra.mxu0 %v1165
      %1266 = vmatprep.subr.bf16.mxu0 %v1170
      %1267 = vmatpush1.bf16.msra.mxu0 %v1169
      %1268 = vmatprep.subr.bf16.mxu0 %v1174
      %1269 = vmatpush1.bf16.msra.mxu0 %v1173
      %1270 = vmatprep.subr.bf16.mxu0 %v1178
      %1271 = vmatpush1.bf16.msra.mxu0 %v1177
      %1272 = vmatprep.subr.bf16.mxu0 %v1182
      %1273 = vmatpush1.bf16.msra.mxu0 %v1181
      %1274 = vmatprep.subr.bf16.mxu0 %v1186
      %1275 = vmatpush1.bf16.msra.mxu0 %v1185
      %1276 = vmatprep.subr.bf16.mxu0 0
      %1277 = vmatpush1.bf16.msra.mxu0 0
      %1278 = vmatprep.subr.bf16.mxu0 0
      %1279 = vmatpush1.bf16.msra.mxu0 0
      %1280 = vmatprep.subr.bf16.mxu0 0
      %1281 = vmatpush1.bf16.msra.mxu0 0
      %1282 = vmatprep.subr.bf16.mxu0 0
      %1283 = vmatpush1.bf16.msra.mxu0 0
      %1284 = vmatprep.subr.bf16.mxu0 0
      %1285 = vmatpush1.bf16.msra.mxu0 0
      %1286 = vmatprep.subr.bf16.mxu0 0
      %1287 = vmatpush1.bf16.msra.mxu0 0
      %1288 = vmatprep.subr.bf16.mxu0 0
      %1289 = vmatpush1.bf16.msra.mxu0 0
      %1290 = vmatprep.subr.bf16.mxu0 0
      %1291 = vmatpush1.bf16.msra.mxu0 0
      %1292 = vmatprep.mubr.bf16.mxu0 0
      %1293 = vmatmul.mubr.bf16.gmra.mrb[0].mxu0 %v1025
      %v1294 = vpop.f32.mrb[0].mxu0
      %v1295 = vadd.f32 0.0, %v1294
      %v1296 = vpop.f32.mrb[0].mxu0
      %v1297 = vadd.f32 0.0, %v1296
      %v1298 = vpop.f32.mrb[0].mxu0
      %v1299 = vpop.f32.mrb[0].mxu0
      %1300 = vdwg.mxu0
      %v1333 = vunpack.c.l.b16 %v991
      %v1334 = vunpack.c.h.b16 %v991
      %v1335 = vunpack.c.l.b16 %v992
      %v1336 = vunpack.c.h.b16 %v992
      %v1337 = vunpack.c.l.b16 %v993
      %v1338 = vunpack.c.h.b16 %v993
      %v1339 = vunpack.c.l.b16 %v994
      %v1340 = vunpack.c.h.b16 %v994
      %v1341 = vunpack.c.l.b16 %v995
      %v1342 = vunpack.c.h.b16 %v995
      %v1343 = vunpack.c.l.b16 %v996
      %v1344 = vunpack.c.h.b16 %v996
      %v1345 = vunpack.c.l.b16 %v997
      %v1346 = vunpack.c.h.b16 %v997
      %v1347 = vunpack.c.l.b16 %v998
      %v1348 = vunpack.c.h.b16 %v998
      %v1349 = vunpack.c.l.b16 %v999
      %v1350 = vunpack.c.h.b16 %v999
      %v1351 = vunpack.c.l.b16 %v1000
      %v1352 = vunpack.c.h.b16 %v1000
      %v1353 = vunpack.c.l.b16 %v1001
      %v1354 = vunpack.c.h.b16 %v1001
      %v1355 = vunpack.c.l.b16 %v1002
      %v1356 = vunpack.c.h.b16 %v1002
      %v1357 = vunpack.c.l.b16 %v1003
      %v1358 = vunpack.c.h.b16 %v1003
      %v1359 = vunpack.c.l.b16 %v1004
      %v1360 = vunpack.c.h.b16 %v1004
      %v1361 = vunpack.c.l.b16 %v1005
      %v1362 = vunpack.c.h.b16 %v1005
      %v1363 = vunpack.c.l.b16 %v1006
      %v1364 = vunpack.c.h.b16 %v1006
      %v1365 = vunpack.c.l.b16 %v1007
      %v1366 = vunpack.c.h.b16 %v1007
      %v1367 = vunpack.c.l.b16 %v1008
      %v1368 = vunpack.c.h.b16 %v1008
      %v1369 = vunpack.c.l.b16 %v1009
      %v1370 = vunpack.c.h.b16 %v1009
      %v1371 = vunpack.c.l.b16 %v1010
      %v1372 = vunpack.c.h.b16 %v1010
      %v1373 = vunpack.c.l.b16 %v1011
      %v1374 = vunpack.c.h.b16 %v1011
      %v1375 = vunpack.c.l.b16 %v1012
      %v1376 = vunpack.c.h.b16 %v1012
      %v1377 = vunpack.c.l.b16 %v1013
      %v1378 = vunpack.c.h.b16 %v1013
      %v1379 = vunpack.c.l.b16 %v1014
      %v1380 = vunpack.c.h.b16 %v1014
      %v1381 = vunpack.c.l.b16 %v1015
      %v1382 = vunpack.c.h.b16 %v1015
      %v1383 = vunpack.c.l.b16 %v1016
      %v1384 = vunpack.c.h.b16 %v1016
      %v1385 = vunpack.c.l.b16 %v1017
      %v1386 = vunpack.c.h.b16 %v1017
      %v1387 = vunpack.c.l.b16 %v1018
      %v1388 = vunpack.c.h.b16 %v1018
      %v1389 = vunpack.c.l.b16 %v1019
      %v1390 = vunpack.c.h.b16 %v1019
      %v1391 = vunpack.c.l.b16 %v1020
      %v1392 = vunpack.c.h.b16 %v1020
      %v1393 = vunpack.c.l.b16 %v1021
      %v1394 = vunpack.c.h.b16 %v1021
      %v1395 = vunpack.c.l.b16 %v1022
      %v1396 = vunpack.c.h.b16 %v1022
      %v1397 = vpack.c.b16 %v1337, %v1333
      %v1398 = vpack.c.b16 %v1338, %v1334
      %v1399 = vpack.c.b16 %v1339, %v1335
      %v1400 = vpack.c.b16 %v1340, %v1336
      %v1401 = vpack.c.b16 %v1345, %v1341
      %v1402 = vpack.c.b16 %v1346, %v1342
      %v1403 = vpack.c.b16 %v1347, %v1343
      %v1404 = vpack.c.b16 %v1348, %v1344
      %v1405 = vpack.c.b16 %v1353, %v1349
      %v1406 = vpack.c.b16 %v1354, %v1350
      %v1407 = vpack.c.b16 %v1355, %v1351
      %v1408 = vpack.c.b16 %v1356, %v1352
      %v1409 = vpack.c.b16 %v1361, %v1357
      %v1410 = vpack.c.b16 %v1362, %v1358
      %v1411 = vpack.c.b16 %v1363, %v1359
      %v1412 = vpack.c.b16 %v1364, %v1360
      %v1413 = vpack.c.b16 %v1369, %v1365
      %v1414 = vpack.c.b16 %v1370, %v1366
      %v1415 = vpack.c.b16 %v1371, %v1367
      %v1416 = vpack.c.b16 %v1372, %v1368
      %v1417 = vpack.c.b16 %v1377, %v1373
      %v1418 = vpack.c.b16 %v1378, %v1374
      %v1419 = vpack.c.b16 %v1379, %v1375
      %v1420 = vpack.c.b16 %v1380, %v1376
      %v1421 = vpack.c.b16 %v1385, %v1381
      %v1422 = vpack.c.b16 %v1386, %v1382
      %v1423 = vpack.c.b16 %v1387, %v1383
      %v1424 = vpack.c.b16 %v1388, %v1384
      %v1425 = vpack.c.b16 %v1393, %v1389
      %v1426 = vpack.c.b16 %v1394, %v1390
      %v1427 = vpack.c.b16 %v1395, %v1391
      %v1428 = vpack.c.b16 %v1396, %v1392
      %1461 = vmatprep.subr.bf16.mxu0 %v1398
      %1462 = vmatpush1.bf16.msra.mxu0 %v1397
      %1463 = vmatprep.subr.bf16.mxu0 %v1402
      %1464 = vmatpush1.bf16.msra.mxu0 %v1401
      %1465 = vmatprep.subr.bf16.mxu0 %v1406
      %1466 = vmatpush1.bf16.msra.mxu0 %v1405
      %1467 = vmatprep.subr.bf16.mxu0 %v1410
      %1468 = vmatpush1.bf16.msra.mxu0 %v1409
      %1469 = vmatprep.subr.bf16.mxu0 %v1414
      %1470 = vmatpush1.bf16.msra.mxu0 %v1413
      %1471 = vmatprep.subr.bf16.mxu0 %v1418
      %1472 = vmatpush1.bf16.msra.mxu0 %v1417
      %1473 = vmatprep.subr.bf16.mxu0 %v1422
      %1474 = vmatpush1.bf16.msra.mxu0 %v1421
      %1475 = vmatprep.subr.bf16.mxu0 %v1426
      %1476 = vmatpush1.bf16.msra.mxu0 %v1425
      %1477 = vmatprep.subr.bf16.mxu0 0
      %1478 = vmatpush1.bf16.msra.mxu0 0
      %1479 = vmatprep.subr.bf16.mxu0 0
      %1480 = vmatpush1.bf16.msra.mxu0 0
      %1481 = vmatprep.subr.bf16.mxu0 0
      %1482 = vmatpush1.bf16.msra.mxu0 0
      %1483 = vmatprep.subr.bf16.mxu0 0
      %1484 = vmatpush1.bf16.msra.mxu0 0
      %1485 = vmatprep.subr.bf16.mxu0 0
      %1486 = vmatpush1.bf16.msra.mxu0 0
      %1487 = vmatprep.subr.bf16.mxu0 0
      %1488 = vmatpush1.bf16.msra.mxu0 0
      %1489 = vmatprep.subr.bf16.mxu0 0
      %1490 = vmatpush1.bf16.msra.mxu0 0
      %1491 = vmatprep.subr.bf16.mxu0 0
      %1492 = vmatpush1.bf16.msra.mxu0 0
      %1493 = vmatprep.mubr.bf16.mxu0 0
      %1494 = vmatmul.mubr.bf16.gmra.mrb[0].mxu0 %v989
      %v1495 = vpop.f32.mrb[0].mxu0
      %v1496 = vadd.f32 %v1254, %v1495
      %v1497 = vpop.f32.mrb[0].mxu0
      %v1498 = vadd.f32 %v1256, %v1497
      %v1499 = vpop.f32.mrb[0].mxu0
      %v1500 = vpop.f32.mrb[0].mxu0
      %1501 = vdwg.mxu0
      %1502 = vmatprep.subr.bf16.mxu0 %v1400
      %1503 = vmatpush1.bf16.msra.mxu0 %v1399
      %1504 = vmatprep.subr.bf16.mxu0 %v1404
      %1505 = vmatpush1.bf16.msra.mxu0 %v1403
      %1506 = vmatprep.subr.bf16.mxu0 %v1408
      %1507 = vmatpush1.bf16.msra.mxu0 %v1407
      %1508 = vmatprep.subr.bf16.mxu0 %v1412
      %1509 = vmatpush1.bf16.msra.mxu0 %v1411
      %1510 = vmatprep.subr.bf16.mxu0 %v1416
      %1511 = vmatpush1.bf16.msra.mxu0 %v1415
      %1512 = vmatprep.subr.bf16.mxu0 %v1420
      %1513 = vmatpush1.bf16.msra.mxu0 %v1419
      %1514 = vmatprep.subr.bf16.mxu0 %v1424
      %1515 = vmatpush1.bf16.msra.mxu0 %v1423
      %1516 = vmatprep.subr.bf16.mxu0 %v1428
      %1517 = vmatpush1.bf16.msra.mxu0 %v1427
      %1518 = vmatprep.subr.bf16.mxu0 0
      %1519 = vmatpush1.bf16.msra.mxu0 0
      %1520 = vmatprep.subr.bf16.mxu0 0
      %1521 = vmatpush1.bf16.msra.mxu0 0
      %1522 = vmatprep.subr.bf16.mxu0 0
      %1523 = vmatpush1.bf16.msra.mxu0 0
      %1524 = vmatprep.subr.bf16.mxu0 0
      %1525 = vmatpush1.bf16.msra.mxu0 0
      %1526 = vmatprep.subr.bf16.mxu0 0
      %1527 = vmatpush1.bf16.msra.mxu0 0
      %1528 = vmatprep.subr.bf16.mxu0 0
      %1529 = vmatpush1.bf16.msra.mxu0 0
      %1530 = vmatprep.subr.bf16.mxu0 0
      %1531 = vmatpush1.bf16.msra.mxu0 0
      %1532 = vmatprep.subr.bf16.mxu0 0
      %1533 = vmatpush1.bf16.msra.mxu0 0
      %1534 = vmatprep.mubr.bf16.mxu0 0
      %1535 = vmatmul.mubr.bf16.gmra.mrb[0].mxu0 %v989
      %v1536 = vpop.f32.mrb[0].mxu0
      %v1537 = vadd.f32 %v1295, %v1536
      %v1538 = vpop.f32.mrb[0].mxu0
      %v1539 = vadd.f32 %v1297, %v1538
      %v1540 = vpop.f32.mrb[0].mxu0
      %v1541 = vpop.f32.mrb[0].mxu0
      %1542 = vdwg.mxu0
      %s1543 = scalar_lea.vmem %s7, 4
      %v1544 = vld [vmem:[%s1543] sm:$0xf]
      %v1546 = vlaneseq
      %v1547 = vshrl.u32 %v1546, 7
      %v1548 = vsub.s32 0, %v1547
      %v1549 = vrot.slane %v1544, %v1548
      %v1550 = vlaneseq
      %v1551 = vshrl.u32 %v1550, 7
      %v1552 = vsub.s32 1, %v1551
      %v1553 = vrot.slane %v1544, %v1552
      %v1554 = vlaneseq
      %v1555 = vshrl.u32 %v1554, 7
      %v1556 = vsub.s32 2, %v1555
      %v1557 = vrot.slane %v1544, %v1556
      %v1558 = vlaneseq
      %v1559 = vshrl.u32 %v1558, 7
      %v1560 = vsub.s32 3, %v1559
      %v1561 = vrot.slane %v1544, %v1560
      %v1566 = vadd.f32 %v1496, %v1549
      %v1567 = vadd.f32 %v1498, %v1553
      %v1568 = vadd.f32 %v1537, %v1557
      %v1569 = vadd.f32 %v1539, %v1561
      %s1570 = scalar_lea.vmem [#allocation3], 8
      %v1571 = vld [vmem:[%s1570] sm:$0xff]
      %v1572 = vxor.u32 %v1566, 2147483648
      %v1573 = vmul.f32 %v1572, 1.442695
      %v1574 = vpow.pop %v1573
      %v1575 = vadd.f32 %v1574, 1.0
      %v1576 = vrcp.pop %v1575
      %v1577 = vmul.f32 1.0, %v1576
      %v1578 = vxor.u32 %v1567, 2147483648
      %v1579 = vmul.f32 %v1578, 1.442695
      %v1580 = vpow.pop %v1579
      %v1581 = vadd.f32 %v1580, 1.0
      %v1582 = vrcp.pop %v1581
      %v1583 = vmul.f32 1.0, %v1582
      %v1584 = vtanh.pop %v1568
      %v1585 = vxor.u32 %v1569, 2147483648
      %v1586 = vmul.f32 %v1585, 1.442695
      %v1587 = vpow.pop %v1586
      %v1588 = vadd.f32 %v1587, 1.0
      %v1589 = vrcp.pop %v1588
      %v1590 = vmul.f32 1.0, %v1589
      %v1591 = vmul.f32 %v1583, %v1571
      %v1592 = vmul.f32 %v1577, %v1584
      %v1593 = vadd.f32 %v1591, %v1592
      %v1594 = vtanh.pop %v1593
      %v1595 = vmul.f32 %v1590, %v1594
      %1596 = vst [vmem:[%s1023] sm:$0xff] %v1595
      %1597 = vst [vmem:[%s1570] sm:$0xff] %v1593
      %v1598 = vpack.c.bf16 %v1595, %v1595
      %v1599 = vld [vmem:[%s9] sm:$0xf]
      %v1600 = vld [vmem:[%s9 + $0x4] sm:$0xf]
      %v1601 = vld [vmem:[%s9 + $0x8] sm:$0xf]
      %v1602 = vld [vmem:[%s9 + $0xc] sm:$0xf]
      %v1603 = vld [vmem:[%s9 + $0x10] sm:$0xf]
      %v1604 = vld [vmem:[%s9 + $0x14] sm:$0xf]
      %v1605 = vld [vmem:[%s9 + $0x18] sm:$0xf]
      %v1606 = vld [vmem:[%s9 + $0x1c] sm:$0xf]
      %v1607 = vld [vmem:[%s9 + $0x20] sm:$0xf]
      %v1608 = vld [vmem:[%s9 + $0x24] sm:$0xf]
      %v1609 = vld [vmem:[%s9 + $0x28] sm:$0xf]
      %v1610 = vld [vmem:[%s9 + $0x2c] sm:$0xf]
      %v1611 = vld [vmem:[%s9 + $0x30] sm:$0xf]
      %v1612 = vld [vmem:[%s9 + $0x34] sm:$0xf]
      %v1613 = vld [vmem:[%s9 + $0x38] sm:$0xf]
      %v1614 = vld [vmem:[%s9 + $0x3c] sm:$0xf]
      %v1615 = vld [vmem:[%s10] sm:$0x1]
      %v1617 = vlaneseq
      %v1618 = vshrl.u32 %v1617, 7
      %v1619 = vsub.s32 0, %v1618
      %v1620 = vrot.slane %v1615, %v1619
      %v1638 = vunpack.c.l.b16 %v1599
      %v1639 = vunpack.c.l.b16 %v1600
      %v1640 = vunpack.c.l.b16 %v1601
      %v1641 = vunpack.c.l.b16 %v1602
      %v1642 = vunpack.c.l.b16 %v1603
      %v1643 = vunpack.c.l.b16 %v1604
      %v1644 = vunpack.c.l.b16 %v1605
      %v1645 = vunpack.c.l.b16 %v1606
      %v1646 = vunpack.c.l.b16 %v1607
      %v1647 = vunpack.c.l.b16 %v1608
      %v1648 = vunpack.c.l.b16 %v1609
      %v1649 = vunpack.c.l.b16 %v1610
      %v1650 = vunpack.c.l.b16 %v1611
      %v1651 = vunpack.c.l.b16 %v1612
      %v1652 = vunpack.c.l.b16 %v1613
      %v1653 = vunpack.c.l.b16 %v1614
      %v1654 = vpack.c.b16 %v1639, %v1638
      %v1655 = vpack.c.b16 %v1641, %v1640
      %v1656 = vpack.c.b16 %v1643, %v1642
      %v1657 = vpack.c.b16 %v1645, %v1644
      %v1658 = vpack.c.b16 %v1647, %v1646
      %v1659 = vpack.c.b16 %v1649, %v1648
      %v1660 = vpack.c.b16 %v1651, %v1650
      %v1661 = vpack.c.b16 %v1653, %v1652
      %1670 = vmatprep.subr.bf16.mxu0 0
      %1671 = vmatpush1.bf16.msra.mxu0 %v1654
      %1672 = vmatprep.subr.bf16.mxu0 0
      %1673 = vmatpush1.bf16.msra.mxu0 %v1655
      %1674 = vmatprep.subr.bf16.mxu0 0
      %1675 = vmatpush1.bf16.msra.mxu0 %v1656
      %1676 = vmatprep.subr.bf16.mxu0 0
      %1677 = vmatpush1.bf16.msra.mxu0 %v1657
      %1678 = vmatprep.subr.bf16.mxu0 0
      %1679 = vmatpush1.bf16.msra.mxu0 %v1658
      %1680 = vmatprep.subr.bf16.mxu0 0
      %1681 = vmatpush1.bf16.msra.mxu0 %v1659
      %1682 = vmatprep.subr.bf16.mxu0 0
      %1683 = vmatpush1.bf16.msra.mxu0 %v1660
      %1684 = vmatprep.subr.bf16.mxu0 0
      %1685 = vmatpush1.bf16.msra.mxu0 %v1661
      %1686 = vmatprep.subr.bf16.mxu0 0
      %1687 = vmatpush1.bf16.msra.mxu0 0
      %1688 = vmatprep.subr.bf16.mxu0 0
      %1689 = vmatpush1.bf16.msra.mxu0 0
      %1690 = vmatprep.subr.bf16.mxu0 0
      %1691 = vmatpush1.bf16.msra.mxu0 0
      %1692 = vmatprep.subr.bf16.mxu0 0
      %1693 = vmatpush1.bf16.msra.mxu0 0
      %1694 = vmatprep.subr.bf16.mxu0 0
      %1695 = vmatpush1.bf16.msra.mxu0 0
      %1696 = vmatprep.subr.bf16.mxu0 0
      %1697 = vmatpush1.bf16.msra.mxu0 0
      %1698 = vmatprep.subr.bf16.mxu0 0
      %1699 = vmatpush1.bf16.msra.mxu0 0
      %1700 = vmatprep.subr.bf16.mxu0 0
      %1701 = vmatpush1.bf16.msra.mxu0 0
      %1702 = vmatprep.mubr.bf16.mxu0 0
      %1703 = vmatmul.mubr.bf16.gmra.mrb[0].mxu0 %v1598
      %v1704 = vpop.f32.mrb[0].mxu0
      %v1705 = vadd.f32 %v1620, %v1704
      %v1706 = vpop.f32.mrb[0].mxu0
      %v1707 = vpop.f32.mrb[0].mxu0
      %v1708 = vpop.f32.mrb[0].mxu0
      %1709 = vdwg.mxu0
      %1710 = vst [vmem:[%s368] sm:$0xff] %v1705
      %v1711 = vlaneseq
      %v1712 = vand.u32 %v1711, 127
      %vm1713 = vcmp.lt.s32.totalorder %v1712, 40
      %v1714 = vsel %vm1713, %v1705, -inf
      %1715 = vmax.xlane.f32.xlu0 %v1714
      %v1716 = vpop.xlane.xlu0 %1715
      %v1717 = vcvt.s32.f32 %v1712
      %vm1718 = vcmp.eq.f32.partialorder %v1714, %v1716
      %vm1719 = vmand %vm1718, %vm1713
      %v1720 = vsel %vm1719, %v1717, 128.0
      %1721 = vmin.xlane.f32.xlu0 %v1720
      %v1722 = vpop.xlane.xlu0 %1721
      %vm1723 = vcmp.eq.f32.partialorder %v1717, %v1722
      %v1724 = vsel %vm1723, 1, 0
      %v1725 = vcvt.s32.f32 %v1724
      %v1726 = vld [vmem:[%s8] sm:$0xff]
      %v1727 = vld [vmem:[%s8 + $0x8] sm:$0xff]
      %v1728 = vld [vmem:[%s8 + $0x10] sm:$0xff]
      %v1729 = vld [vmem:[%s8 + $0x18] sm:$0xff]
      %v1730 = vld [vmem:[%s8 + $0x20] sm:$0xff]
      %v1731 = vld [vmem:[%s8 + $0x28] sm:$0xff]
      %v1732 = vld [vmem:[%s8 + $0x30] sm:$0xff]
      %v1733 = vld [vmem:[%s8 + $0x38] sm:$0xff]
      %v1734 = vld [vmem:[%s8 + $0x40] sm:$0xff]
      %v1735 = vld [vmem:[%s8 + $0x48] sm:$0xff]
      %v1736 = vld [vmem:[%s8 + $0x50] sm:$0xff]
      %v1737 = vld [vmem:[%s8 + $0x58] sm:$0xff]
      %v1738 = vld [vmem:[%s8 + $0x60] sm:$0xff]
      %v1739 = vld [vmem:[%s8 + $0x68] sm:$0xff]
      %v1740 = vld [vmem:[%s8 + $0x70] sm:$0xff]
      %v1741 = vld [vmem:[%s8 + $0x78] sm:$0xff]
      %1742 = vmatprep.subr.mxu0 0.0
      %1743 = vmatpush1.msra.mxu0 %v1726
      %1744 = vmatprep.subr.mxu0 0.0
      %1745 = vmatpush1.msra.mxu0 %v1727
      %1746 = vmatprep.subr.mxu0 0.0
      %1747 = vmatpush1.msra.mxu0 %v1728
      %1748 = vmatprep.subr.mxu0 0.0
      %1749 = vmatpush1.msra.mxu0 %v1729
      %1750 = vmatprep.subr.mxu0 0.0
      %1751 = vmatpush1.msra.mxu0 %v1730
      %1752 = vmatprep.subr.mxu0 0.0
      %1753 = vmatpush1.msra.mxu0 %v1731
      %1754 = vmatprep.subr.mxu0 0.0
      %1755 = vmatpush1.msra.mxu0 %v1732
      %1756 = vmatprep.subr.mxu0 0.0
      %1757 = vmatpush1.msra.mxu0 %v1733
      %1758 = vmatprep.subr.mxu0 0.0
      %1759 = vmatpush1.msra.mxu0 %v1734
      %1760 = vmatprep.subr.mxu0 0.0
      %1761 = vmatpush1.msra.mxu0 %v1735
      %1762 = vmatprep.subr.mxu0 0.0
      %1763 = vmatpush1.msra.mxu0 %v1736
      %1764 = vmatprep.subr.mxu0 0.0
      %1765 = vmatpush1.msra.mxu0 %v1737
      %1766 = vmatprep.subr.mxu0 0.0
      %1767 = vmatpush1.msra.mxu0 %v1738
      %1768 = vmatprep.subr.mxu0 0.0
      %1769 = vmatpush1.msra.mxu0 %v1739
      %1770 = vmatprep.subr.mxu0 0.0
      %1771 = vmatpush1.msra.mxu0 %v1740
      %1772 = vmatprep.subr.mxu0 0.0
      %1773 = vmatpush1.msra.mxu0 %v1741
      %1774 = vmatprep.subr.mxu0 0.0
      %1775 = vmatpush1.msra.mxu0 0.0
      %1776 = vmatprep.subr.mxu0 0.0
      %1777 = vmatpush1.msra.mxu0 0.0
      %1778 = vmatprep.subr.mxu0 0.0
      %1779 = vmatpush1.msra.mxu0 0.0
      %1780 = vmatprep.subr.mxu0 0.0
      %1781 = vmatpush1.msra.mxu0 0.0
      %1782 = vmatprep.subr.mxu0 0.0
      %1783 = vmatpush1.msra.mxu0 0.0
      %1784 = vmatprep.subr.mxu0 0.0
      %1785 = vmatpush1.msra.mxu0 0.0
      %1786 = vmatprep.subr.mxu0 0.0
      %1787 = vmatpush1.msra.mxu0 0.0
      %1788 = vmatprep.subr.mxu0 0.0
      %1789 = vmatpush1.msra.mxu0 0.0
      %1790 = vmatprep.subr.mxu0 0.0
      %1791 = vmatpush1.msra.mxu0 0.0
      %1792 = vmatprep.subr.mxu0 0.0
      %1793 = vmatpush1.msra.mxu0 0.0
      %1794 = vmatprep.subr.mxu0 0.0
      %1795 = vmatpush1.msra.mxu0 0.0
      %1796 = vmatprep.subr.mxu0 0.0
      %1797 = vmatpush1.msra.mxu0 0.0
      %1798 = vmatprep.subr.mxu0 0.0
      %1799 = vmatpush1.msra.mxu0 0.0
      %1800 = vmatprep.subr.mxu0 0.0
      %1801 = vmatpush1.msra.mxu0 0.0
      %1802 = vmatprep.subr.mxu0 0.0
      %1803 = vmatpush1.msra.mxu0 0.0
      %1804 = vmatprep.subr.mxu0 0.0
      %1805 = vmatpush1.msra.mxu0 0.0
      %1806 = vmatprep.mubr.f32.mxu0 0.0
      %1807 = vmatmul.mubr.f32.gmra.mrb[0].mxu0 %v1725
      %v1808 = vpop.f32.mrb[0].mxu0
      %v1809 = vadd.f32 0.0, %v1808
      %v1810 = vpop.f32.mrb[0].mxu0
      %1811 = vdwg.mxu0
      %s1812 = sadd.s32 %s28, 1
      %s1813 = sld [smem:[#allocation6 + %s1812]]
      %s1814 = scvt.s32.f32 %s1813
      %v1815 = vld [vmem:[%s363] sm:$0xff]
      %v1816 = vstv %s1814
      %v1817 = vmul.f32 %v1816, %v1815
      %s1818 = ssub.f32 1.0, %s1814
      %v1819 = vstv %s1818
      %v1820 = vmul.f32 %v1819, %v1809
      %v1821 = vadd.f32 %v1817, %v1820
      %1822 = vst [vmem:[#allocation4] sm:$0xff] %v1821
      %p1823 = scmp.lt.s32.totalorder %s28, 6
      %s1824 = scalar_select %p1823, %s28, 6
      %s1825 = smul.addr %s1824, 8
      %s1826 = scalar_lea.vmem %s11, %s1825
      // Predicated region
      $region65: #{_forward_core.5} parent=59 // pred_check
        %p1827 = pneg %p263
      $region66: #{_forward_core.5} parent=59 // pred_check_branch
        %1829 = sbr.rel (%p1827) target = $region68
      $region67: #{_forward_core.5} parent=59 // pred_region
        _
      $region68: #{_forward_core.5} parent=59 // pred_fallthru
        _
    $region60: #{_forward_core.5} parent=5 // pred_fallthru
      _
    %p1830 = scmp.le.s32.totalorder 2, %s23
    // Predicated region
    $region69: #{_forward_core.5} parent=5 // pred_check
      %p1831 = pneg %p1830
    $region70: #{_forward_core.5} parent=5 // pred_check_branch
      %1833 = sbr.rel (%p1831) target = $region72
    $region71: #{_forward_core.5} parent=5 // pred_region
      %s1834 = ssub.s32 %s23, 2
      // Predicated region
      $region73: #{_forward_core.5} parent=71 // pred_check
        %p1835 = pneg %p269
      $region74: #{_forward_core.5} parent=71 // pred_check_branch
        %1837 = sbr.rel (%p1835) target = $region76
      $region75: #{_forward_core.5} parent=71 // pred_region
        %p1838 = scmp.lt.s32.totalorder %s29, 6
        %s1839 = scalar_select %p1838, %s29, 6
        %s1840 = smul.addr %s1839, 8
        %s1841 = scalar_lea.vmem %s11, %s1840
      $region76: #{_forward_core.5} parent=71 // pred_fallthru
        _
    $region72: #{_forward_core.5} parent=5 // pred_fallthru
      _
  $region6: #{_forward_core.5} parent=0 // loop_footer
    %s27 = sadd.s32 1, %s23
  $region7: #{_forward_core.5} parent=0 // loop_footer_branch
    %22 = sbr.rel target = $region3
  $region8: #{_forward_core.5} parent=0 // loop_exit
    _

</llo_original>
